<compile_context>
chip_gen: v7x
topology: tpu7x:2x2x1
jax: 0.10.0
libtpu: 0.0.40
codegen_flags: <defaults>
</compile_context>

<pallas_src>
import functools

import jax
import jax.numpy as jnp
from jax import lax
from jax.experimental import pallas as pl
from jax.experimental.pallas import tpu as pltpu

HIDDEN = 128      # hidden_size (torch: 500) -- one full lane width
VOCAB = 256       # output_size / vocab (torch: 7826) -- multiple of 128
N_LAYERS = 2
SEQ_LEN = 8
MAX_LEN = 5

SOS_token = 1
EOS_token = 2

_VMEM = pl.BlockSpec(memory_space=pltpu.MemorySpace.VMEM)
_SMEM = pl.BlockSpec(memory_space=pltpu.MemorySpace.SMEM)


# ------------------------------ fused kernel --------------------------------
def _gru_cell(x, h, wi, wh, bi, bh):
    """PyTorch GRU cell on (1, Hin)/(1, H) rows; weights pre-transposed:
    wi: (Hin, 3H), wh: (H, 3H), bi/bh: (1, 3H); gate order [r | z | n]."""
    H = h.shape[1]
    gi = jnp.dot(x, wi, preferred_element_type=jnp.float32) + bi
    gh = jnp.dot(h, wh, preferred_element_type=jnp.float32) + bh
    r = jax.nn.sigmoid(gi[:, 0:H] + gh[:, 0:H])
    z = jax.nn.sigmoid(gi[:, H:2 * H] + gh[:, H:2 * H])
    n = jnp.tanh(gi[:, 2 * H:3 * H] + r * gh[:, 2 * H:3 * H])
    return (1.0 - z) * n + z * h


def _evaluator_kernel(
    ids_ref,                                    # SMEM (T,) int32
    emb_ref,                                    # (V, H) embedding table
    e0_wi, e0_wh, e0_bi, e0_bh,                 # enc layer 0: (2,H,3H)/(2,1,3H)
    e1_wia, e1_wib, e1_wh, e1_bi, e1_bh,        # enc layer 1 (input weight split)
    d_wi, d_wh, d_bi, d_bh,                     # decoder GRU: (2,H,3H)/(2,1,3H)
    wc1, wc2, bc, wo, bo,                       # concat Linear (split) + out Linear
    tok_ref, score_ref,                         # SMEM outputs (max_length,)
    a_fw, a_bw, b_fw, b_bw,                     # VMEM scratch (T, H)
):
    T = ids_ref.shape[0]
    H = emb_ref.shape[1]
    V = wo.shape[1]
    n_steps = tok_ref.shape[0]
    h0 = jnp.zeros((1, H), jnp.float32)

    # ------- encoder layer 0: forward & backward directions interleaved -----
    def l0_body(t, carry):
        h_f, h_b = carry
        tb = T - 1 - t
        x_f = emb_ref[pl.ds(ids_ref[t], 1), :]                  # (1, H) gather
        x_b = emb_ref[pl.ds(ids_ref[tb], 1), :]
        h_f = _gru_cell(x_f, h_f, e0_wi[0], e0_wh[0], e0_bi[0], e0_bh[0])
        h_b = _gru_cell(x_b, h_b, e0_wi[1], e0_wh[1], e0_bi[1], e0_bh[1])
        a_fw[pl.ds(t, 1), :] = h_f
        a_bw[pl.ds(tb, 1), :] = h_b
        return h_f, h_b

    h_fw0, h_bw0 = lax.fori_loop(0, T, l0_body, (h0, h0))

    # ------- encoder layer 1: input = [fw | bw] of layer 0 (concat-free) ----
    def _cell_l1(xa, xb, h, d):
        gi = (jnp.dot(xa, e1_wia[d], preferred_element_type=jnp.float32)
              + jnp.dot(xb, e1_wib[d], preferred_element_type=jnp.float32)
              + e1_bi[d])
        gh = jnp.dot(h, e1_wh[d], preferred_element_type=jnp.float32) + e1_bh[d]
        r = jax.nn.sigmoid(gi[:, 0:H] + gh[:, 0:H])
        z = jax.nn.sigmoid(gi[:, H:2 * H] + gh[:, H:2 * H])
        n = jnp.tanh(gi[:, 2 * H:3 * H] + r * gh[:, 2 * H:3 * H])
        return (1.0 - z) * n + z * h

    def l1_body(t, carry):
        h_f, h_b = carry
        tb = T - 1 - t
        h_f = _cell_l1(a_fw[pl.ds(t, 1), :], a_bw[pl.ds(t, 1), :], h_f, 0)
        h_b = _cell_l1(a_fw[pl.ds(tb, 1), :], a_bw[pl.ds(tb, 1), :], h_b, 1)
        b_fw[pl.ds(t, 1), :] = h_f
        b_bw[pl.ds(tb, 1), :] = h_b
        return h_f, h_b

    lax.fori_loop(0, T, l1_body, (h0, h0))

    # encoder_outputs = fw + bw of the top layer: (T, H) -- stays on-chip.
    enc = b_fw[...] + b_bw[...]

    # ------- greedy attention decoder (argmax feedback stays on-chip) -------
    def dec_body(i, carry):
        h_l0, h_l1, tok = carry
        x = emb_ref[pl.ds(tok, 1), :]                            # (1, H)
        h_l0 = _gru_cell(x, h_l0, d_wi[0], d_wh[0], d_bi[0], d_bh[0])
        h_l1 = _gru_cell(h_l0, h_l1, d_wi[1], d_wh[1], d_bi[1], d_bh[1])
        rnn_out = h_l1

        # dot attention: scores on the MXU, softmax over T on the lane axis.
        scores = lax.dot_general(rnn_out, enc, (((1,), (1,)), ((), ())),
                                 preferred_element_type=jnp.float32)    # (1, T)
        m = jnp.max(scores, axis=1, keepdims=True)
        e = jnp.exp(scores - m)
        w = e * pl.reciprocal(jnp.sum(e, axis=1, keepdims=True), approx=True)
        ctx = jnp.dot(w, enc, preferred_element_type=jnp.float32)        # (1, H)

        # tanh(concat Linear) as a split matmul (no in-kernel concat), then out.
        cat_h = jnp.tanh(
            jnp.dot(rnn_out, wc1[...], preferred_element_type=jnp.float32)
            + jnp.dot(ctx, wc2[...], preferred_element_type=jnp.float32)
            + bc[...])
        logits = jnp.dot(cat_h, wo[...], preferred_element_type=jnp.float32) + bo[...]
        lm = jnp.max(logits, axis=1, keepdims=True)
        el = jnp.exp(logits - lm)
        probs = el * pl.reciprocal(jnp.sum(el, axis=1, keepdims=True), approx=True)

        best = jnp.max(probs, axis=1, keepdims=True)                     # (1, 1)
        lanes = lax.broadcasted_iota(jnp.int32, probs.shape, 1).astype(jnp.float32)
        masked = jnp.where(probs == best, lanes, jnp.float32(V))
        next_tok = jnp.min(masked).astype(jnp.int32)                     # argmax (scalar)
        best_s = jnp.max(probs)                                          # max prob (scalar)

        tok_ref[i] = next_tok
        score_ref[i] = best_s
        return h_l0, h_l1, next_tok

    # decoder initial hidden = encoder_hidden[:n_layers] = [layer0_fw, layer0_bw]
    lax.fori_loop(0, n_steps, dec_body, (h_fw0, h_bw0, jnp.int32(SOS_token)))


# -------------------------------- wrapper ------------------------------------
@functools.partial(jax.jit, static_argnames=("max_length",))
def greedy_decode(input_ids, params, *, max_length=MAX_LEN):
    """GreedyDecoder.forward: int32 token ids (T,) -> (tokens, scores)."""
    T = input_ids.shape[0]
    return pl.pallas_call(
        _evaluator_kernel,
        out_shape=(jax.ShapeDtypeStruct((max_length,), jnp.int32),
                   jax.ShapeDtypeStruct((max_length,), jnp.float32)),
        in_specs=[_SMEM] + [_VMEM] * 19,
        out_specs=(_SMEM, _SMEM),
        scratch_shapes=[pltpu.VMEM((T, HIDDEN), jnp.float32) for _ in range(4)],
    )(
        input_ids.astype(jnp.int32),
        params["emb"],
        params["e0_wi"], params["e0_wh"], params["e0_bi"], params["e0_bh"],
        params["e1_wia"], params["e1_wib"], params["e1_wh"],
        params["e1_bi"], params["e1_bh"],
        params["d_wi"], params["d_wh"], params["d_bi"], params["d_bh"],
        params["wc1"], params["wc2"], params["bc"],
        params["wo"], params["bo"],
    )
    # TODO(synk): mapping tokens back to words via voc.index2word (and
    # filtering EOS/PAD) is host-side Python string handling, not kernel work.


# ------------------------------ param init -----------------------------------
def init_params(key):
    ks = iter(jax.random.split(key, 24))

    def mat(shape, scale=0.1):
        return jax.random.normal(next(ks), shape, jnp.float32) * scale

    H, H3 = HIDDEN, 3 * HIDDEN
    p = {"emb": mat((VOCAB, H))}
    # encoder layer 0: 2 directions, input width H
    p["e0_wi"], p["e0_wh"] = mat((2, H, H3)), mat((2, H, H3))
    p["e0_bi"], p["e0_bh"] = mat((2, 1, H3)), mat((2, 1, H3))
    # encoder layer 1: 2 directions, input width 2H (split into fw/bw halves)
    e1_wi = mat((2, 2 * H, H3))
    p["e1_wia"], p["e1_wib"] = e1_wi[:, :H, :], e1_wi[:, H:, :]
    p["e1_wh"] = mat((2, H, H3))
    p["e1_bi"], p["e1_bh"] = mat((2, 1, H3)), mat((2, 1, H3))
    # decoder GRU: 2 layers, input width H
    p["d_wi"], p["d_wh"] = mat((2, H, H3)), mat((2, H, H3))
    p["d_bi"], p["d_bh"] = mat((2, 1, H3)), mat((2, 1, H3))
    # concat Linear (2H -> H) split into rnn/context halves, output Linear
    wc = mat((2 * H, H))
    p["wc1"], p["wc2"] = wc[:H, :], wc[H:, :]
    p["bc"] = mat((1, H))
    p["wo"], p["bo"] = mat((H, VOCAB)), mat((1, VOCAB))
    return p


# --------------------------- pure-JAX reference ------------------------------
def _hdot(a, b):
    return jnp.dot(a, b, precision=jax.lax.Precision.HIGHEST)


def _gru_cell_host(x, h, wi, wh, bi, bh):
    H = h.shape[1]
    gi = _hdot(x, wi) + bi
    gh = _hdot(h, wh) + bh
    r = jax.nn.sigmoid(gi[:, :H] + gh[:, :H])
    z = jax.nn.sigmoid(gi[:, H:2 * H] + gh[:, H:2 * H])
    n = jnp.tanh(gi[:, 2 * H:] + r * gh[:, 2 * H:])
    return (1.0 - z) * n + z * h


def reference_decode(ids, p, max_length):
    T, H = ids.shape[0], HIDDEN
    emb = p["emb"]
    x_seq = emb[ids]                                             # (T, H)

    def run_dir(x_of_t, wi, wh, bi, bh, reverse):
        h = jnp.zeros((1, H), jnp.float32)
        outs = [None] * T
        order = range(T - 1, -1, -1) if reverse else range(T)
        for t in order:
            h = _gru_cell_host(x_of_t(t), h, wi, wh, bi, bh)
            outs[t] = h
        return jnp.concatenate(outs, 0), h

    out_f0, h_f0 = run_dir(lambda t: x_seq[t:t + 1], p["e0_wi"][0], p["e0_wh"][0],
                           p["e0_bi"][0], p["e0_bh"][0], False)
    out_b0, h_b0 = run_dir(lambda t: x_seq[t:t + 1], p["e0_wi"][1], p["e0_wh"][1],
                           p["e0_bi"][1], p["e0_bh"][1], True)
    x1 = jnp.concatenate([out_f0, out_b0], axis=1)               # (T, 2H)
    e1_wi = jnp.concatenate([p["e1_wia"], p["e1_wib"]], axis=1)  # (2, 2H, 3H)
    out_f1, _ = run_dir(lambda t: x1[t:t + 1], e1_wi[0], p["e1_wh"][0],
                        p["e1_bi"][0], p["e1_bh"][0], False)
    out_b1, _ = run_dir(lambda t: x1[t:t + 1], e1_wi[1], p["e1_wh"][1],
                        p["e1_bi"][1], p["e1_bh"][1], True)
    enc = out_f1 + out_b1                                        # (T, H)

    wc = jnp.concatenate([p["wc1"], p["wc2"]], axis=0)           # (2H, H)
    h0, h1 = h_f0, h_b0
    tok = jnp.int32(SOS_token)
    tokens, scores = [], []
    for _ in range(max_length):
        x = emb[tok][None, :]
        h0 = _gru_cell_host(x, h0, p["d_wi"][0], p["d_wh"][0], p["d_bi"][0], p["d_bh"][0])
        h1 = _gru_cell_host(h0, h1, p["d_wi"][1], p["d_wh"][1], p["d_bi"][1], p["d_bh"][1])
        rnn_out = h1
        att = jnp.sum(rnn_out * enc, axis=1)                     # (T,)
        w = jax.nn.softmax(att)[None, :]                         # (1, T)
        ctx = _hdot(w, enc)                                      # (1, H)
        cat_in = jnp.concatenate([rnn_out, ctx], axis=1)
        ch = jnp.tanh(_hdot(cat_in, wc) + p["bc"])
        probs = jax.nn.softmax(_hdot(ch, p["wo"]) + p["bo"], axis=1)
        scores.append(jnp.max(probs, axis=1))
        tok = jnp.argmax(probs, axis=1)[0].astype(jnp.int32)
        tokens.append(tok[None])
    return jnp.concatenate(tokens), jnp.concatenate(scores)


# ---------------------------------- main --------------------------------------
if __name__ == "__main__":
    key = jax.random.PRNGKey(0)
    k_params, k_seq = jax.random.split(key)
    params = init_params(k_params)

    # synthetic tokenized sentence (what indexesFromSentence would produce),
    # ending with EOS — shape (T,) of int32 token ids.
    ids = jax.random.randint(k_seq, (SEQ_LEN,), 3, VOCAB, dtype=jnp.int32)
    ids = ids.at[-1].set(EOS_token)

    tokens, scores = greedy_decode(ids, params, max_length=MAX_LEN)
    tokens = jax.block_until_ready(tokens)
    scores = jax.block_until_ready(scores)

    assert tokens.shape == (MAX_LEN,) and scores.shape == (MAX_LEN,)
    assert bool(jnp.all(jnp.isfinite(scores)))

    # pure-JAX reference of the same GreedyDecoder semantics
    ref_tokens, ref_scores = reference_decode(ids, params, MAX_LEN)
    assert bool(jnp.array_equal(tokens, ref_tokens)), (tokens, ref_tokens)
    assert bool(jnp.allclose(scores, ref_scores, rtol=5e-2, atol=1e-3)), (scores, ref_scores)

    print("KERNEL_OK")
</pallas_src>

<mosaic_0001>
module attributes {stable_mosaic.version = 11 : i64} {
  func.func @_evaluator_kernel(%arg0: memref<8xi32, #tpu.memory_space<smem>>, %arg1: memref<256x128xf32, #tpu.memory_space<vmem>>, %arg2: memref<2x128x384xf32, #tpu.memory_space<vmem>>, %arg3: memref<2x128x384xf32, #tpu.memory_space<vmem>>, %arg4: memref<2x1x384xf32, #tpu.memory_space<vmem>>, %arg5: memref<2x1x384xf32, #tpu.memory_space<vmem>>, %arg6: memref<2x128x384xf32, #tpu.memory_space<vmem>>, %arg7: memref<2x128x384xf32, #tpu.memory_space<vmem>>, %arg8: memref<2x128x384xf32, #tpu.memory_space<vmem>>, %arg9: memref<2x1x384xf32, #tpu.memory_space<vmem>>, %arg10: memref<2x1x384xf32, #tpu.memory_space<vmem>>, %arg11: memref<2x128x384xf32, #tpu.memory_space<vmem>>, %arg12: memref<2x128x384xf32, #tpu.memory_space<vmem>>, %arg13: memref<2x1x384xf32, #tpu.memory_space<vmem>>, %arg14: memref<2x1x384xf32, #tpu.memory_space<vmem>>, %arg15: memref<128x128xf32, #tpu.memory_space<vmem>>, %arg16: memref<128x128xf32, #tpu.memory_space<vmem>>, %arg17: memref<1x128xf32, #tpu.memory_space<vmem>>, %arg18: memref<128x256xf32, #tpu.memory_space<vmem>>, %arg19: memref<1x256xf32, #tpu.memory_space<vmem>>, %arg20: memref<5xi32, #tpu.memory_space<smem>>, %arg21: memref<5xf32, #tpu.memory_space<smem>>, %arg22: memref<8x128xf32, #tpu.memory_space<vmem>>, %arg23: memref<8x128xf32, #tpu.memory_space<vmem>>, %arg24: memref<8x128xf32, #tpu.memory_space<vmem>>, %arg25: memref<8x128xf32, #tpu.memory_space<vmem>>) attributes {dimension_semantics = [], scalar_prefetch = 0 : i64, scratch_operands = 4 : i64, tpu.core_type = #tpu.core_type<tc>} {
    %cst = arith.constant 0.000000e+00 : f32
    %0 = vector.broadcast %cst : f32 to vector<1x128xf32>
    %c0_i32 = arith.constant 0 : i32
    %c8_i32 = arith.constant 8 : i32
    %1 = arith.addi %c0_i32, %c8_i32 : i32
    %c1_i32 = arith.constant 1 : i32
    %2:2 = scf.for %arg26 = %c0_i32 to %1 step %c1_i32 iter_args(%arg27 = %0, %arg28 = %0) -> (vector<1x128xf32>, vector<1x128xf32>)  : i32 {
      %c7_i32 = arith.constant 7 : i32
      %10 = arith.subi %c7_i32, %arg26 : i32
      %11 = arith.index_cast %arg26 : i32 to index
      %12 = memref.load %arg0[%11] : memref<8xi32, #tpu.memory_space<smem>>
      %13 = arith.index_cast %12 : i32 to index
      %c0_12 = arith.constant 0 : index
      %14 = vector.load %arg1[%13, %c0_12] : memref<256x128xf32, #tpu.memory_space<vmem>>, vector<1x128xf32>
      %15 = arith.index_cast %10 : i32 to index
      %16 = memref.load %arg0[%15] : memref<8xi32, #tpu.memory_space<smem>>
      %17 = arith.index_cast %16 : i32 to index
      %c0_13 = arith.constant 0 : index
      %18 = vector.load %arg1[%17, %c0_13] : memref<256x128xf32, #tpu.memory_space<vmem>>, vector<1x128xf32>
      %c0_14 = arith.constant 0 : index
      %c0_15 = arith.constant 0 : index
      %c0_16 = arith.constant 0 : index
      %19 = vector.load %arg2[%c0_14, %c0_15, %c0_16] : memref<2x128x384xf32, #tpu.memory_space<vmem>>, vector<1x128x384xf32>
      %20 = vector.shape_cast %19 : vector<1x128x384xf32> to vector<128x384xf32>
      %c0_17 = arith.constant 0 : index
      %c0_18 = arith.constant 0 : index
      %c0_19 = arith.constant 0 : index
      %21 = vector.load %arg3[%c0_17, %c0_18, %c0_19] : memref<2x128x384xf32, #tpu.memory_space<vmem>>, vector<1x128x384xf32>
      %22 = vector.shape_cast %21 : vector<1x128x384xf32> to vector<128x384xf32>
      %c0_20 = arith.constant 0 : index
      %c0_21 = arith.constant 0 : index
      %c0_22 = arith.constant 0 : index
      %23 = vector.load %arg4[%c0_20, %c0_21, %c0_22] : memref<2x1x384xf32, #tpu.memory_space<vmem>>, vector<1x1x384xf32>
      %24 = vector.shape_cast %23 : vector<1x1x384xf32> to vector<1x384xf32>
      %c0_23 = arith.constant 0 : index
      %c0_24 = arith.constant 0 : index
      %c0_25 = arith.constant 0 : index
      %25 = vector.load %arg5[%c0_23, %c0_24, %c0_25] : memref<2x1x384xf32, #tpu.memory_space<vmem>>, vector<1x1x384xf32>
      %26 = vector.shape_cast %25 : vector<1x1x384xf32> to vector<1x384xf32>
      %cst_26 = arith.constant dense<0.000000e+00> : vector<1x384xf32>
      %27 = tpu.matmul %14, %20, %cst_26 {dimension_numbers = #tpu.dot_dimension_numbers<[1], [0], [0], [1], [0, 0, 1, 1], [], []>} : vector<1x128xf32>, vector<128x384xf32>, vector<1x384xf32> -> vector<1x384xf32>
      %28 = arith.addf %27, %24 : vector<1x384xf32>
      %cst_27 = arith.constant dense<0.000000e+00> : vector<1x384xf32>
      %29 = tpu.matmul %arg27, %22, %cst_27 {dimension_numbers = #tpu.dot_dimension_numbers<[1], [0], [0], [1], [0, 0, 1, 1], [], []>} : vector<1x128xf32>, vector<128x384xf32>, vector<1x384xf32> -> vector<1x384xf32>
      %30 = arith.addf %29, %26 : vector<1x384xf32>
      %31 = vector.extract_strided_slice %28 {offsets = [0, 0], sizes = [1, 128], strides = [1, 1]} : vector<1x384xf32> to vector<1x128xf32>
      %32 = vector.extract_strided_slice %30 {offsets = [0, 0], sizes = [1, 128], strides = [1, 1]} : vector<1x384xf32> to vector<1x128xf32>
      %33 = arith.addf %31, %32 : vector<1x128xf32>
      %34 = arith.negf %33 : vector<1x128xf32>
      %35 = math.exp %34 : vector<1x128xf32>
      %cst_28 = arith.constant 1.000000e+00 : f32
      %36 = vector.broadcast %cst_28 : f32 to vector<1x128xf32>
      %37 = arith.addf %36, %35 : vector<1x128xf32>
      %38 = arith.divf %36, %37 : vector<1x128xf32>
      %39 = vector.extract_strided_slice %28 {offsets = [0, 128], sizes = [1, 128], strides = [1, 1]} : vector<1x384xf32> to vector<1x128xf32>
      %40 = vector.extract_strided_slice %30 {offsets = [0, 128], sizes = [1, 128], strides = [1, 1]} : vector<1x384xf32> to vector<1x128xf32>
      %41 = arith.addf %39, %40 : vector<1x128xf32>
      %42 = arith.negf %41 : vector<1x128xf32>
      %43 = math.exp %42 : vector<1x128xf32>
      %cst_29 = arith.constant 1.000000e+00 : f32
      %44 = vector.broadcast %cst_29 : f32 to vector<1x128xf32>
      %45 = arith.addf %44, %43 : vector<1x128xf32>
      %46 = arith.divf %44, %45 : vector<1x128xf32>
      %47 = vector.extract_strided_slice %28 {offsets = [0, 256], sizes = [1, 128], strides = [1, 1]} : vector<1x384xf32> to vector<1x128xf32>
      %48 = vector.extract_strided_slice %30 {offsets = [0, 256], sizes = [1, 128], strides = [1, 1]} : vector<1x384xf32> to vector<1x128xf32>
      %49 = arith.mulf %38, %48 : vector<1x128xf32>
      %50 = arith.addf %47, %49 : vector<1x128xf32>
      %51 = math.tanh %50 : vector<1x128xf32>
      %cst_30 = arith.constant 1.000000e+00 : f32
      %52 = vector.broadcast %cst_30 : f32 to vector<1x128xf32>
      %53 = arith.subf %52, %46 : vector<1x128xf32>
      %54 = arith.mulf %53, %51 : vector<1x128xf32>
      %55 = arith.mulf %46, %arg27 : vector<1x128xf32>
      %56 = arith.addf %54, %55 : vector<1x128xf32>
      %c1 = arith.constant 1 : index
      %c0_31 = arith.constant 0 : index
      %c0_32 = arith.constant 0 : index
      %57 = vector.load %arg2[%c1, %c0_31, %c0_32] : memref<2x128x384xf32, #tpu.memory_space<vmem>>, vector<1x128x384xf32>
      %58 = vector.shape_cast %57 : vector<1x128x384xf32> to vector<128x384xf32>
      %c1_33 = arith.constant 1 : index
      %c0_34 = arith.constant 0 : index
      %c0_35 = arith.constant 0 : index
      %59 = vector.load %arg3[%c1_33, %c0_34, %c0_35] : memref<2x128x384xf32, #tpu.memory_space<vmem>>, vector<1x128x384xf32>
      %60 = vector.shape_cast %59 : vector<1x128x384xf32> to vector<128x384xf32>
      %c1_36 = arith.constant 1 : index
      %c0_37 = arith.constant 0 : index
      %c0_38 = arith.constant 0 : index
      %61 = vector.load %arg4[%c1_36, %c0_37, %c0_38] : memref<2x1x384xf32, #tpu.memory_space<vmem>>, vector<1x1x384xf32>
      %62 = vector.shape_cast %61 : vector<1x1x384xf32> to vector<1x384xf32>
      %c1_39 = arith.constant 1 : index
      %c0_40 = arith.constant 0 : index
      %c0_41 = arith.constant 0 : index
      %63 = vector.load %arg5[%c1_39, %c0_40, %c0_41] : memref<2x1x384xf32, #tpu.memory_space<vmem>>, vector<1x1x384xf32>
      %64 = vector.shape_cast %63 : vector<1x1x384xf32> to vector<1x384xf32>
      %cst_42 = arith.constant dense<0.000000e+00> : vector<1x384xf32>
      %65 = tpu.matmul %18, %58, %cst_42 {dimension_numbers = #tpu.dot_dimension_numbers<[1], [0], [0], [1], [0, 0, 1, 1], [], []>} : vector<1x128xf32>, vector<128x384xf32>, vector<1x384xf32> -> vector<1x384xf32>
      %66 = arith.addf %65, %62 : vector<1x384xf32>
      %cst_43 = arith.constant dense<0.000000e+00> : vector<1x384xf32>
      %67 = tpu.matmul %arg28, %60, %cst_43 {dimension_numbers = #tpu.dot_dimension_numbers<[1], [0], [0], [1], [0, 0, 1, 1], [], []>} : vector<1x128xf32>, vector<128x384xf32>, vector<1x384xf32> -> vector<1x384xf32>
      %68 = arith.addf %67, %64 : vector<1x384xf32>
      %69 = vector.extract_strided_slice %66 {offsets = [0, 0], sizes = [1, 128], strides = [1, 1]} : vector<1x384xf32> to vector<1x128xf32>
      %70 = vector.extract_strided_slice %68 {offsets = [0, 0], sizes = [1, 128], strides = [1, 1]} : vector<1x384xf32> to vector<1x128xf32>
      %71 = arith.addf %69, %70 : vector<1x128xf32>
      %72 = arith.negf %71 : vector<1x128xf32>
      %73 = math.exp %72 : vector<1x128xf32>
      %cst_44 = arith.constant 1.000000e+00 : f32
      %74 = vector.broadcast %cst_44 : f32 to vector<1x128xf32>
      %75 = arith.addf %74, %73 : vector<1x128xf32>
      %76 = arith.divf %74, %75 : vector<1x128xf32>
      %77 = vector.extract_strided_slice %66 {offsets = [0, 128], sizes = [1, 128], strides = [1, 1]} : vector<1x384xf32> to vector<1x128xf32>
      %78 = vector.extract_strided_slice %68 {offsets = [0, 128], sizes = [1, 128], strides = [1, 1]} : vector<1x384xf32> to vector<1x128xf32>
      %79 = arith.addf %77, %78 : vector<1x128xf32>
      %80 = arith.negf %79 : vector<1x128xf32>
      %81 = math.exp %80 : vector<1x128xf32>
      %cst_45 = arith.constant 1.000000e+00 : f32
      %82 = vector.broadcast %cst_45 : f32 to vector<1x128xf32>
      %83 = arith.addf %82, %81 : vector<1x128xf32>
      %84 = arith.divf %82, %83 : vector<1x128xf32>
      %85 = vector.extract_strided_slice %66 {offsets = [0, 256], sizes = [1, 128], strides = [1, 1]} : vector<1x384xf32> to vector<1x128xf32>
      %86 = vector.extract_strided_slice %68 {offsets = [0, 256], sizes = [1, 128], strides = [1, 1]} : vector<1x384xf32> to vector<1x128xf32>
      %87 = arith.mulf %76, %86 : vector<1x128xf32>
      %88 = arith.addf %85, %87 : vector<1x128xf32>
      %89 = math.tanh %88 : vector<1x128xf32>
      %cst_46 = arith.constant 1.000000e+00 : f32
      %90 = vector.broadcast %cst_46 : f32 to vector<1x128xf32>
      %91 = arith.subf %90, %84 : vector<1x128xf32>
      %92 = arith.mulf %91, %89 : vector<1x128xf32>
      %93 = arith.mulf %84, %arg28 : vector<1x128xf32>
      %94 = arith.addf %92, %93 : vector<1x128xf32>
      %95 = arith.index_cast %arg26 : i32 to index
      %c0_47 = arith.constant 0 : index
      %96 = vector.load %arg22[%95, %c0_47] : memref<8x128xf32, #tpu.memory_space<vmem>>, vector<1x128xf32>
      tpu.vector_store %arg22[%95, %c0_47], %56 {strides = array<i32>} : memref<8x128xf32, #tpu.memory_space<vmem>>, vector<1x128xf32>,
      %97 = arith.index_cast %10 : i32 to index
      %c0_48 = arith.constant 0 : index
      %98 = vector.load %arg23[%97, %c0_48] : memref<8x128xf32, #tpu.memory_space<vmem>>, vector<1x128xf32>
      tpu.vector_store %arg23[%97, %c0_48], %94 {strides = array<i32>} : memref<8x128xf32, #tpu.memory_space<vmem>>, vector<1x128xf32>,
      scf.yield %56, %94 : vector<1x128xf32>, vector<1x128xf32>
    }
    %c8_i32_0 = arith.constant 8 : i32
    %c0_i32_1 = arith.constant 0 : i32
    %c8_i32_2 = arith.constant 8 : i32
    %3 = arith.addi %c0_i32_1, %c8_i32_2 : i32
    %c1_i32_3 = arith.constant 1 : i32
    %4:2 = scf.for %arg26 = %c0_i32_1 to %3 step %c1_i32_3 iter_args(%arg27 = %0, %arg28 = %0) -> (vector<1x128xf32>, vector<1x128xf32>)  : i32 {
      %c7_i32 = arith.constant 7 : i32
      %10 = arith.subi %c7_i32, %arg26 : i32
      %11 = arith.index_cast %arg26 : i32 to index
      %c0_12 = arith.constant 0 : index
      %12 = vector.load %arg22[%11, %c0_12] : memref<8x128xf32, #tpu.memory_space<vmem>>, vector<1x128xf32>
      %13 = arith.index_cast %arg26 : i32 to index
      %c0_13 = arith.constant 0 : index
      %14 = vector.load %arg23[%13, %c0_13] : memref<8x128xf32, #tpu.memory_space<vmem>>, vector<1x128xf32>
      %c0_14 = arith.constant 0 : index
      %c0_15 = arith.constant 0 : index
      %c0_16 = arith.constant 0 : index
      %15 = vector.load %arg6[%c0_14, %c0_15, %c0_16] : memref<2x128x384xf32, #tpu.memory_space<vmem>>, vector<1x128x384xf32>
      %16 = vector.shape_cast %15 : vector<1x128x384xf32> to vector<128x384xf32>
      %cst_17 = arith.constant dense<0.000000e+00> : vector<1x384xf32>
      %17 = tpu.matmul %12, %16, %cst_17 {dimension_numbers = #tpu.dot_dimension_numbers<[1], [0], [0], [1], [0, 0, 1, 1], [], []>} : vector<1x128xf32>, vector<128x384xf32>, vector<1x384xf32> -> vector<1x384xf32>
      %c0_18 = arith.constant 0 : index
      %c0_19 = arith.constant 0 : index
      %c0_20 = arith.constant 0 : index
      %18 = vector.load %arg7[%c0_18, %c0_19, %c0_20] : memref<2x128x384xf32, #tpu.memory_space<vmem>>, vector<1x128x384xf32>
      %19 = vector.shape_cast %18 : vector<1x128x384xf32> to vector<128x384xf32>
      %cst_21 = arith.constant dense<0.000000e+00> : vector<1x384xf32>
      %20 = tpu.matmul %14, %19, %cst_21 {dimension_numbers = #tpu.dot_dimension_numbers<[1], [0], [0], [1], [0, 0, 1, 1], [], []>} : vector<1x128xf32>, vector<128x384xf32>, vector<1x384xf32> -> vector<1x384xf32>
      %21 = arith.addf %17, %20 : vector<1x384xf32>
      %c0_22 = arith.constant 0 : index
      %c0_23 = arith.constant 0 : index
      %c0_24 = arith.constant 0 : index
      %22 = vector.load %arg9[%c0_22, %c0_23, %c0_24] : memref<2x1x384xf32, #tpu.memory_space<vmem>>, vector<1x1x384xf32>
      %23 = vector.shape_cast %22 : vector<1x1x384xf32> to vector<1x384xf32>
      %24 = arith.addf %21, %23 : vector<1x384xf32>
      %c0_25 = arith.constant 0 : index
      %c0_26 = arith.constant 0 : index
      %c0_27 = arith.constant 0 : index
      %25 = vector.load %arg8[%c0_25, %c0_26, %c0_27] : memref<2x128x384xf32, #tpu.memory_space<vmem>>, vector<1x128x384xf32>
      %26 = vector.shape_cast %25 : vector<1x128x384xf32> to vector<128x384xf32>
      %cst_28 = arith.constant dense<0.000000e+00> : vector<1x384xf32>
      %27 = tpu.matmul %arg27, %26, %cst_28 {dimension_numbers = #tpu.dot_dimension_numbers<[1], [0], [0], [1], [0, 0, 1, 1], [], []>} : vector<1x128xf32>, vector<128x384xf32>, vector<1x384xf32> -> vector<1x384xf32>
      %c0_29 = arith.constant 0 : index
      %c0_30 = arith.constant 0 : index
      %c0_31 = arith.constant 0 : index
      %28 = vector.load %arg10[%c0_29, %c0_30, %c0_31] : memref<2x1x384xf32, #tpu.memory_space<vmem>>, vector<1x1x384xf32>
      %29 = vector.shape_cast %28 : vector<1x1x384xf32> to vector<1x384xf32>
      %30 = arith.addf %27, %29 : vector<1x384xf32>
      %31 = vector.extract_strided_slice %24 {offsets = [0, 0], sizes = [1, 128], strides = [1, 1]} : vector<1x384xf32> to vector<1x128xf32>
      %32 = vector.extract_strided_slice %30 {offsets = [0, 0], sizes = [1, 128], strides = [1, 1]} : vector<1x384xf32> to vector<1x128xf32>
      %33 = arith.addf %31, %32 : vector<1x128xf32>
      %34 = arith.negf %33 : vector<1x128xf32>
      %35 = math.exp %34 : vector<1x128xf32>
      %cst_32 = arith.constant 1.000000e+00 : f32
      %36 = vector.broadcast %cst_32 : f32 to vector<1x128xf32>
      %37 = arith.addf %36, %35 : vector<1x128xf32>
      %38 = arith.divf %36, %37 : vector<1x128xf32>
      %39 = vector.extract_strided_slice %24 {offsets = [0, 128], sizes = [1, 128], strides = [1, 1]} : vector<1x384xf32> to vector<1x128xf32>
      %40 = vector.extract_strided_slice %30 {offsets = [0, 128], sizes = [1, 128], strides = [1, 1]} : vector<1x384xf32> to vector<1x128xf32>
      %41 = arith.addf %39, %40 : vector<1x128xf32>
      %42 = arith.negf %41 : vector<1x128xf32>
      %43 = math.exp %42 : vector<1x128xf32>
      %cst_33 = arith.constant 1.000000e+00 : f32
      %44 = vector.broadcast %cst_33 : f32 to vector<1x128xf32>
      %45 = arith.addf %44, %43 : vector<1x128xf32>
      %46 = arith.divf %44, %45 : vector<1x128xf32>
      %47 = vector.extract_strided_slice %24 {offsets = [0, 256], sizes = [1, 128], strides = [1, 1]} : vector<1x384xf32> to vector<1x128xf32>
      %48 = vector.extract_strided_slice %30 {offsets = [0, 256], sizes = [1, 128], strides = [1, 1]} : vector<1x384xf32> to vector<1x128xf32>
      %49 = arith.mulf %38, %48 : vector<1x128xf32>
      %50 = arith.addf %47, %49 : vector<1x128xf32>
      %51 = math.tanh %50 : vector<1x128xf32>
      %cst_34 = arith.constant 1.000000e+00 : f32
      %52 = vector.broadcast %cst_34 : f32 to vector<1x128xf32>
      %53 = arith.subf %52, %46 : vector<1x128xf32>
      %54 = arith.mulf %53, %51 : vector<1x128xf32>
      %55 = arith.mulf %46, %arg27 : vector<1x128xf32>
      %56 = arith.addf %54, %55 : vector<1x128xf32>
      %57 = arith.index_cast %10 : i32 to index
      %c0_35 = arith.constant 0 : index
      %58 = vector.load %arg22[%57, %c0_35] : memref<8x128xf32, #tpu.memory_space<vmem>>, vector<1x128xf32>
      %59 = arith.index_cast %10 : i32 to index
      %c0_36 = arith.constant 0 : index
      %60 = vector.load %arg23[%59, %c0_36] : memref<8x128xf32, #tpu.memory_space<vmem>>, vector<1x128xf32>
      %c1 = arith.constant 1 : index
      %c0_37 = arith.constant 0 : index
      %c0_38 = arith.constant 0 : index
      %61 = vector.load %arg6[%c1, %c0_37, %c0_38] : memref<2x128x384xf32, #tpu.memory_space<vmem>>, vector<1x128x384xf32>
      %62 = vector.shape_cast %61 : vector<1x128x384xf32> to vector<128x384xf32>
      %cst_39 = arith.constant dense<0.000000e+00> : vector<1x384xf32>
      %63 = tpu.matmul %58, %62, %cst_39 {dimension_numbers = #tpu.dot_dimension_numbers<[1], [0], [0], [1], [0, 0, 1, 1], [], []>} : vector<1x128xf32>, vector<128x384xf32>, vector<1x384xf32> -> vector<1x384xf32>
      %c1_40 = arith.constant 1 : index
      %c0_41 = arith.constant 0 : index
      %c0_42 = arith.constant 0 : index
      %64 = vector.load %arg7[%c1_40, %c0_41, %c0_42] : memref<2x128x384xf32, #tpu.memory_space<vmem>>, vector<1x128x384xf32>
      %65 = vector.shape_cast %64 : vector<1x128x384xf32> to vector<128x384xf32>
      %cst_43 = arith.constant dense<0.000000e+00> : vector<1x384xf32>
      %66 = tpu.matmul %60, %65, %cst_43 {dimension_numbers = #tpu.dot_dimension_numbers<[1], [0], [0], [1], [0, 0, 1, 1], [], []>} : vector<1x128xf32>, vector<128x384xf32>, vector<1x384xf32> -> vector<1x384xf32>
      %67 = arith.addf %63, %66 : vector<1x384xf32>
      %c1_44 = arith.constant 1 : index
      %c0_45 = arith.constant 0 : index
      %c0_46 = arith.constant 0 : index
      %68 = vector.load %arg9[%c1_44, %c0_45, %c0_46] : memref<2x1x384xf32, #tpu.memory_space<vmem>>, vector<1x1x384xf32>
      %69 = vector.shape_cast %68 : vector<1x1x384xf32> to vector<1x384xf32>
      %70 = arith.addf %67, %69 : vector<1x384xf32>
      %c1_47 = arith.constant 1 : index
      %c0_48 = arith.constant 0 : index
      %c0_49 = arith.constant 0 : index
      %71 = vector.load %arg8[%c1_47, %c0_48, %c0_49] : memref<2x128x384xf32, #tpu.memory_space<vmem>>, vector<1x128x384xf32>
      %72 = vector.shape_cast %71 : vector<1x128x384xf32> to vector<128x384xf32>
      %cst_50 = arith.constant dense<0.000000e+00> : vector<1x384xf32>
      %73 = tpu.matmul %arg28, %72, %cst_50 {dimension_numbers = #tpu.dot_dimension_numbers<[1], [0], [0], [1], [0, 0, 1, 1], [], []>} : vector<1x128xf32>, vector<128x384xf32>, vector<1x384xf32> -> vector<1x384xf32>
      %c1_51 = arith.constant 1 : index
      %c0_52 = arith.constant 0 : index
      %c0_53 = arith.constant 0 : index
      %74 = vector.load %arg10[%c1_51, %c0_52, %c0_53] : memref<2x1x384xf32, #tpu.memory_space<vmem>>, vector<1x1x384xf32>
      %75 = vector.shape_cast %74 : vector<1x1x384xf32> to vector<1x384xf32>
      %76 = arith.addf %73, %75 : vector<1x384xf32>
      %77 = vector.extract_strided_slice %70 {offsets = [0, 0], sizes = [1, 128], strides = [1, 1]} : vector<1x384xf32> to vector<1x128xf32>
      %78 = vector.extract_strided_slice %76 {offsets = [0, 0], sizes = [1, 128], strides = [1, 1]} : vector<1x384xf32> to vector<1x128xf32>
      %79 = arith.addf %77, %78 : vector<1x128xf32>
      %80 = arith.negf %79 : vector<1x128xf32>
      %81 = math.exp %80 : vector<1x128xf32>
      %cst_54 = arith.constant 1.000000e+00 : f32
      %82 = vector.broadcast %cst_54 : f32 to vector<1x128xf32>
      %83 = arith.addf %82, %81 : vector<1x128xf32>
      %84 = arith.divf %82, %83 : vector<1x128xf32>
      %85 = vector.extract_strided_slice %70 {offsets = [0, 128], sizes = [1, 128], strides = [1, 1]} : vector<1x384xf32> to vector<1x128xf32>
      %86 = vector.extract_strided_slice %76 {offsets = [0, 128], sizes = [1, 128], strides = [1, 1]} : vector<1x384xf32> to vector<1x128xf32>
      %87 = arith.addf %85, %86 : vector<1x128xf32>
      %88 = arith.negf %87 : vector<1x128xf32>
      %89 = math.exp %88 : vector<1x128xf32>
      %cst_55 = arith.constant 1.000000e+00 : f32
      %90 = vector.broadcast %cst_55 : f32 to vector<1x128xf32>
      %91 = arith.addf %90, %89 : vector<1x128xf32>
      %92 = arith.divf %90, %91 : vector<1x128xf32>
      %93 = vector.extract_strided_slice %70 {offsets = [0, 256], sizes = [1, 128], strides = [1, 1]} : vector<1x384xf32> to vector<1x128xf32>
      %94 = vector.extract_strided_slice %76 {offsets = [0, 256], sizes = [1, 128], strides = [1, 1]} : vector<1x384xf32> to vector<1x128xf32>
      %95 = arith.mulf %84, %94 : vector<1x128xf32>
      %96 = arith.addf %93, %95 : vector<1x128xf32>
      %97 = math.tanh %96 : vector<1x128xf32>
      %cst_56 = arith.constant 1.000000e+00 : f32
      %98 = vector.broadcast %cst_56 : f32 to vector<1x128xf32>
      %99 = arith.subf %98, %92 : vector<1x128xf32>
      %100 = arith.mulf %99, %97 : vector<1x128xf32>
      %101 = arith.mulf %92, %arg28 : vector<1x128xf32>
      %102 = arith.addf %100, %101 : vector<1x128xf32>
      %103 = arith.index_cast %arg26 : i32 to index
      %c0_57 = arith.constant 0 : index
      %104 = vector.load %arg24[%103, %c0_57] : memref<8x128xf32, #tpu.memory_space<vmem>>, vector<1x128xf32>
      tpu.vector_store %arg24[%103, %c0_57], %56 {strides = array<i32>} : memref<8x128xf32, #tpu.memory_space<vmem>>, vector<1x128xf32>,
      %105 = arith.index_cast %10 : i32 to index
      %c0_58 = arith.constant 0 : index
      %106 = vector.load %arg25[%105, %c0_58] : memref<8x128xf32, #tpu.memory_space<vmem>>, vector<1x128xf32>
      tpu.vector_store %arg25[%105, %c0_58], %102 {strides = array<i32>} : memref<8x128xf32, #tpu.memory_space<vmem>>, vector<1x128xf32>,
      scf.yield %56, %102 : vector<1x128xf32>, vector<1x128xf32>
    }
    %c8_i32_4 = arith.constant 8 : i32
    %c0 = arith.constant 0 : index
    %c0_5 = arith.constant 0 : index
    %5 = vector.load %arg24[%c0, %c0_5] : memref<8x128xf32, #tpu.memory_space<vmem>>, vector<8x128xf32>
    %c0_6 = arith.constant 0 : index
    %c0_7 = arith.constant 0 : index
    %6 = vector.load %arg25[%c0_6, %c0_7] : memref<8x128xf32, #tpu.memory_space<vmem>>, vector<8x128xf32>
    %7 = arith.addf %5, %6 : vector<8x128xf32>
    %c1_i32_8 = arith.constant 1 : i32
    %c0_i32_9 = arith.constant 0 : i32
    %c5_i32 = arith.constant 5 : i32
    %8 = arith.addi %c0_i32_9, %c5_i32 : i32
    %c1_i32_10 = arith.constant 1 : i32
    %9:3 = scf.for %arg26 = %c0_i32_9 to %8 step %c1_i32_10 iter_args(%arg27 = %2#0, %arg28 = %2#1, %arg29 = %c1_i32_8) -> (vector<1x128xf32>, vector<1x128xf32>, i32)  : i32 {
      %10 = arith.index_cast %arg29 : i32 to index
      %c0_12 = arith.constant 0 : index
      %11 = vector.load %arg1[%10, %c0_12] : memref<256x128xf32, #tpu.memory_space<vmem>>, vector<1x128xf32>
      %c0_13 = arith.constant 0 : index
      %c0_14 = arith.constant 0 : index
      %c0_15 = arith.constant 0 : index
      %12 = vector.load %arg11[%c0_13, %c0_14, %c0_15] : memref<2x128x384xf32, #tpu.memory_space<vmem>>, vector<1x128x384xf32>
      %13 = vector.shape_cast %12 : vector<1x128x384xf32> to vector<128x384xf32>
      %c0_16 = arith.constant 0 : index
      %c0_17 = arith.constant 0 : index
      %c0_18 = arith.constant 0 : index
      %14 = vector.load %arg12[%c0_16, %c0_17, %c0_18] : memref<2x128x384xf32, #tpu.memory_space<vmem>>, vector<1x128x384xf32>
      %15 = vector.shape_cast %14 : vector<1x128x384xf32> to vector<128x384xf32>
      %c0_19 = arith.constant 0 : index
      %c0_20 = arith.constant 0 : index
      %c0_21 = arith.constant 0 : index
      %16 = vector.load %arg13[%c0_19, %c0_20, %c0_21] : memref<2x1x384xf32, #tpu.memory_space<vmem>>, vector<1x1x384xf32>
      %17 = vector.shape_cast %16 : vector<1x1x384xf32> to vector<1x384xf32>
      %c0_22 = arith.constant 0 : index
      %c0_23 = arith.constant 0 : index
      %c0_24 = arith.constant 0 : index
      %18 = vector.load %arg14[%c0_22, %c0_23, %c0_24] : memref<2x1x384xf32, #tpu.memory_space<vmem>>, vector<1x1x384xf32>
      %19 = vector.shape_cast %18 : vector<1x1x384xf32> to vector<1x384xf32>
      %cst_25 = arith.constant dense<0.000000e+00> : vector<1x384xf32>
      %20 = tpu.matmul %11, %13, %cst_25 {dimension_numbers = #tpu.dot_dimension_numbers<[1], [0], [0], [1], [0, 0, 1, 1], [], []>} : vector<1x128xf32>, vector<128x384xf32>, vector<1x384xf32> -> vector<1x384xf32>
      %21 = arith.addf %20, %17 : vector<1x384xf32>
      %cst_26 = arith.constant dense<0.000000e+00> : vector<1x384xf32>
      %22 = tpu.matmul %arg27, %15, %cst_26 {dimension_numbers = #tpu.dot_dimension_numbers<[1], [0], [0], [1], [0, 0, 1, 1], [], []>} : vector<1x128xf32>, vector<128x384xf32>, vector<1x384xf32> -> vector<1x384xf32>
      %23 = arith.addf %22, %19 : vector<1x384xf32>
      %24 = vector.extract_strided_slice %21 {offsets = [0, 0], sizes = [1, 128], strides = [1, 1]} : vector<1x384xf32> to vector<1x128xf32>
      %25 = vector.extract_strided_slice %23 {offsets = [0, 0], sizes = [1, 128], strides = [1, 1]} : vector<1x384xf32> to vector<1x128xf32>
      %26 = arith.addf %24, %25 : vector<1x128xf32>
      %27 = arith.negf %26 : vector<1x128xf32>
      %28 = math.exp %27 : vector<1x128xf32>
      %cst_27 = arith.constant 1.000000e+00 : f32
      %29 = vector.broadcast %cst_27 : f32 to vector<1x128xf32>
      %30 = arith.addf %29, %28 : vector<1x128xf32>
      %31 = arith.divf %29, %30 : vector<1x128xf32>
      %32 = vector.extract_strided_slice %21 {offsets = [0, 128], sizes = [1, 128], strides = [1, 1]} : vector<1x384xf32> to vector<1x128xf32>
      %33 = vector.extract_strided_slice %23 {offsets = [0, 128], sizes = [1, 128], strides = [1, 1]} : vector<1x384xf32> to vector<1x128xf32>
      %34 = arith.addf %32, %33 : vector<1x128xf32>
      %35 = arith.negf %34 : vector<1x128xf32>
      %36 = math.exp %35 : vector<1x128xf32>
      %cst_28 = arith.constant 1.000000e+00 : f32
      %37 = vector.broadcast %cst_28 : f32 to vector<1x128xf32>
      %38 = arith.addf %37, %36 : vector<1x128xf32>
      %39 = arith.divf %37, %38 : vector<1x128xf32>
      %40 = vector.extract_strided_slice %21 {offsets = [0, 256], sizes = [1, 128], strides = [1, 1]} : vector<1x384xf32> to vector<1x128xf32>
      %41 = vector.extract_strided_slice %23 {offsets = [0, 256], sizes = [1, 128], strides = [1, 1]} : vector<1x384xf32> to vector<1x128xf32>
      %42 = arith.mulf %31, %41 : vector<1x128xf32>
      %43 = arith.addf %40, %42 : vector<1x128xf32>
      %44 = math.tanh %43 : vector<1x128xf32>
      %cst_29 = arith.constant 1.000000e+00 : f32
      %45 = vector.broadcast %cst_29 : f32 to vector<1x128xf32>
      %46 = arith.subf %45, %39 : vector<1x128xf32>
      %47 = arith.mulf %46, %44 : vector<1x128xf32>
      %48 = arith.mulf %39, %arg27 : vector<1x128xf32>
      %49 = arith.addf %47, %48 : vector<1x128xf32>
      %c1 = arith.constant 1 : index
      %c0_30 = arith.constant 0 : index
      %c0_31 = arith.constant 0 : index
      %50 = vector.load %arg11[%c1, %c0_30, %c0_31] : memref<2x128x384xf32, #tpu.memory_space<vmem>>, vector<1x128x384xf32>
      %51 = vector.shape_cast %50 : vector<1x128x384xf32> to vector<128x384xf32>
      %c1_32 = arith.constant 1 : index
      %c0_33 = arith.constant 0 : index
      %c0_34 = arith.constant 0 : index
      %52 = vector.load %arg12[%c1_32, %c0_33, %c0_34] : memref<2x128x384xf32, #tpu.memory_space<vmem>>, vector<1x128x384xf32>
      %53 = vector.shape_cast %52 : vector<1x128x384xf32> to vector<128x384xf32>
      %c1_35 = arith.constant 1 : index
      %c0_36 = arith.constant 0 : index
      %c0_37 = arith.constant 0 : index
      %54 = vector.load %arg13[%c1_35, %c0_36, %c0_37] : memref<2x1x384xf32, #tpu.memory_space<vmem>>, vector<1x1x384xf32>
      %55 = vector.shape_cast %54 : vector<1x1x384xf32> to vector<1x384xf32>
      %c1_38 = arith.constant 1 : index
      %c0_39 = arith.constant 0 : index
      %c0_40 = arith.constant 0 : index
      %56 = vector.load %arg14[%c1_38, %c0_39, %c0_40] : memref<2x1x384xf32, #tpu.memory_space<vmem>>, vector<1x1x384xf32>
      %57 = vector.shape_cast %56 : vector<1x1x384xf32> to vector<1x384xf32>
      %cst_41 = arith.constant dense<0.000000e+00> : vector<1x384xf32>
      %58 = tpu.matmul %49, %51, %cst_41 {dimension_numbers = #tpu.dot_dimension_numbers<[1], [0], [0], [1], [0, 0, 1, 1], [], []>} : vector<1x128xf32>, vector<128x384xf32>, vector<1x384xf32> -> vector<1x384xf32>
      %59 = arith.addf %58, %55 : vector<1x384xf32>
      %cst_42 = arith.constant dense<0.000000e+00> : vector<1x384xf32>
      %60 = tpu.matmul %arg28, %53, %cst_42 {dimension_numbers = #tpu.dot_dimension_numbers<[1], [0], [0], [1], [0, 0, 1, 1], [], []>} : vector<1x128xf32>, vector<128x384xf32>, vector<1x384xf32> -> vector<1x384xf32>
      %61 = arith.addf %60, %57 : vector<1x384xf32>
      %62 = vector.extract_strided_slice %59 {offsets = [0, 0], sizes = [1, 128], strides = [1, 1]} : vector<1x384xf32> to vector<1x128xf32>
      %63 = vector.extract_strided_slice %61 {offsets = [0, 0], sizes = [1, 128], strides = [1, 1]} : vector<1x384xf32> to vector<1x128xf32>
      %64 = arith.addf %62, %63 : vector<1x128xf32>
      %65 = arith.negf %64 : vector<1x128xf32>
      %66 = math.exp %65 : vector<1x128xf32>
      %cst_43 = arith.constant 1.000000e+00 : f32
      %67 = vector.broadcast %cst_43 : f32 to vector<1x128xf32>
      %68 = arith.addf %67, %66 : vector<1x128xf32>
      %69 = arith.divf %67, %68 : vector<1x128xf32>
      %70 = vector.extract_strided_slice %59 {offsets = [0, 128], sizes = [1, 128], strides = [1, 1]} : vector<1x384xf32> to vector<1x128xf32>
      %71 = vector.extract_strided_slice %61 {offsets = [0, 128], sizes = [1, 128], strides = [1, 1]} : vector<1x384xf32> to vector<1x128xf32>
      %72 = arith.addf %70, %71 : vector<1x128xf32>
      %73 = arith.negf %72 : vector<1x128xf32>
      %74 = math.exp %73 : vector<1x128xf32>
      %cst_44 = arith.constant 1.000000e+00 : f32
      %75 = vector.broadcast %cst_44 : f32 to vector<1x128xf32>
      %76 = arith.addf %75, %74 : vector<1x128xf32>
      %77 = arith.divf %75, %76 : vector<1x128xf32>
      %78 = vector.extract_strided_slice %59 {offsets = [0, 256], sizes = [1, 128], strides = [1, 1]} : vector<1x384xf32> to vector<1x128xf32>
      %79 = vector.extract_strided_slice %61 {offsets = [0, 256], sizes = [1, 128], strides = [1, 1]} : vector<1x384xf32> to vector<1x128xf32>
      %80 = arith.mulf %69, %79 : vector<1x128xf32>
      %81 = arith.addf %78, %80 : vector<1x128xf32>
      %82 = math.tanh %81 : vector<1x128xf32>
      %cst_45 = arith.constant 1.000000e+00 : f32
      %83 = vector.broadcast %cst_45 : f32 to vector<1x128xf32>
      %84 = arith.subf %83, %77 : vector<1x128xf32>
      %85 = arith.mulf %84, %82 : vector<1x128xf32>
      %86 = arith.mulf %77, %arg28 : vector<1x128xf32>
      %87 = arith.addf %85, %86 : vector<1x128xf32>
      %cst_46 = arith.constant dense<0.000000e+00> : vector<1x8xf32>
      %88 = tpu.matmul %87, %7, %cst_46 {dimension_numbers = #tpu.dot_dimension_numbers<[1], [1], [0], [0], [0, 0, 1, 0], [], []>} : vector<1x128xf32>, vector<8x128xf32>, vector<1x8xf32> -> vector<1x8xf32>
      %cst_47 = arith.constant dense<0xFF800000> : vector<1xf32>
      %89 = vector.multi_reduction <maximumf>, %88, %cst_47 [1] : vector<1x8xf32> to vector<1xf32>
      %90 = vector.shape_cast %89 : vector<1xf32> to vector<1x1xf32>
      %91 = vector.broadcast %90 : vector<1x1xf32> to vector<1x8xf32>
      %92 = arith.subf %88, %91 : vector<1x8xf32>
      %93 = math.exp %92 : vector<1x8xf32>
      %cst_48 = arith.constant dense<0.000000e+00> : vector<1xf32>
      %94 = vector.multi_reduction <add>, %93, %cst_48 [1] : vector<1x8xf32> to vector<1xf32>
      %95 = vector.shape_cast %94 : vector<1xf32> to vector<1x1xf32>
      %96 = tpu.reciprocal %95 {approx = true} : vector<1x1xf32> -> vector<1x1xf32>
      %97 = vector.broadcast %96 : vector<1x1xf32> to vector<1x8xf32>
      %98 = arith.mulf %93, %97 : vector<1x8xf32>
      %cst_49 = arith.constant dense<0.000000e+00> : vector<1x128xf32>
      %99 = tpu.matmul %98, %7, %cst_49 {dimension_numbers = #tpu.dot_dimension_numbers<[1], [0], [0], [1], [0, 0, 1, 1], [], []>} : vector<1x8xf32>, vector<8x128xf32>, vector<1x128xf32> -> vector<1x128xf32>
      %c0_50 = arith.constant 0 : index
      %c0_51 = arith.constant 0 : index
      %100 = vector.load %arg15[%c0_50, %c0_51] : memref<128x128xf32, #tpu.memory_space<vmem>>, vector<128x128xf32>
      %cst_52 = arith.constant dense<0.000000e+00> : vector<1x128xf32>
      %101 = tpu.matmul %87, %100, %cst_52 {dimension_numbers = #tpu.dot_dimension_numbers<[1], [0], [0], [1], [0, 0, 1, 1], [], []>} : vector<1x128xf32>, vector<128x128xf32>, vector<1x128xf32> -> vector<1x128xf32>
      %c0_53 = arith.constant 0 : index
      %c0_54 = arith.constant 0 : index
      %102 = vector.load %arg16[%c0_53, %c0_54] : memref<128x128xf32, #tpu.memory_space<vmem>>, vector<128x128xf32>
      %cst_55 = arith.constant dense<0.000000e+00> : vector<1x128xf32>
      %103 = tpu.matmul %99, %102, %cst_55 {dimension_numbers = #tpu.dot_dimension_numbers<[1], [0], [0], [1], [0, 0, 1, 1], [], []>} : vector<1x128xf32>, vector<128x128xf32>, vector<1x128xf32> -> vector<1x128xf32>
      %104 = arith.addf %101, %103 : vector<1x128xf32>
      %c0_56 = arith.constant 0 : index
      %c0_57 = arith.constant 0 : index
      %105 = vector.load %arg17[%c0_56, %c0_57] : memref<1x128xf32, #tpu.memory_space<vmem>>, vector<1x128xf32>
      %106 = arith.addf %104, %105 : vector<1x128xf32>
      %107 = math.tanh %106 : vector<1x128xf32>
      %c0_58 = arith.constant 0 : index
      %c0_59 = arith.constant 0 : index
      %108 = vector.load %arg18[%c0_58, %c0_59] : memref<128x256xf32, #tpu.memory_space<vmem>>, vector<128x256xf32>
      %cst_60 = arith.constant dense<0.000000e+00> : vector<1x256xf32>
      %109 = tpu.matmul %107, %108, %cst_60 {dimension_numbers = #tpu.dot_dimension_numbers<[1], [0], [0], [1], [0, 0, 1, 1], [], []>} : vector<1x128xf32>, vector<128x256xf32>, vector<1x256xf32> -> vector<1x256xf32>
      %c0_61 = arith.constant 0 : index
      %c0_62 = arith.constant 0 : index
      %110 = vector.load %arg19[%c0_61, %c0_62] : memref<1x256xf32, #tpu.memory_space<vmem>>, vector<1x256xf32>
      %111 = arith.addf %109, %110 : vector<1x256xf32>
      %cst_63 = arith.constant dense<0xFF800000> : vector<1xf32>
      %112 = vector.multi_reduction <maximumf>, %111, %cst_63 [1] : vector<1x256xf32> to vector<1xf32>
      %113 = vector.shape_cast %112 : vector<1xf32> to vector<1x1xf32>
      %114 = vector.broadcast %113 : vector<1x1xf32> to vector<1x256xf32>
      %115 = arith.subf %111, %114 : vector<1x256xf32>
      %116 = math.exp %115 : vector<1x256xf32>
      %cst_64 = arith.constant dense<0.000000e+00> : vector<1xf32>
      %117 = vector.multi_reduction <add>, %116, %cst_64 [1] : vector<1x256xf32> to vector<1xf32>
      %118 = vector.shape_cast %117 : vector<1xf32> to vector<1x1xf32>
      %119 = tpu.reciprocal %118 {approx = true} : vector<1x1xf32> -> vector<1x1xf32>
      %120 = vector.broadcast %119 : vector<1x1xf32> to vector<1x256xf32>
      %121 = arith.mulf %116, %120 : vector<1x256xf32>
      %cst_65 = arith.constant dense<0xFF800000> : vector<1xf32>
      %122 = vector.multi_reduction <maximumf>, %121, %cst_65 [1] : vector<1x256xf32> to vector<1xf32>
      %123 = vector.shape_cast %122 : vector<1xf32> to vector<1x1xf32>
      %124 = tpu.iota {dimensions = array<i32: 1>} : vector<1x256xi32>
      %125 = arith.sitofp %124 : vector<1x256xi32> to vector<1x256xf32>
      %126 = vector.broadcast %123 : vector<1x1xf32> to vector<1x256xf32>
      %127 = arith.cmpf oeq, %121, %126 : vector<1x256xf32>
      %cst_66 = arith.constant 2.560000e+02 : f32
      %128 = vector.broadcast %cst_66 : f32 to vector<1x256xf32>
      %129 = arith.select %127, %125, %128 : vector<1x256xi1>, vector<1x256xf32>
      %130 = vector.shape_cast %129 : vector<1x256xf32> to vector<1x1x256xf32>
      %cst_67 = arith.constant dense<0x7F800000> : vector<1xf32>
      %131 = vector.multi_reduction <minimumf>, %130, %cst_67 [1, 2] : vector<1x1x256xf32> to vector<1xf32>
      %132 = vector.shape_cast %131 : vector<1xf32> to vector<1x1x1xf32>
      %133 = vector.extract %132[0, 0, 0] : f32 from vector<1x1x1xf32>
      %134 = arith.fptosi %133 : f32 to i32
      %135 = vector.shape_cast %121 : vector<1x256xf32> to vector<1x1x256xf32>
      %cst_68 = arith.constant dense<0xFF800000> : vector<1xf32>
      %136 = vector.multi_reduction <maximumf>, %135, %cst_68 [1, 2] : vector<1x1x256xf32> to vector<1xf32>
      %137 = vector.shape_cast %136 : vector<1xf32> to vector<1x1x1xf32>
      %138 = vector.extract %137[0, 0, 0] : f32 from vector<1x1x1xf32>
      %139 = arith.index_cast %arg26 : i32 to index
      %140 = memref.load %arg20[%139] : memref<5xi32, #tpu.memory_space<smem>>
      memref.store %134, %arg20[%139] : memref<5xi32, #tpu.memory_space<smem>>
      %141 = arith.index_cast %arg26 : i32 to index
      %142 = memref.load %arg21[%141] : memref<5xf32, #tpu.memory_space<smem>>
      memref.store %138, %arg21[%141] : memref<5xf32, #tpu.memory_space<smem>>
      scf.yield %49, %87, %134 : vector<1x128xf32>, vector<1x128xf32>, i32
    }
    %c5_i32_11 = arith.constant 5 : i32
    return
  }
}

</mosaic_0001>

<llo_original>
// kernel: greedy_decode.1
$region0: #{greedy_decode.1}
  #allocation0 [shape = 'u32[]', space=smem, size = 0x4, offset = 0x4, fixed_abs, tag = 'smem constant byte address 0x4 - core index']
  #allocation1 [shape = 'u32[144,128]{1,0:T(1,128)}', space=vmem, size = 0x12000, scoped, tag = 'internal scratch']
  #allocation2 [shape = 'f32[8,128]{1,0:T(8,128)}', space=vmem, size = 0x1000, scoped, tag = 'scratch operand']
  #allocation3 [shape = 'f32[8,128]{1,0:T(8,128)}', space=vmem, size = 0x1000, scoped, tag = 'scratch operand']
  #allocation4 [shape = 'f32[8,128]{1,0:T(8,128)}', space=vmem, size = 0x1000, scoped, tag = 'scratch operand']
  #allocation5 [shape = 'f32[8,128]{1,0:T(8,128)}', space=vmem, size = 0x1000, scoped, tag = 'scratch operand']
  %s0 = inlined_call_operand.hbm [shape: s32[8], index: 0, kind: input, shape index: {}]
  %s1 = inlined_call_operand.hbm [shape: f32[256,128], index: 1, kind: input, shape index: {}]
  %s2 = inlined_call_operand.hbm [shape: f32[2,128,384], index: 2, kind: input, shape index: {}]
  %s3 = inlined_call_operand.hbm [shape: f32[2,128,384], index: 3, kind: input, shape index: {}]
  %s4 = inlined_call_operand.vmem [shape: f32[2,1,384], index: 4, kind: input, shape index: {}]
  %s5 = inlined_call_operand.vmem [shape: f32[2,1,384], index: 5, kind: input, shape index: {}]
  %s6 = inlined_call_operand.hbm [shape: f32[2,128,384], index: 6, kind: input, shape index: {}]
  %s7 = inlined_call_operand.hbm [shape: f32[2,128,384], index: 7, kind: input, shape index: {}]
  %s8 = inlined_call_operand.hbm [shape: f32[2,128,384], index: 8, kind: input, shape index: {}]
  %s9 = inlined_call_operand.vmem [shape: f32[2,1,384], index: 9, kind: input, shape index: {}]
  %s10 = inlined_call_operand.vmem [shape: f32[2,1,384], index: 10, kind: input, shape index: {}]
  %s11 = inlined_call_operand.hbm [shape: f32[2,128,384], index: 11, kind: input, shape index: {}]
  %s12 = inlined_call_operand.hbm [shape: f32[2,128,384], index: 12, kind: input, shape index: {}]
  %s13 = inlined_call_operand.hbm [shape: f32[2,1,384], index: 13, kind: input, shape index: {}]
  %s14 = inlined_call_operand.hbm [shape: f32[2,1,384], index: 14, kind: input, shape index: {}]
  %s15 = inlined_call_operand.hbm [shape: f32[128,128], index: 15, kind: input, shape index: {}]
  %s16 = inlined_call_operand.hbm [shape: f32[128,128], index: 16, kind: input, shape index: {}]
  %s17 = inlined_call_operand.hbm [shape: f32[1,128], index: 17, kind: input, shape index: {}]
  %s18 = inlined_call_operand.hbm [shape: f32[128,256], index: 18, kind: input, shape index: {}]
  %s19 = inlined_call_operand.hbm [shape: f32[1,256], index: 19, kind: input, shape index: {}]
  %s20 = inlined_call_operand.hbm [shape: s32[5], index: 20, kind: output, shape index: {0}]
  %s21 = inlined_call_operand.hbm [shape: f32[5], index: 21, kind: output, shape index: {1}]
  %22 = xla_tuple %s20, %s21
  %s23 = sld [smem:[#allocation0]]
  $region183: #{greedy_decode.1} parent=0
    _
  %s25 = ssub.s32 1, %s23
  %s26 = scalar_select 0, %s25, %s23
  $region1: #{greedy_decode.1} parent=0
    #allocation6 [shape = 'u8[512]{0}', space=smem, size = 0x200, scoped, tag = 'input window, operand 0, single buffered']
    #allocation7 [shape = 's32[1]{0}', space=sflag, size = 0x4, scoped, tag = 'scoped memory for greedy_decode.1']
    #allocation8 [shape = 's32[1]{0}', space=sflag, size = 0x4, scoped, tag = 'scoped memory for greedy_decode.1']
    #allocation9 [shape = 's32[1]{0}', space=sflag, size = 0x4, scoped, tag = 'scoped memory for greedy_decode.1']
    #allocation10 [shape = 'u8[131072]{0}', space=vmem, size = 0x20000, scoped, tag = 'input window, operand 1, single buffered']
    #allocation11 [shape = 'u8[393216]{0}', space=vmem, size = 0x60000, scoped, tag = 'input window, operand 2, single buffered']
    #allocation12 [shape = 's32[1]{0}', space=sflag, size = 0x4, scoped, tag = 'scoped memory for greedy_decode.1']
    #allocation13 [shape = 'u8[393216]{0}', space=vmem, size = 0x60000, scoped, tag = 'input window, operand 3, single buffered']
    #allocation14 [shape = 'u8[393216]{0}', space=vmem, size = 0x60000, scoped, tag = 'input window, operand 6, single buffered']
    #allocation15 [shape = 's32[1]{0}', space=sflag, size = 0x4, scoped, tag = 'scoped memory for greedy_decode.1']
    #allocation16 [shape = 'u8[393216]{0}', space=vmem, size = 0x60000, scoped, tag = 'input window, operand 7, single buffered']
    #allocation17 [shape = 'u8[393216]{0}', space=vmem, size = 0x60000, scoped, tag = 'input window, operand 8, single buffered']
    #allocation18 [shape = 's32[1]{0}', space=sflag, size = 0x4, scoped, tag = 'scoped memory for greedy_decode.1']
    #allocation19 [shape = 'u8[393216]{0}', space=vmem, size = 0x60000, scoped, tag = 'input window, operand 11, single buffered']
    #allocation20 [shape = 'u8[393216]{0}', space=vmem, size = 0x60000, scoped, tag = 'input window, operand 12, single buffered']
    #allocation21 [shape = 's32[1]{0}', space=sflag, size = 0x4, scoped, tag = 'scoped memory for greedy_decode.1']
    #allocation22 [shape = 'u8[3072]{0}', space=vmem, size = 0xc00, scoped, tag = 'input window, operand 13, single buffered']
    #allocation23 [shape = 'u8[3072]{0}', space=vmem, size = 0xc00, scoped, tag = 'input window, operand 14, single buffered']
    #allocation24 [shape = 's32[1]{0}', space=sflag, size = 0x4, scoped, tag = 'scoped memory for greedy_decode.1']
    #allocation25 [shape = 'u8[65536]{0}', space=vmem, size = 0x10000, scoped, tag = 'input window, operand 15, single buffered']
    #allocation26 [shape = 'u8[65536]{0}', space=vmem, size = 0x10000, scoped, tag = 'input window, operand 16, single buffered']
    #allocation27 [shape = 's32[1]{0}', space=sflag, size = 0x4, scoped, tag = 'scoped memory for greedy_decode.1']
    #allocation28 [shape = 'u8[512]{0}', space=vmem, size = 0x400, scoped, tag = 'input window, operand 17, single buffered']
    #allocation29 [shape = 'u8[131072]{0}', space=vmem, size = 0x20000, scoped, tag = 'input window, operand 18, single buffered']
    #allocation30 [shape = 's32[1]{0}', space=sflag, size = 0x4, scoped, tag = 'scoped memory for greedy_decode.1']
    #allocation31 [shape = 'u8[1024]{0}', space=vmem, size = 0x400, scoped, tag = 'input window, operand 19, single buffered']
    #allocation32 [shape = 'u8[512]{0}', space=smem, size = 0x200, scoped, tag = 'output window, operand 0, single buffered']
    #allocation33 [shape = 'u8[512]{0}', space=smem, size = 0x200, scoped, tag = 'output window, operand 1, single buffered']
    #allocation34 [shape = 's32[1]{0}', space=sflag, size = 0x4, scoped, tag = 'scoped memory for greedy_decode.1']
    %27 = vsyncpa [#allocation8], 0
    %28 = vsyncpa [#allocation7], 0
    %29 = vsyncpa [#allocation12], 0
    %30 = vsyncpa [#allocation15], 0
    %31 = vsyncpa [#allocation18], 0
    %32 = vsyncpa [#allocation21], 0
    %33 = vsyncpa [#allocation24], 0
    %34 = vsyncpa [#allocation27], 0
    %35 = vsyncpa [#allocation30], 0
    %36 = vsyncpa [#allocation9], 0
    %37 = vsyncpa [#allocation34], 0
    // Predicated region
    $region2: #{greedy_decode.1} parent=1 // pred_check
      _
    $region3: #{greedy_decode.1} parent=1 // pred_check_branch
      %39 = sbr.rel (0) target = $region5
    $region4: #{greedy_decode.1} parent=1 // pred_region
      %s41 = ssub.s32 16, 16
      %42 = vsyncadd [#allocation8], %s41
      %45 = dma.hbm_to_smem %s0, 16, [#allocation6], [#allocation8]
    $region5: #{greedy_decode.1} parent=1 // pred_fallthru
      _
    // Predicated region
    $region6: #{greedy_decode.1} parent=1 // pred_check
      _
    $region7: #{greedy_decode.1} parent=1 // pred_check_branch
      %47 = sbr.rel (0) target = $region9
    $region8: #{greedy_decode.1} parent=1 // pred_region
      %s49 = ssub.s32 4096, 4096
      %50 = vsyncadd [#allocation7], %s49
      %s51 = sshll.u32 [#allocation10], 4
      %s52 = int_to_ptr.vmem [resolvable:$true] %s51
      %57 = dma.hbm_to_vmem [thread:$0]  %s1, 4096, %s52, [#allocation7], 128, 128, 8
    $region9: #{greedy_decode.1} parent=1 // pred_fallthru
      _
    // Predicated region
    $region10: #{greedy_decode.1} parent=1 // pred_check
      _
    $region11: #{greedy_decode.1} parent=1 // pred_check_branch
      %59 = sbr.rel (0) target = $region13
    $region12: #{greedy_decode.1} parent=1 // pred_region
      %s61 = ssub.s32 12288, 12288
      %62 = vsyncadd [#allocation12], %s61
      %s63 = sshll.u32 [#allocation11], 4
      %s64 = int_to_ptr.vmem [resolvable:$true] %s63
      %69 = dma.hbm_to_vmem [thread:$0]  %s2, 12288, %s64, [#allocation12], 384, 384, 24
    $region13: #{greedy_decode.1} parent=1 // pred_fallthru
      _
    // Predicated region
    $region14: #{greedy_decode.1} parent=1 // pred_check
      _
    $region15: #{greedy_decode.1} parent=1 // pred_check_branch
      %71 = sbr.rel (0) target = $region17
    $region16: #{greedy_decode.1} parent=1 // pred_region
      %s73 = ssub.s32 12288, 12288
      %74 = vsyncadd [#allocation12], %s73
      %s75 = sshll.u32 [#allocation13], 4
      %s76 = int_to_ptr.vmem [resolvable:$true] %s75
      %81 = dma.hbm_to_vmem [thread:$0]  %s3, 12288, %s76, [#allocation12], 384, 384, 24
    $region17: #{greedy_decode.1} parent=1 // pred_fallthru
      _
    // Predicated region
    $region18: #{greedy_decode.1} parent=1 // pred_check
      _
    $region19: #{greedy_decode.1} parent=1 // pred_check_branch
      %83 = sbr.rel (0) target = $region21
    $region20: #{greedy_decode.1} parent=1 // pred_region
      _
    $region21: #{greedy_decode.1} parent=1 // pred_fallthru
      _
    // Predicated region
    $region22: #{greedy_decode.1} parent=1 // pred_check
      _
    $region23: #{greedy_decode.1} parent=1 // pred_check_branch
      %85 = sbr.rel (0) target = $region25
    $region24: #{greedy_decode.1} parent=1 // pred_region
      _
    $region25: #{greedy_decode.1} parent=1 // pred_fallthru
      _
    // Predicated region
    $region26: #{greedy_decode.1} parent=1 // pred_check
      _
    $region27: #{greedy_decode.1} parent=1 // pred_check_branch
      %87 = sbr.rel (0) target = $region29
    $region28: #{greedy_decode.1} parent=1 // pred_region
      %s89 = ssub.s32 12288, 12288
      %90 = vsyncadd [#allocation15], %s89
      %s91 = sshll.u32 [#allocation14], 4
      %s92 = int_to_ptr.vmem [resolvable:$true] %s91
      %97 = dma.hbm_to_vmem [thread:$0]  %s6, 12288, %s92, [#allocation15], 384, 384, 24
    $region29: #{greedy_decode.1} parent=1 // pred_fallthru
      _
    // Predicated region
    $region30: #{greedy_decode.1} parent=1 // pred_check
      _
    $region31: #{greedy_decode.1} parent=1 // pred_check_branch
      %99 = sbr.rel (0) target = $region33
    $region32: #{greedy_decode.1} parent=1 // pred_region
      %s101 = ssub.s32 12288, 12288
      %102 = vsyncadd [#allocation15], %s101
      %s103 = sshll.u32 [#allocation16], 4
      %s104 = int_to_ptr.vmem [resolvable:$true] %s103
      %109 = dma.hbm_to_vmem [thread:$0]  %s7, 12288, %s104, [#allocation15], 384, 384, 24
    $region33: #{greedy_decode.1} parent=1 // pred_fallthru
      _
    // Predicated region
    $region34: #{greedy_decode.1} parent=1 // pred_check
      _
    $region35: #{greedy_decode.1} parent=1 // pred_check_branch
      %111 = sbr.rel (0) target = $region37
    $region36: #{greedy_decode.1} parent=1 // pred_region
      %s113 = ssub.s32 12288, 12288
      %114 = vsyncadd [#allocation18], %s113
      %s115 = sshll.u32 [#allocation17], 4
      %s116 = int_to_ptr.vmem [resolvable:$true] %s115
      %121 = dma.hbm_to_vmem [thread:$0]  %s8, 12288, %s116, [#allocation18], 384, 384, 24
    $region37: #{greedy_decode.1} parent=1 // pred_fallthru
      _
    // Predicated region
    $region38: #{greedy_decode.1} parent=1 // pred_check
      _
    $region39: #{greedy_decode.1} parent=1 // pred_check_branch
      %123 = sbr.rel (0) target = $region41
    $region40: #{greedy_decode.1} parent=1 // pred_region
      _
    $region41: #{greedy_decode.1} parent=1 // pred_fallthru
      _
    // Predicated region
    $region42: #{greedy_decode.1} parent=1 // pred_check
      _
    $region43: #{greedy_decode.1} parent=1 // pred_check_branch
      %125 = sbr.rel (0) target = $region45
    $region44: #{greedy_decode.1} parent=1 // pred_region
      _
    $region45: #{greedy_decode.1} parent=1 // pred_fallthru
      _
    // Predicated region
    $region46: #{greedy_decode.1} parent=1 // pred_check
      _
    $region47: #{greedy_decode.1} parent=1 // pred_check_branch
      %127 = sbr.rel (0) target = $region49
    $region48: #{greedy_decode.1} parent=1 // pred_region
      %s129 = ssub.s32 12288, 12288
      %130 = vsyncadd [#allocation18], %s129
      %s131 = sshll.u32 [#allocation19], 4
      %s132 = int_to_ptr.vmem [resolvable:$true] %s131
      %137 = dma.hbm_to_vmem [thread:$0]  %s11, 12288, %s132, [#allocation18], 384, 384, 24
    $region49: #{greedy_decode.1} parent=1 // pred_fallthru
      _
    // Predicated region
    $region50: #{greedy_decode.1} parent=1 // pred_check
      _
    $region51: #{greedy_decode.1} parent=1 // pred_check_branch
      %139 = sbr.rel (0) target = $region53
    $region52: #{greedy_decode.1} parent=1 // pred_region
      %s141 = ssub.s32 12288, 12288
      %142 = vsyncadd [#allocation21], %s141
      %s143 = sshll.u32 [#allocation20], 4
      %s144 = int_to_ptr.vmem [resolvable:$true] %s143
      %149 = dma.hbm_to_vmem [thread:$0]  %s12, 12288, %s144, [#allocation21], 384, 384, 24
    $region53: #{greedy_decode.1} parent=1 // pred_fallthru
      _
    // Predicated region
    $region54: #{greedy_decode.1} parent=1 // pred_check
      _
    $region55: #{greedy_decode.1} parent=1 // pred_check_branch
      %151 = sbr.rel (0) target = $region57
    $region56: #{greedy_decode.1} parent=1 // pred_region
      %s153 = ssub.s32 96, 96
      %154 = vsyncadd [#allocation21], %s153
      %s155 = sshll.u32 [#allocation22], 4
      %s156 = int_to_ptr.vmem [resolvable:$true] %s155
      %161 = dma.hbm_to_vmem [thread:$0]  %s13, 96, %s156, [#allocation21], 48, 48, 3
    $region57: #{greedy_decode.1} parent=1 // pred_fallthru
      _
    // Predicated region
    $region58: #{greedy_decode.1} parent=1 // pred_check
      _
    $region59: #{greedy_decode.1} parent=1 // pred_check_branch
      %163 = sbr.rel (0) target = $region61
    $region60: #{greedy_decode.1} parent=1 // pred_region
      %s165 = ssub.s32 96, 96
      %166 = vsyncadd [#allocation24], %s165
      %s167 = sshll.u32 [#allocation23], 4
      %s168 = int_to_ptr.vmem [resolvable:$true] %s167
      %173 = dma.hbm_to_vmem [thread:$0]  %s14, 96, %s168, [#allocation24], 48, 48, 3
    $region61: #{greedy_decode.1} parent=1 // pred_fallthru
      _
    // Predicated region
    $region62: #{greedy_decode.1} parent=1 // pred_check
      _
    $region63: #{greedy_decode.1} parent=1 // pred_check_branch
      %175 = sbr.rel (0) target = $region65
    $region64: #{greedy_decode.1} parent=1 // pred_region
      %s177 = ssub.s32 2048, 2048
      %178 = vsyncadd [#allocation24], %s177
      %s179 = sshll.u32 [#allocation25], 4
      %s180 = int_to_ptr.vmem [resolvable:$true] %s179
      %185 = dma.hbm_to_vmem [thread:$0]  %s15, 2048, %s180, [#allocation24], 128, 128, 8
    $region65: #{greedy_decode.1} parent=1 // pred_fallthru
      _
    // Predicated region
    $region66: #{greedy_decode.1} parent=1 // pred_check
      _
    $region67: #{greedy_decode.1} parent=1 // pred_check_branch
      %187 = sbr.rel (0) target = $region69
    $region68: #{greedy_decode.1} parent=1 // pred_region
      %s189 = ssub.s32 2048, 2048
      %190 = vsyncadd [#allocation27], %s189
      %s191 = sshll.u32 [#allocation26], 4
      %s192 = int_to_ptr.vmem [resolvable:$true] %s191
      %197 = dma.hbm_to_vmem [thread:$0]  %s16, 2048, %s192, [#allocation27], 128, 128, 8
    $region69: #{greedy_decode.1} parent=1 // pred_fallthru
      _
    // Predicated region
    $region70: #{greedy_decode.1} parent=1 // pred_check
      _
    $region71: #{greedy_decode.1} parent=1 // pred_check_branch
      %199 = sbr.rel (0) target = $region73
    $region72: #{greedy_decode.1} parent=1 // pred_region
      %s201 = ssub.s32 16, 16
      %202 = vsyncadd [#allocation27], %s201
      %s204 = sshll.u32 [#allocation28], 4
      %s205 = int_to_ptr.vmem [resolvable:$true] %s204
      %207 = dma.hbm_to_vmem [thread:$0]  %s17, 16, %s205, [#allocation27]
    $region73: #{greedy_decode.1} parent=1 // pred_fallthru
      _
    // Predicated region
    $region74: #{greedy_decode.1} parent=1 // pred_check
      _
    $region75: #{greedy_decode.1} parent=1 // pred_check_branch
      %209 = sbr.rel (0) target = $region77
    $region76: #{greedy_decode.1} parent=1 // pred_region
      %s211 = ssub.s32 4096, 4096
      %212 = vsyncadd [#allocation30], %s211
      %s213 = sshll.u32 [#allocation29], 4
      %s214 = int_to_ptr.vmem [resolvable:$true] %s213
      %219 = dma.hbm_to_vmem [thread:$0]  %s18, 4096, %s214, [#allocation30], 256, 256, 16
    $region77: #{greedy_decode.1} parent=1 // pred_fallthru
      _
    // Predicated region
    $region78: #{greedy_decode.1} parent=1 // pred_check
      _
    $region79: #{greedy_decode.1} parent=1 // pred_check_branch
      %221 = sbr.rel (0) target = $region81
    $region80: #{greedy_decode.1} parent=1 // pred_region
      %s223 = ssub.s32 32, 32
      %224 = vsyncadd [#allocation30], %s223
      %s226 = sshll.u32 [#allocation31], 4
      %s227 = int_to_ptr.vmem [resolvable:$true] %s226
      %229 = dma.hbm_to_vmem [thread:$0]  %s19, 32, %s227, [#allocation30]
    $region81: #{greedy_decode.1} parent=1 // pred_fallthru
      _
    // Predicated region
    $region82: #{greedy_decode.1} parent=1 // pred_check
      _
    $region83: #{greedy_decode.1} parent=1 // pred_check_branch
      %231 = sbr.rel (0) target = $region85
    $region84: #{greedy_decode.1} parent=1 // pred_region
      %232 = dma.done [#allocation8], 16
    $region85: #{greedy_decode.1} parent=1 // pred_fallthru
      _
    // Predicated region
    $region86: #{greedy_decode.1} parent=1 // pred_check
      _
    $region87: #{greedy_decode.1} parent=1 // pred_check_branch
      %234 = sbr.rel (0) target = $region89
    $region88: #{greedy_decode.1} parent=1 // pred_region
      %235 = dma.done [#allocation7], 4096
    $region89: #{greedy_decode.1} parent=1 // pred_fallthru
      _
    // Predicated region
    $region90: #{greedy_decode.1} parent=1 // pred_check
      _
    $region91: #{greedy_decode.1} parent=1 // pred_check_branch
      %237 = sbr.rel (0) target = $region93
    $region92: #{greedy_decode.1} parent=1 // pred_region
      %238 = dma.done [#allocation12], 12288
    $region93: #{greedy_decode.1} parent=1 // pred_fallthru
      _
    // Predicated region
    $region94: #{greedy_decode.1} parent=1 // pred_check
      _
    $region95: #{greedy_decode.1} parent=1 // pred_check_branch
      %240 = sbr.rel (0) target = $region97
    $region96: #{greedy_decode.1} parent=1 // pred_region
      %241 = dma.done [#allocation12], 12288
    $region97: #{greedy_decode.1} parent=1 // pred_fallthru
      _
    // Predicated region
    $region98: #{greedy_decode.1} parent=1 // pred_check
      _
    $region99: #{greedy_decode.1} parent=1 // pred_check_branch
      %243 = sbr.rel (0) target = $region101
    $region100: #{greedy_decode.1} parent=1 // pred_region
      %244 = dma.done [#allocation15], 12288
    $region101: #{greedy_decode.1} parent=1 // pred_fallthru
      _
    // Predicated region
    $region102: #{greedy_decode.1} parent=1 // pred_check
      _
    $region103: #{greedy_decode.1} parent=1 // pred_check_branch
      %246 = sbr.rel (0) target = $region105
    $region104: #{greedy_decode.1} parent=1 // pred_region
      %247 = dma.done [#allocation15], 12288
    $region105: #{greedy_decode.1} parent=1 // pred_fallthru
      _
    // Predicated region
    $region106: #{greedy_decode.1} parent=1 // pred_check
      _
    $region107: #{greedy_decode.1} parent=1 // pred_check_branch
      %249 = sbr.rel (0) target = $region109
    $region108: #{greedy_decode.1} parent=1 // pred_region
      %250 = dma.done [#allocation18], 12288
    $region109: #{greedy_decode.1} parent=1 // pred_fallthru
      _
    // Predicated region
    $region110: #{greedy_decode.1} parent=1 // pred_check
      _
    $region111: #{greedy_decode.1} parent=1 // pred_check_branch
      %252 = sbr.rel (0) target = $region113
    $region112: #{greedy_decode.1} parent=1 // pred_region
      %253 = dma.done [#allocation18], 12288
    $region113: #{greedy_decode.1} parent=1 // pred_fallthru
      _
    // Predicated region
    $region114: #{greedy_decode.1} parent=1 // pred_check
      _
    $region115: #{greedy_decode.1} parent=1 // pred_check_branch
      %255 = sbr.rel (0) target = $region117
    $region116: #{greedy_decode.1} parent=1 // pred_region
      %256 = dma.done [#allocation21], 12288
    $region117: #{greedy_decode.1} parent=1 // pred_fallthru
      _
    // Predicated region
    $region118: #{greedy_decode.1} parent=1 // pred_check
      _
    $region119: #{greedy_decode.1} parent=1 // pred_check_branch
      %258 = sbr.rel (0) target = $region121
    $region120: #{greedy_decode.1} parent=1 // pred_region
      %259 = dma.done [#allocation21], 96
    $region121: #{greedy_decode.1} parent=1 // pred_fallthru
      _
    // Predicated region
    $region122: #{greedy_decode.1} parent=1 // pred_check
      _
    $region123: #{greedy_decode.1} parent=1 // pred_check_branch
      %261 = sbr.rel (0) target = $region125
    $region124: #{greedy_decode.1} parent=1 // pred_region
      %262 = dma.done [#allocation24], 96
    $region125: #{greedy_decode.1} parent=1 // pred_fallthru
      _
    // Predicated region
    $region126: #{greedy_decode.1} parent=1 // pred_check
      _
    $region127: #{greedy_decode.1} parent=1 // pred_check_branch
      %264 = sbr.rel (0) target = $region129
    $region128: #{greedy_decode.1} parent=1 // pred_region
      %265 = dma.done [#allocation24], 2048
    $region129: #{greedy_decode.1} parent=1 // pred_fallthru
      _
    // Predicated region
    $region130: #{greedy_decode.1} parent=1 // pred_check
      _
    $region131: #{greedy_decode.1} parent=1 // pred_check_branch
      %267 = sbr.rel (0) target = $region133
    $region132: #{greedy_decode.1} parent=1 // pred_region
      %268 = dma.done [#allocation27], 2048
    $region133: #{greedy_decode.1} parent=1 // pred_fallthru
      _
    // Predicated region
    $region134: #{greedy_decode.1} parent=1 // pred_check
      _
    $region135: #{greedy_decode.1} parent=1 // pred_check_branch
      %270 = sbr.rel (0) target = $region137
    $region136: #{greedy_decode.1} parent=1 // pred_region
      %271 = dma.done [#allocation27], 16
    $region137: #{greedy_decode.1} parent=1 // pred_fallthru
      _
    // Predicated region
    $region138: #{greedy_decode.1} parent=1 // pred_check
      _
    $region139: #{greedy_decode.1} parent=1 // pred_check_branch
      %273 = sbr.rel (0) target = $region141
    $region140: #{greedy_decode.1} parent=1 // pred_region
      %274 = dma.done [#allocation30], 4096
    $region141: #{greedy_decode.1} parent=1 // pred_fallthru
      _
    // Predicated region
    $region142: #{greedy_decode.1} parent=1 // pred_check
      _
    $region143: #{greedy_decode.1} parent=1 // pred_check_branch
      %276 = sbr.rel (0) target = $region145
    $region144: #{greedy_decode.1} parent=1 // pred_region
      %277 = dma.done [#allocation30], 32
    $region145: #{greedy_decode.1} parent=1 // pred_fallthru
      _
    %278 = sfence
    loop: start=0, step=1, limit=8
    $region146: #{greedy_decode.1} parent=1 // loop_pre_header
      _
    $region147: #{greedy_decode.1} parent=1 // loop_header
      %s280 = sphi 0, %s284
      %p281 = scmp.ge.s32.totalorder %s280, 8
      %v285 = vphi 0.0, %v726
      %v286 = vphi 0.0, %v1163
    $region148: #{greedy_decode.1} parent=1 // loop_header_branch
      %283 = sbr.rel (%p281) target = $region152
    $region149: #{greedy_decode.1} parent=1 // loop_body
      %s287 = ssub.s32 7, %s280
      %s288 = sld [smem:[#allocation6 + %s280]]
      %s289 = scalar_lea.vmem [#allocation10], %s288
      %v290 = vld [vmem:[%s289] sm:$0x1]
      %s291 = sld [smem:[#allocation6 + %s287]]
      %s292 = scalar_lea.vmem [#allocation10], %s291
      %v293 = vld [vmem:[%s292] sm:$0x1]
      %v294 = vld [vmem:[#allocation11] sm:$0xff]
      %v295 = vld [vmem:[#allocation11 + $0x8] sm:$0xff]
      %v296 = vld [vmem:[#allocation11 + $0x10] sm:$0xff]
      %v297 = vld [vmem:[#allocation11 + $0x18] sm:$0xff]
      %v298 = vld [vmem:[#allocation11 + $0x20] sm:$0xff]
      %v299 = vld [vmem:[#allocation11 + $0x28] sm:$0xff]
      %v300 = vld [vmem:[#allocation11 + $0x30] sm:$0xff]
      %v301 = vld [vmem:[#allocation11 + $0x38] sm:$0xff]
      %v302 = vld [vmem:[#allocation11 + $0x40] sm:$0xff]
      %v303 = vld [vmem:[#allocation11 + $0x48] sm:$0xff]
      %v304 = vld [vmem:[#allocation11 + $0x50] sm:$0xff]
      %v305 = vld [vmem:[#allocation11 + $0x58] sm:$0xff]
      %v306 = vld [vmem:[#allocation11 + $0x60] sm:$0xff]
      %v307 = vld [vmem:[#allocation11 + $0x68] sm:$0xff]
      %v308 = vld [vmem:[#allocation11 + $0x70] sm:$0xff]
      %v309 = vld [vmem:[#allocation11 + $0x78] sm:$0xff]
      %v310 = vld [vmem:[#allocation11 + $0x80] sm:$0xff]
      %v311 = vld [vmem:[#allocation11 + $0x88] sm:$0xff]
      %v312 = vld [vmem:[#allocation11 + $0x90] sm:$0xff]
      %v313 = vld [vmem:[#allocation11 + $0x98] sm:$0xff]
      %v314 = vld [vmem:[#allocation11 + $0xa0] sm:$0xff]
      %v315 = vld [vmem:[#allocation11 + $0xa8] sm:$0xff]
      %v316 = vld [vmem:[#allocation11 + $0xb0] sm:$0xff]
      %v317 = vld [vmem:[#allocation11 + $0xb8] sm:$0xff]
      %v318 = vld [vmem:[#allocation11 + $0xc0] sm:$0xff]
      %v319 = vld [vmem:[#allocation11 + $0xc8] sm:$0xff]
      %v320 = vld [vmem:[#allocation11 + $0xd0] sm:$0xff]
      %v321 = vld [vmem:[#allocation11 + $0xd8] sm:$0xff]
      %v322 = vld [vmem:[#allocation11 + $0xe0] sm:$0xff]
      %v323 = vld [vmem:[#allocation11 + $0xe8] sm:$0xff]
      %v324 = vld [vmem:[#allocation11 + $0xf0] sm:$0xff]
      %v325 = vld [vmem:[#allocation11 + $0xf8] sm:$0xff]
      %v326 = vld [vmem:[#allocation11 + $0x100] sm:$0xff]
      %v327 = vld [vmem:[#allocation11 + $0x108] sm:$0xff]
      %v328 = vld [vmem:[#allocation11 + $0x110] sm:$0xff]
      %v329 = vld [vmem:[#allocation11 + $0x118] sm:$0xff]
      %v330 = vld [vmem:[#allocation11 + $0x120] sm:$0xff]
      %v331 = vld [vmem:[#allocation11 + $0x128] sm:$0xff]
      %v332 = vld [vmem:[#allocation11 + $0x130] sm:$0xff]
      %v333 = vld [vmem:[#allocation11 + $0x138] sm:$0xff]
      %v334 = vld [vmem:[#allocation11 + $0x140] sm:$0xff]
      %v335 = vld [vmem:[#allocation11 + $0x148] sm:$0xff]
      %v336 = vld [vmem:[#allocation11 + $0x150] sm:$0xff]
      %v337 = vld [vmem:[#allocation11 + $0x158] sm:$0xff]
      %v338 = vld [vmem:[#allocation11 + $0x160] sm:$0xff]
      %v339 = vld [vmem:[#allocation11 + $0x168] sm:$0xff]
      %v340 = vld [vmem:[#allocation11 + $0x170] sm:$0xff]
      %v341 = vld [vmem:[#allocation11 + $0x178] sm:$0xff]
      %v342 = vld [vmem:[#allocation13] sm:$0xff]
      %v343 = vld [vmem:[#allocation13 + $0x8] sm:$0xff]
      %v344 = vld [vmem:[#allocation13 + $0x10] sm:$0xff]
      %v345 = vld [vmem:[#allocation13 + $0x18] sm:$0xff]
      %v346 = vld [vmem:[#allocation13 + $0x20] sm:$0xff]
      %v347 = vld [vmem:[#allocation13 + $0x28] sm:$0xff]
      %v348 = vld [vmem:[#allocation13 + $0x30] sm:$0xff]
      %v349 = vld [vmem:[#allocation13 + $0x38] sm:$0xff]
      %v350 = vld [vmem:[#allocation13 + $0x40] sm:$0xff]
      %v351 = vld [vmem:[#allocation13 + $0x48] sm:$0xff]
      %v352 = vld [vmem:[#allocation13 + $0x50] sm:$0xff]
      %v353 = vld [vmem:[#allocation13 + $0x58] sm:$0xff]
      %v354 = vld [vmem:[#allocation13 + $0x60] sm:$0xff]
      %v355 = vld [vmem:[#allocation13 + $0x68] sm:$0xff]
      %v356 = vld [vmem:[#allocation13 + $0x70] sm:$0xff]
      %v357 = vld [vmem:[#allocation13 + $0x78] sm:$0xff]
      %v358 = vld [vmem:[#allocation13 + $0x80] sm:$0xff]
      %v359 = vld [vmem:[#allocation13 + $0x88] sm:$0xff]
      %v360 = vld [vmem:[#allocation13 + $0x90] sm:$0xff]
      %v361 = vld [vmem:[#allocation13 + $0x98] sm:$0xff]
      %v362 = vld [vmem:[#allocation13 + $0xa0] sm:$0xff]
      %v363 = vld [vmem:[#allocation13 + $0xa8] sm:$0xff]
      %v364 = vld [vmem:[#allocation13 + $0xb0] sm:$0xff]
      %v365 = vld [vmem:[#allocation13 + $0xb8] sm:$0xff]
      %v366 = vld [vmem:[#allocation13 + $0xc0] sm:$0xff]
      %v367 = vld [vmem:[#allocation13 + $0xc8] sm:$0xff]
      %v368 = vld [vmem:[#allocation13 + $0xd0] sm:$0xff]
      %v369 = vld [vmem:[#allocation13 + $0xd8] sm:$0xff]
      %v370 = vld [vmem:[#allocation13 + $0xe0] sm:$0xff]
      %v371 = vld [vmem:[#allocation13 + $0xe8] sm:$0xff]
      %v372 = vld [vmem:[#allocation13 + $0xf0] sm:$0xff]
      %v373 = vld [vmem:[#allocation13 + $0xf8] sm:$0xff]
      %v374 = vld [vmem:[#allocation13 + $0x100] sm:$0xff]
      %v375 = vld [vmem:[#allocation13 + $0x108] sm:$0xff]
      %v376 = vld [vmem:[#allocation13 + $0x110] sm:$0xff]
      %v377 = vld [vmem:[#allocation13 + $0x118] sm:$0xff]
      %v378 = vld [vmem:[#allocation13 + $0x120] sm:$0xff]
      %v379 = vld [vmem:[#allocation13 + $0x128] sm:$0xff]
      %v380 = vld [vmem:[#allocation13 + $0x130] sm:$0xff]
      %v381 = vld [vmem:[#allocation13 + $0x138] sm:$0xff]
      %v382 = vld [vmem:[#allocation13 + $0x140] sm:$0xff]
      %v383 = vld [vmem:[#allocation13 + $0x148] sm:$0xff]
      %v384 = vld [vmem:[#allocation13 + $0x150] sm:$0xff]
      %v385 = vld [vmem:[#allocation13 + $0x158] sm:$0xff]
      %v386 = vld [vmem:[#allocation13 + $0x160] sm:$0xff]
      %v387 = vld [vmem:[#allocation13 + $0x168] sm:$0xff]
      %v388 = vld [vmem:[#allocation13 + $0x170] sm:$0xff]
      %v389 = vld [vmem:[#allocation13 + $0x178] sm:$0xff]
      %v390 = vld [vmem:[%s4] sm:$0x7]
      %v391 = vld [vmem:[%s5] sm:$0x7]
      %v393 = vlaneseq
      %v394 = vshrl.u32 %v393, 7
      %v395 = vsub.s32 0, %v394
      %v396 = vrot.slane %v390, %v395
      %v397 = vlaneseq
      %v398 = vshrl.u32 %v397, 7
      %v399 = vsub.s32 1, %v398
      %v400 = vrot.slane %v390, %v399
      %v401 = vlaneseq
      %v402 = vshrl.u32 %v401, 7
      %v403 = vsub.s32 2, %v402
      %v404 = vrot.slane %v390, %v403
      %408 = vmatprep.subr.mxu0 %v295
      %409 = vmatpush1.msra.mxu0 %v294
      %410 = vmatprep.subr.mxu0 %v298
      %411 = vmatpush1.msra.mxu0 %v297
      %412 = vmatprep.subr.mxu0 %v301
      %413 = vmatpush1.msra.mxu0 %v300
      %414 = vmatprep.subr.mxu0 %v304
      %415 = vmatpush1.msra.mxu0 %v303
      %416 = vmatprep.subr.mxu0 %v307
      %417 = vmatpush1.msra.mxu0 %v306
      %418 = vmatprep.subr.mxu0 %v310
      %419 = vmatpush1.msra.mxu0 %v309
      %420 = vmatprep.subr.mxu0 %v313
      %421 = vmatpush1.msra.mxu0 %v312
      %422 = vmatprep.subr.mxu0 %v316
      %423 = vmatpush1.msra.mxu0 %v315
      %424 = vmatprep.subr.mxu0 %v319
      %425 = vmatpush1.msra.mxu0 %v318
      %426 = vmatprep.subr.mxu0 %v322
      %427 = vmatpush1.msra.mxu0 %v321
      %428 = vmatprep.subr.mxu0 %v325
      %429 = vmatpush1.msra.mxu0 %v324
      %430 = vmatprep.subr.mxu0 %v328
      %431 = vmatpush1.msra.mxu0 %v327
      %432 = vmatprep.subr.mxu0 %v331
      %433 = vmatpush1.msra.mxu0 %v330
      %434 = vmatprep.subr.mxu0 %v334
      %435 = vmatpush1.msra.mxu0 %v333
      %436 = vmatprep.subr.mxu0 %v337
      %437 = vmatpush1.msra.mxu0 %v336
      %438 = vmatprep.subr.mxu0 %v340
      %439 = vmatpush1.msra.mxu0 %v339
      %440 = vmatprep.subr.mxu0 0.0
      %441 = vmatpush1.msra.mxu0 0.0
      %442 = vmatprep.subr.mxu0 0.0
      %443 = vmatpush1.msra.mxu0 0.0
      %444 = vmatprep.subr.mxu0 0.0
      %445 = vmatpush1.msra.mxu0 0.0
      %446 = vmatprep.subr.mxu0 0.0
      %447 = vmatpush1.msra.mxu0 0.0
      %448 = vmatprep.subr.mxu0 0.0
      %449 = vmatpush1.msra.mxu0 0.0
      %450 = vmatprep.subr.mxu0 0.0
      %451 = vmatpush1.msra.mxu0 0.0
      %452 = vmatprep.subr.mxu0 0.0
      %453 = vmatpush1.msra.mxu0 0.0
      %454 = vmatprep.subr.mxu0 0.0
      %455 = vmatpush1.msra.mxu0 0.0
      %456 = vmatprep.subr.mxu0 0.0
      %457 = vmatpush1.msra.mxu0 0.0
      %458 = vmatprep.subr.mxu0 0.0
      %459 = vmatpush1.msra.mxu0 0.0
      %460 = vmatprep.subr.mxu0 0.0
      %461 = vmatpush1.msra.mxu0 0.0
      %462 = vmatprep.subr.mxu0 0.0
      %463 = vmatpush1.msra.mxu0 0.0
      %464 = vmatprep.subr.mxu0 0.0
      %465 = vmatpush1.msra.mxu0 0.0
      %466 = vmatprep.subr.mxu0 0.0
      %467 = vmatpush1.msra.mxu0 0.0
      %468 = vmatprep.subr.mxu0 0.0
      %469 = vmatpush1.msra.mxu0 0.0
      %470 = vmatprep.subr.mxu0 0.0
      %471 = vmatpush1.msra.mxu0 0.0
      %472 = vmatprep.mubr.f32.mxu0 0.0
      %473 = vmatmul.mubr.f32.gmra.mrb[0].mxu0 %v290
      %v474 = vpop.f32.mrb[0].mxu0
      %v475 = vadd.f32 %v396, %v474
      %v476 = vpop.f32.mrb[0].mxu0
      %v477 = vadd.f32 %v400, %v476
      %478 = vdwg.mxu0
      %479 = vmatprep.subr.mxu0 0.0
      %480 = vmatpush1.msra.mxu0 %v296
      %481 = vmatprep.subr.mxu0 0.0
      %482 = vmatpush1.msra.mxu0 %v299
      %483 = vmatprep.subr.mxu0 0.0
      %484 = vmatpush1.msra.mxu0 %v302
      %485 = vmatprep.subr.mxu0 0.0
      %486 = vmatpush1.msra.mxu0 %v305
      %487 = vmatprep.subr.mxu0 0.0
      %488 = vmatpush1.msra.mxu0 %v308
      %489 = vmatprep.subr.mxu0 0.0
      %490 = vmatpush1.msra.mxu0 %v311
      %491 = vmatprep.subr.mxu0 0.0
      %492 = vmatpush1.msra.mxu0 %v314
      %493 = vmatprep.subr.mxu0 0.0
      %494 = vmatpush1.msra.mxu0 %v317
      %495 = vmatprep.subr.mxu0 0.0
      %496 = vmatpush1.msra.mxu0 %v320
      %497 = vmatprep.subr.mxu0 0.0
      %498 = vmatpush1.msra.mxu0 %v323
      %499 = vmatprep.subr.mxu0 0.0
      %500 = vmatpush1.msra.mxu0 %v326
      %501 = vmatprep.subr.mxu0 0.0
      %502 = vmatpush1.msra.mxu0 %v329
      %503 = vmatprep.subr.mxu0 0.0
      %504 = vmatpush1.msra.mxu0 %v332
      %505 = vmatprep.subr.mxu0 0.0
      %506 = vmatpush1.msra.mxu0 %v335
      %507 = vmatprep.subr.mxu0 0.0
      %508 = vmatpush1.msra.mxu0 %v338
      %509 = vmatprep.subr.mxu0 0.0
      %510 = vmatpush1.msra.mxu0 %v341
      %511 = vmatprep.subr.mxu0 0.0
      %512 = vmatpush1.msra.mxu0 0.0
      %513 = vmatprep.subr.mxu0 0.0
      %514 = vmatpush1.msra.mxu0 0.0
      %515 = vmatprep.subr.mxu0 0.0
      %516 = vmatpush1.msra.mxu0 0.0
      %517 = vmatprep.subr.mxu0 0.0
      %518 = vmatpush1.msra.mxu0 0.0
      %519 = vmatprep.subr.mxu0 0.0
      %520 = vmatpush1.msra.mxu0 0.0
      %521 = vmatprep.subr.mxu0 0.0
      %522 = vmatpush1.msra.mxu0 0.0
      %523 = vmatprep.subr.mxu0 0.0
      %524 = vmatpush1.msra.mxu0 0.0
      %525 = vmatprep.subr.mxu0 0.0
      %526 = vmatpush1.msra.mxu0 0.0
      %527 = vmatprep.subr.mxu0 0.0
      %528 = vmatpush1.msra.mxu0 0.0
      %529 = vmatprep.subr.mxu0 0.0
      %530 = vmatpush1.msra.mxu0 0.0
      %531 = vmatprep.subr.mxu0 0.0
      %532 = vmatpush1.msra.mxu0 0.0
      %533 = vmatprep.subr.mxu0 0.0
      %534 = vmatpush1.msra.mxu0 0.0
      %535 = vmatprep.subr.mxu0 0.0
      %536 = vmatpush1.msra.mxu0 0.0
      %537 = vmatprep.subr.mxu0 0.0
      %538 = vmatpush1.msra.mxu0 0.0
      %539 = vmatprep.subr.mxu0 0.0
      %540 = vmatpush1.msra.mxu0 0.0
      %541 = vmatprep.subr.mxu0 0.0
      %542 = vmatpush1.msra.mxu0 0.0
      %543 = vmatprep.mubr.f32.mxu0 0.0
      %544 = vmatmul.mubr.f32.gmra.mrb[0].mxu0 %v290
      %v545 = vpop.f32.mrb[0].mxu0
      %v546 = vadd.f32 %v404, %v545
      %v547 = vpop.f32.mrb[0].mxu0
      %548 = vdwg.mxu0
      %v550 = vlaneseq
      %v551 = vshrl.u32 %v550, 7
      %v552 = vsub.s32 0, %v551
      %v553 = vrot.slane %v391, %v552
      %v554 = vlaneseq
      %v555 = vshrl.u32 %v554, 7
      %v556 = vsub.s32 1, %v555
      %v557 = vrot.slane %v391, %v556
      %v558 = vlaneseq
      %v559 = vshrl.u32 %v558, 7
      %v560 = vsub.s32 2, %v559
      %v561 = vrot.slane %v391, %v560
      %565 = vmatprep.subr.mxu0 %v343
      %566 = vmatpush1.msra.mxu0 %v342
      %567 = vmatprep.subr.mxu0 %v346
      %568 = vmatpush1.msra.mxu0 %v345
      %569 = vmatprep.subr.mxu0 %v349
      %570 = vmatpush1.msra.mxu0 %v348
      %571 = vmatprep.subr.mxu0 %v352
      %572 = vmatpush1.msra.mxu0 %v351
      %573 = vmatprep.subr.mxu0 %v355
      %574 = vmatpush1.msra.mxu0 %v354
      %575 = vmatprep.subr.mxu0 %v358
      %576 = vmatpush1.msra.mxu0 %v357
      %577 = vmatprep.subr.mxu0 %v361
      %578 = vmatpush1.msra.mxu0 %v360
      %579 = vmatprep.subr.mxu0 %v364
      %580 = vmatpush1.msra.mxu0 %v363
      %581 = vmatprep.subr.mxu0 %v367
      %582 = vmatpush1.msra.mxu0 %v366
      %583 = vmatprep.subr.mxu0 %v370
      %584 = vmatpush1.msra.mxu0 %v369
      %585 = vmatprep.subr.mxu0 %v373
      %586 = vmatpush1.msra.mxu0 %v372
      %587 = vmatprep.subr.mxu0 %v376
      %588 = vmatpush1.msra.mxu0 %v375
      %589 = vmatprep.subr.mxu0 %v379
      %590 = vmatpush1.msra.mxu0 %v378
      %591 = vmatprep.subr.mxu0 %v382
      %592 = vmatpush1.msra.mxu0 %v381
      %593 = vmatprep.subr.mxu0 %v385
      %594 = vmatpush1.msra.mxu0 %v384
      %595 = vmatprep.subr.mxu0 %v388
      %596 = vmatpush1.msra.mxu0 %v387
      %597 = vmatprep.subr.mxu0 0.0
      %598 = vmatpush1.msra.mxu0 0.0
      %599 = vmatprep.subr.mxu0 0.0
      %600 = vmatpush1.msra.mxu0 0.0
      %601 = vmatprep.subr.mxu0 0.0
      %602 = vmatpush1.msra.mxu0 0.0
      %603 = vmatprep.subr.mxu0 0.0
      %604 = vmatpush1.msra.mxu0 0.0
      %605 = vmatprep.subr.mxu0 0.0
      %606 = vmatpush1.msra.mxu0 0.0
      %607 = vmatprep.subr.mxu0 0.0
      %608 = vmatpush1.msra.mxu0 0.0
      %609 = vmatprep.subr.mxu0 0.0
      %610 = vmatpush1.msra.mxu0 0.0
      %611 = vmatprep.subr.mxu0 0.0
      %612 = vmatpush1.msra.mxu0 0.0
      %613 = vmatprep.subr.mxu0 0.0
      %614 = vmatpush1.msra.mxu0 0.0
      %615 = vmatprep.subr.mxu0 0.0
      %616 = vmatpush1.msra.mxu0 0.0
      %617 = vmatprep.subr.mxu0 0.0
      %618 = vmatpush1.msra.mxu0 0.0
      %619 = vmatprep.subr.mxu0 0.0
      %620 = vmatpush1.msra.mxu0 0.0
      %621 = vmatprep.subr.mxu0 0.0
      %622 = vmatpush1.msra.mxu0 0.0
      %623 = vmatprep.subr.mxu0 0.0
      %624 = vmatpush1.msra.mxu0 0.0
      %625 = vmatprep.subr.mxu0 0.0
      %626 = vmatpush1.msra.mxu0 0.0
      %627 = vmatprep.subr.mxu0 0.0
      %628 = vmatpush1.msra.mxu0 0.0
      %629 = vmatprep.mubr.f32.mxu0 0.0
      %630 = vmatmul.mubr.f32.gmra.mrb[0].mxu0 %v285
      %v631 = vpop.f32.mrb[0].mxu0
      %v632 = vadd.f32 %v553, %v631
      %v633 = vpop.f32.mrb[0].mxu0
      %v634 = vadd.f32 %v557, %v633
      %635 = vdwg.mxu0
      %636 = vmatprep.subr.mxu0 0.0
      %637 = vmatpush1.msra.mxu0 %v344
      %638 = vmatprep.subr.mxu0 0.0
      %639 = vmatpush1.msra.mxu0 %v347
      %640 = vmatprep.subr.mxu0 0.0
      %641 = vmatpush1.msra.mxu0 %v350
      %642 = vmatprep.subr.mxu0 0.0
      %643 = vmatpush1.msra.mxu0 %v353
      %644 = vmatprep.subr.mxu0 0.0
      %645 = vmatpush1.msra.mxu0 %v356
      %646 = vmatprep.subr.mxu0 0.0
      %647 = vmatpush1.msra.mxu0 %v359
      %648 = vmatprep.subr.mxu0 0.0
      %649 = vmatpush1.msra.mxu0 %v362
      %650 = vmatprep.subr.mxu0 0.0
      %651 = vmatpush1.msra.mxu0 %v365
      %652 = vmatprep.subr.mxu0 0.0
      %653 = vmatpush1.msra.mxu0 %v368
      %654 = vmatprep.subr.mxu0 0.0
      %655 = vmatpush1.msra.mxu0 %v371
      %656 = vmatprep.subr.mxu0 0.0
      %657 = vmatpush1.msra.mxu0 %v374
      %658 = vmatprep.subr.mxu0 0.0
      %659 = vmatpush1.msra.mxu0 %v377
      %660 = vmatprep.subr.mxu0 0.0
      %661 = vmatpush1.msra.mxu0 %v380
      %662 = vmatprep.subr.mxu0 0.0
      %663 = vmatpush1.msra.mxu0 %v383
      %664 = vmatprep.subr.mxu0 0.0
      %665 = vmatpush1.msra.mxu0 %v386
      %666 = vmatprep.subr.mxu0 0.0
      %667 = vmatpush1.msra.mxu0 %v389
      %668 = vmatprep.subr.mxu0 0.0
      %669 = vmatpush1.msra.mxu0 0.0
      %670 = vmatprep.subr.mxu0 0.0
      %671 = vmatpush1.msra.mxu0 0.0
      %672 = vmatprep.subr.mxu0 0.0
      %673 = vmatpush1.msra.mxu0 0.0
      %674 = vmatprep.subr.mxu0 0.0
      %675 = vmatpush1.msra.mxu0 0.0
      %676 = vmatprep.subr.mxu0 0.0
      %677 = vmatpush1.msra.mxu0 0.0
      %678 = vmatprep.subr.mxu0 0.0
      %679 = vmatpush1.msra.mxu0 0.0
      %680 = vmatprep.subr.mxu0 0.0
      %681 = vmatpush1.msra.mxu0 0.0
      %682 = vmatprep.subr.mxu0 0.0
      %683 = vmatpush1.msra.mxu0 0.0
      %684 = vmatprep.subr.mxu0 0.0
      %685 = vmatpush1.msra.mxu0 0.0
      %686 = vmatprep.subr.mxu0 0.0
      %687 = vmatpush1.msra.mxu0 0.0
      %688 = vmatprep.subr.mxu0 0.0
      %689 = vmatpush1.msra.mxu0 0.0
      %690 = vmatprep.subr.mxu0 0.0
      %691 = vmatpush1.msra.mxu0 0.0
      %692 = vmatprep.subr.mxu0 0.0
      %693 = vmatpush1.msra.mxu0 0.0
      %694 = vmatprep.subr.mxu0 0.0
      %695 = vmatpush1.msra.mxu0 0.0
      %696 = vmatprep.subr.mxu0 0.0
      %697 = vmatpush1.msra.mxu0 0.0
      %698 = vmatprep.subr.mxu0 0.0
      %699 = vmatpush1.msra.mxu0 0.0
      %700 = vmatprep.mubr.f32.mxu0 0.0
      %701 = vmatmul.mubr.f32.gmra.mrb[0].mxu0 %v285
      %v702 = vpop.f32.mrb[0].mxu0
      %v703 = vadd.f32 %v561, %v702
      %v704 = vpop.f32.mrb[0].mxu0
      %705 = vdwg.mxu0
      %v706 = vadd.f32 %v475, %v632
      %v707 = vxor.u32 %v706, 2147483648
      %v708 = vmul.f32 %v707, 1.442695
      %v709 = vpow.pop %v708
      %v710 = vadd.f32 %v709, 1.0
      %v711 = vrcp.pop %v710
      %v712 = vmul.f32 1.0, %v711
      %v713 = vadd.f32 %v477, %v634
      %v714 = vxor.u32 %v713, 2147483648
      %v715 = vmul.f32 %v714, 1.442695
      %v716 = vpow.pop %v715
      %v717 = vadd.f32 %v716, 1.0
      %v718 = vrcp.pop %v717
      %v719 = vmul.f32 1.0, %v718
      %v720 = vmul.f32 %v712, %v703
      %v721 = vadd.f32 %v546, %v720
      %v722 = vtanh.pop %v721
      %v723 = vsub.f32 1.0, %v719
      %v724 = vmul.f32 %v723, %v722
      %v725 = vmul.f32 %v719, %v285
      %v726 = vadd.f32 %v724, %v725
      %s727 = scalar_lea.vmem [#allocation11], 384
      %v728 = vld [vmem:[%s727] sm:$0xff]
      %v729 = vld [vmem:[%s727 + $0x8] sm:$0xff]
      %v730 = vld [vmem:[%s727 + $0x10] sm:$0xff]
      %v731 = vld [vmem:[%s727 + $0x18] sm:$0xff]
      %v732 = vld [vmem:[%s727 + $0x20] sm:$0xff]
      %v733 = vld [vmem:[%s727 + $0x28] sm:$0xff]
      %v734 = vld [vmem:[%s727 + $0x30] sm:$0xff]
      %v735 = vld [vmem:[%s727 + $0x38] sm:$0xff]
      %v736 = vld [vmem:[%s727 + $0x40] sm:$0xff]
      %v737 = vld [vmem:[%s727 + $0x48] sm:$0xff]
      %v738 = vld [vmem:[%s727 + $0x50] sm:$0xff]
      %v739 = vld [vmem:[%s727 + $0x58] sm:$0xff]
      %v740 = vld [vmem:[%s727 + $0x60] sm:$0xff]
      %v741 = vld [vmem:[%s727 + $0x68] sm:$0xff]
      %v742 = vld [vmem:[%s727 + $0x70] sm:$0xff]
      %v743 = vld [vmem:[%s727 + $0x78] sm:$0xff]
      %v744 = vld [vmem:[%s727 + $0x80] sm:$0xff]
      %v745 = vld [vmem:[%s727 + $0x88] sm:$0xff]
      %v746 = vld [vmem:[%s727 + $0x90] sm:$0xff]
      %v747 = vld [vmem:[%s727 + $0x98] sm:$0xff]
      %v748 = vld [vmem:[%s727 + $0xa0] sm:$0xff]
      %v749 = vld [vmem:[%s727 + $0xa8] sm:$0xff]
      %v750 = vld [vmem:[%s727 + $0xb0] sm:$0xff]
      %v751 = vld [vmem:[%s727 + $0xb8] sm:$0xff]
      %v752 = vld [vmem:[%s727 + $0xc0] sm:$0xff]
      %v753 = vld [vmem:[%s727 + $0xc8] sm:$0xff]
      %v754 = vld [vmem:[%s727 + $0xd0] sm:$0xff]
      %v755 = vld [vmem:[%s727 + $0xd8] sm:$0xff]
      %v756 = vld [vmem:[%s727 + $0xe0] sm:$0xff]
      %v757 = vld [vmem:[%s727 + $0xe8] sm:$0xff]
      %v758 = vld [vmem:[%s727 + $0xf0] sm:$0xff]
      %v759 = vld [vmem:[%s727 + $0xf8] sm:$0xff]
      %v760 = vld [vmem:[%s727 + $0x100] sm:$0xff]
      %v761 = vld [vmem:[%s727 + $0x108] sm:$0xff]
      %v762 = vld [vmem:[%s727 + $0x110] sm:$0xff]
      %v763 = vld [vmem:[%s727 + $0x118] sm:$0xff]
      %v764 = vld [vmem:[%s727 + $0x120] sm:$0xff]
      %v765 = vld [vmem:[%s727 + $0x128] sm:$0xff]
      %v766 = vld [vmem:[%s727 + $0x130] sm:$0xff]
      %v767 = vld [vmem:[%s727 + $0x138] sm:$0xff]
      %v768 = vld [vmem:[%s727 + $0x140] sm:$0xff]
      %v769 = vld [vmem:[%s727 + $0x148] sm:$0xff]
      %v770 = vld [vmem:[%s727 + $0x150] sm:$0xff]
      %v771 = vld [vmem:[%s727 + $0x158] sm:$0xff]
      %v772 = vld [vmem:[%s727 + $0x160] sm:$0xff]
      %v773 = vld [vmem:[%s727 + $0x168] sm:$0xff]
      %v774 = vld [vmem:[%s727 + $0x170] sm:$0xff]
      %v775 = vld [vmem:[%s727 + $0x178] sm:$0xff]
      %s776 = scalar_lea.vmem [#allocation13], 384
      %v777 = vld [vmem:[%s776] sm:$0xff]
      %v778 = vld [vmem:[%s776 + $0x8] sm:$0xff]
      %v779 = vld [vmem:[%s776 + $0x10] sm:$0xff]
      %v780 = vld [vmem:[%s776 + $0x18] sm:$0xff]
      %v781 = vld [vmem:[%s776 + $0x20] sm:$0xff]
      %v782 = vld [vmem:[%s776 + $0x28] sm:$0xff]
      %v783 = vld [vmem:[%s776 + $0x30] sm:$0xff]
      %v784 = vld [vmem:[%s776 + $0x38] sm:$0xff]
      %v785 = vld [vmem:[%s776 + $0x40] sm:$0xff]
      %v786 = vld [vmem:[%s776 + $0x48] sm:$0xff]
      %v787 = vld [vmem:[%s776 + $0x50] sm:$0xff]
      %v788 = vld [vmem:[%s776 + $0x58] sm:$0xff]
      %v789 = vld [vmem:[%s776 + $0x60] sm:$0xff]
      %v790 = vld [vmem:[%s776 + $0x68] sm:$0xff]
      %v791 = vld [vmem:[%s776 + $0x70] sm:$0xff]
      %v792 = vld [vmem:[%s776 + $0x78] sm:$0xff]
      %v793 = vld [vmem:[%s776 + $0x80] sm:$0xff]
      %v794 = vld [vmem:[%s776 + $0x88] sm:$0xff]
      %v795 = vld [vmem:[%s776 + $0x90] sm:$0xff]
      %v796 = vld [vmem:[%s776 + $0x98] sm:$0xff]
      %v797 = vld [vmem:[%s776 + $0xa0] sm:$0xff]
      %v798 = vld [vmem:[%s776 + $0xa8] sm:$0xff]
      %v799 = vld [vmem:[%s776 + $0xb0] sm:$0xff]
      %v800 = vld [vmem:[%s776 + $0xb8] sm:$0xff]
      %v801 = vld [vmem:[%s776 + $0xc0] sm:$0xff]
      %v802 = vld [vmem:[%s776 + $0xc8] sm:$0xff]
      %v803 = vld [vmem:[%s776 + $0xd0] sm:$0xff]
      %v804 = vld [vmem:[%s776 + $0xd8] sm:$0xff]
      %v805 = vld [vmem:[%s776 + $0xe0] sm:$0xff]
      %v806 = vld [vmem:[%s776 + $0xe8] sm:$0xff]
      %v807 = vld [vmem:[%s776 + $0xf0] sm:$0xff]
      %v808 = vld [vmem:[%s776 + $0xf8] sm:$0xff]
      %v809 = vld [vmem:[%s776 + $0x100] sm:$0xff]
      %v810 = vld [vmem:[%s776 + $0x108] sm:$0xff]
      %v811 = vld [vmem:[%s776 + $0x110] sm:$0xff]
      %v812 = vld [vmem:[%s776 + $0x118] sm:$0xff]
      %v813 = vld [vmem:[%s776 + $0x120] sm:$0xff]
      %v814 = vld [vmem:[%s776 + $0x128] sm:$0xff]
      %v815 = vld [vmem:[%s776 + $0x130] sm:$0xff]
      %v816 = vld [vmem:[%s776 + $0x138] sm:$0xff]
      %v817 = vld [vmem:[%s776 + $0x140] sm:$0xff]
      %v818 = vld [vmem:[%s776 + $0x148] sm:$0xff]
      %v819 = vld [vmem:[%s776 + $0x150] sm:$0xff]
      %v820 = vld [vmem:[%s776 + $0x158] sm:$0xff]
      %v821 = vld [vmem:[%s776 + $0x160] sm:$0xff]
      %v822 = vld [vmem:[%s776 + $0x168] sm:$0xff]
      %v823 = vld [vmem:[%s776 + $0x170] sm:$0xff]
      %v824 = vld [vmem:[%s776 + $0x178] sm:$0xff]
      %s825 = scalar_lea.vmem %s4, 3
      %v826 = vld [vmem:[%s825] sm:$0x7]
      %s827 = scalar_lea.vmem %s5, 3
      %v828 = vld [vmem:[%s827] sm:$0x7]
      %v830 = vlaneseq
      %v831 = vshrl.u32 %v830, 7
      %v832 = vsub.s32 0, %v831
      %v833 = vrot.slane %v826, %v832
      %v834 = vlaneseq
      %v835 = vshrl.u32 %v834, 7
      %v836 = vsub.s32 1, %v835
      %v837 = vrot.slane %v826, %v836
      %v838 = vlaneseq
      %v839 = vshrl.u32 %v838, 7
      %v840 = vsub.s32 2, %v839
      %v841 = vrot.slane %v826, %v840
      %845 = vmatprep.subr.mxu0 %v729
      %846 = vmatpush1.msra.mxu0 %v728
      %847 = vmatprep.subr.mxu0 %v732
      %848 = vmatpush1.msra.mxu0 %v731
      %849 = vmatprep.subr.mxu0 %v735
      %850 = vmatpush1.msra.mxu0 %v734
      %851 = vmatprep.subr.mxu0 %v738
      %852 = vmatpush1.msra.mxu0 %v737
      %853 = vmatprep.subr.mxu0 %v741
      %854 = vmatpush1.msra.mxu0 %v740
      %855 = vmatprep.subr.mxu0 %v744
      %856 = vmatpush1.msra.mxu0 %v743
      %857 = vmatprep.subr.mxu0 %v747
      %858 = vmatpush1.msra.mxu0 %v746
      %859 = vmatprep.subr.mxu0 %v750
      %860 = vmatpush1.msra.mxu0 %v749
      %861 = vmatprep.subr.mxu0 %v753
      %862 = vmatpush1.msra.mxu0 %v752
      %863 = vmatprep.subr.mxu0 %v756
      %864 = vmatpush1.msra.mxu0 %v755
      %865 = vmatprep.subr.mxu0 %v759
      %866 = vmatpush1.msra.mxu0 %v758
      %867 = vmatprep.subr.mxu0 %v762
      %868 = vmatpush1.msra.mxu0 %v761
      %869 = vmatprep.subr.mxu0 %v765
      %870 = vmatpush1.msra.mxu0 %v764
      %871 = vmatprep.subr.mxu0 %v768
      %872 = vmatpush1.msra.mxu0 %v767
      %873 = vmatprep.subr.mxu0 %v771
      %874 = vmatpush1.msra.mxu0 %v770
      %875 = vmatprep.subr.mxu0 %v774
      %876 = vmatpush1.msra.mxu0 %v773
      %877 = vmatprep.subr.mxu0 0.0
      %878 = vmatpush1.msra.mxu0 0.0
      %879 = vmatprep.subr.mxu0 0.0
      %880 = vmatpush1.msra.mxu0 0.0
      %881 = vmatprep.subr.mxu0 0.0
      %882 = vmatpush1.msra.mxu0 0.0
      %883 = vmatprep.subr.mxu0 0.0
      %884 = vmatpush1.msra.mxu0 0.0
      %885 = vmatprep.subr.mxu0 0.0
      %886 = vmatpush1.msra.mxu0 0.0
      %887 = vmatprep.subr.mxu0 0.0
      %888 = vmatpush1.msra.mxu0 0.0
      %889 = vmatprep.subr.mxu0 0.0
      %890 = vmatpush1.msra.mxu0 0.0
      %891 = vmatprep.subr.mxu0 0.0
      %892 = vmatpush1.msra.mxu0 0.0
      %893 = vmatprep.subr.mxu0 0.0
      %894 = vmatpush1.msra.mxu0 0.0
      %895 = vmatprep.subr.mxu0 0.0
      %896 = vmatpush1.msra.mxu0 0.0
      %897 = vmatprep.subr.mxu0 0.0
      %898 = vmatpush1.msra.mxu0 0.0
      %899 = vmatprep.subr.mxu0 0.0
      %900 = vmatpush1.msra.mxu0 0.0
      %901 = vmatprep.subr.mxu0 0.0
      %902 = vmatpush1.msra.mxu0 0.0
      %903 = vmatprep.subr.mxu0 0.0
      %904 = vmatpush1.msra.mxu0 0.0
      %905 = vmatprep.subr.mxu0 0.0
      %906 = vmatpush1.msra.mxu0 0.0
      %907 = vmatprep.subr.mxu0 0.0
      %908 = vmatpush1.msra.mxu0 0.0
      %909 = vmatprep.mubr.f32.mxu0 0.0
      %910 = vmatmul.mubr.f32.gmra.mrb[0].mxu0 %v293
      %v911 = vpop.f32.mrb[0].mxu0
      %v912 = vadd.f32 %v833, %v911
      %v913 = vpop.f32.mrb[0].mxu0
      %v914 = vadd.f32 %v837, %v913
      %915 = vdwg.mxu0
      %916 = vmatprep.subr.mxu0 0.0
      %917 = vmatpush1.msra.mxu0 %v730
      %918 = vmatprep.subr.mxu0 0.0
      %919 = vmatpush1.msra.mxu0 %v733
      %920 = vmatprep.subr.mxu0 0.0
      %921 = vmatpush1.msra.mxu0 %v736
      %922 = vmatprep.subr.mxu0 0.0
      %923 = vmatpush1.msra.mxu0 %v739
      %924 = vmatprep.subr.mxu0 0.0
      %925 = vmatpush1.msra.mxu0 %v742
      %926 = vmatprep.subr.mxu0 0.0
      %927 = vmatpush1.msra.mxu0 %v745
      %928 = vmatprep.subr.mxu0 0.0
      %929 = vmatpush1.msra.mxu0 %v748
      %930 = vmatprep.subr.mxu0 0.0
      %931 = vmatpush1.msra.mxu0 %v751
      %932 = vmatprep.subr.mxu0 0.0
      %933 = vmatpush1.msra.mxu0 %v754
      %934 = vmatprep.subr.mxu0 0.0
      %935 = vmatpush1.msra.mxu0 %v757
      %936 = vmatprep.subr.mxu0 0.0
      %937 = vmatpush1.msra.mxu0 %v760
      %938 = vmatprep.subr.mxu0 0.0
      %939 = vmatpush1.msra.mxu0 %v763
      %940 = vmatprep.subr.mxu0 0.0
      %941 = vmatpush1.msra.mxu0 %v766
      %942 = vmatprep.subr.mxu0 0.0
      %943 = vmatpush1.msra.mxu0 %v769
      %944 = vmatprep.subr.mxu0 0.0
      %945 = vmatpush1.msra.mxu0 %v772
      %946 = vmatprep.subr.mxu0 0.0
      %947 = vmatpush1.msra.mxu0 %v775
      %948 = vmatprep.subr.mxu0 0.0
      %949 = vmatpush1.msra.mxu0 0.0
      %950 = vmatprep.subr.mxu0 0.0
      %951 = vmatpush1.msra.mxu0 0.0
      %952 = vmatprep.subr.mxu0 0.0
      %953 = vmatpush1.msra.mxu0 0.0
      %954 = vmatprep.subr.mxu0 0.0
      %955 = vmatpush1.msra.mxu0 0.0
      %956 = vmatprep.subr.mxu0 0.0
      %957 = vmatpush1.msra.mxu0 0.0
      %958 = vmatprep.subr.mxu0 0.0
      %959 = vmatpush1.msra.mxu0 0.0
      %960 = vmatprep.subr.mxu0 0.0
      %961 = vmatpush1.msra.mxu0 0.0
      %962 = vmatprep.subr.mxu0 0.0
      %963 = vmatpush1.msra.mxu0 0.0
      %964 = vmatprep.subr.mxu0 0.0
      %965 = vmatpush1.msra.mxu0 0.0
      %966 = vmatprep.subr.mxu0 0.0
      %967 = vmatpush1.msra.mxu0 0.0
      %968 = vmatprep.subr.mxu0 0.0
      %969 = vmatpush1.msra.mxu0 0.0
      %970 = vmatprep.subr.mxu0 0.0
      %971 = vmatpush1.msra.mxu0 0.0
      %972 = vmatprep.subr.mxu0 0.0
      %973 = vmatpush1.msra.mxu0 0.0
      %974 = vmatprep.subr.mxu0 0.0
      %975 = vmatpush1.msra.mxu0 0.0
      %976 = vmatprep.subr.mxu0 0.0
      %977 = vmatpush1.msra.mxu0 0.0
      %978 = vmatprep.subr.mxu0 0.0
      %979 = vmatpush1.msra.mxu0 0.0
      %980 = vmatprep.mubr.f32.mxu0 0.0
      %981 = vmatmul.mubr.f32.gmra.mrb[0].mxu0 %v293
      %v982 = vpop.f32.mrb[0].mxu0
      %v983 = vadd.f32 %v841, %v982
      %v984 = vpop.f32.mrb[0].mxu0
      %985 = vdwg.mxu0
      %v987 = vlaneseq
      %v988 = vshrl.u32 %v987, 7
      %v989 = vsub.s32 0, %v988
      %v990 = vrot.slane %v828, %v989
      %v991 = vlaneseq
      %v992 = vshrl.u32 %v991, 7
      %v993 = vsub.s32 1, %v992
      %v994 = vrot.slane %v828, %v993
      %v995 = vlaneseq
      %v996 = vshrl.u32 %v995, 7
      %v997 = vsub.s32 2, %v996
      %v998 = vrot.slane %v828, %v997
      %1002 = vmatprep.subr.mxu0 %v778
      %1003 = vmatpush1.msra.mxu0 %v777
      %1004 = vmatprep.subr.mxu0 %v781
      %1005 = vmatpush1.msra.mxu0 %v780
      %1006 = vmatprep.subr.mxu0 %v784
      %1007 = vmatpush1.msra.mxu0 %v783
      %1008 = vmatprep.subr.mxu0 %v787
      %1009 = vmatpush1.msra.mxu0 %v786
      %1010 = vmatprep.subr.mxu0 %v790
      %1011 = vmatpush1.msra.mxu0 %v789
      %1012 = vmatprep.subr.mxu0 %v793
      %1013 = vmatpush1.msra.mxu0 %v792
      %1014 = vmatprep.subr.mxu0 %v796
      %1015 = vmatpush1.msra.mxu0 %v795
      %1016 = vmatprep.subr.mxu0 %v799
      %1017 = vmatpush1.msra.mxu0 %v798
      %1018 = vmatprep.subr.mxu0 %v802
      %1019 = vmatpush1.msra.mxu0 %v801
      %1020 = vmatprep.subr.mxu0 %v805
      %1021 = vmatpush1.msra.mxu0 %v804
      %1022 = vmatprep.subr.mxu0 %v808
      %1023 = vmatpush1.msra.mxu0 %v807
      %1024 = vmatprep.subr.mxu0 %v811
      %1025 = vmatpush1.msra.mxu0 %v810
      %1026 = vmatprep.subr.mxu0 %v814
      %1027 = vmatpush1.msra.mxu0 %v813
      %1028 = vmatprep.subr.mxu0 %v817
      %1029 = vmatpush1.msra.mxu0 %v816
      %1030 = vmatprep.subr.mxu0 %v820
      %1031 = vmatpush1.msra.mxu0 %v819
      %1032 = vmatprep.subr.mxu0 %v823
      %1033 = vmatpush1.msra.mxu0 %v822
      %1034 = vmatprep.subr.mxu0 0.0
      %1035 = vmatpush1.msra.mxu0 0.0
      %1036 = vmatprep.subr.mxu0 0.0
      %1037 = vmatpush1.msra.mxu0 0.0
      %1038 = vmatprep.subr.mxu0 0.0
      %1039 = vmatpush1.msra.mxu0 0.0
      %1040 = vmatprep.subr.mxu0 0.0
      %1041 = vmatpush1.msra.mxu0 0.0
      %1042 = vmatprep.subr.mxu0 0.0
      %1043 = vmatpush1.msra.mxu0 0.0
      %1044 = vmatprep.subr.mxu0 0.0
      %1045 = vmatpush1.msra.mxu0 0.0
      %1046 = vmatprep.subr.mxu0 0.0
      %1047 = vmatpush1.msra.mxu0 0.0
      %1048 = vmatprep.subr.mxu0 0.0
      %1049 = vmatpush1.msra.mxu0 0.0
      %1050 = vmatprep.subr.mxu0 0.0
      %1051 = vmatpush1.msra.mxu0 0.0
      %1052 = vmatprep.subr.mxu0 0.0
      %1053 = vmatpush1.msra.mxu0 0.0
      %1054 = vmatprep.subr.mxu0 0.0
      %1055 = vmatpush1.msra.mxu0 0.0
      %1056 = vmatprep.subr.mxu0 0.0
      %1057 = vmatpush1.msra.mxu0 0.0
      %1058 = vmatprep.subr.mxu0 0.0
      %1059 = vmatpush1.msra.mxu0 0.0
      %1060 = vmatprep.subr.mxu0 0.0
      %1061 = vmatpush1.msra.mxu0 0.0
      %1062 = vmatprep.subr.mxu0 0.0
      %1063 = vmatpush1.msra.mxu0 0.0
      %1064 = vmatprep.subr.mxu0 0.0
      %1065 = vmatpush1.msra.mxu0 0.0
      %1066 = vmatprep.mubr.f32.mxu0 0.0
      %1067 = vmatmul.mubr.f32.gmra.mrb[0].mxu0 %v286
      %v1068 = vpop.f32.mrb[0].mxu0
      %v1069 = vadd.f32 %v990, %v1068
      %v1070 = vpop.f32.mrb[0].mxu0
      %v1071 = vadd.f32 %v994, %v1070
      %1072 = vdwg.mxu0
      %1073 = vmatprep.subr.mxu0 0.0
      %1074 = vmatpush1.msra.mxu0 %v779
      %1075 = vmatprep.subr.mxu0 0.0
      %1076 = vmatpush1.msra.mxu0 %v782
      %1077 = vmatprep.subr.mxu0 0.0
      %1078 = vmatpush1.msra.mxu0 %v785
      %1079 = vmatprep.subr.mxu0 0.0
      %1080 = vmatpush1.msra.mxu0 %v788
      %1081 = vmatprep.subr.mxu0 0.0
      %1082 = vmatpush1.msra.mxu0 %v791
      %1083 = vmatprep.subr.mxu0 0.0
      %1084 = vmatpush1.msra.mxu0 %v794
      %1085 = vmatprep.subr.mxu0 0.0
      %1086 = vmatpush1.msra.mxu0 %v797
      %1087 = vmatprep.subr.mxu0 0.0
      %1088 = vmatpush1.msra.mxu0 %v800
      %1089 = vmatprep.subr.mxu0 0.0
      %1090 = vmatpush1.msra.mxu0 %v803
      %1091 = vmatprep.subr.mxu0 0.0
      %1092 = vmatpush1.msra.mxu0 %v806
      %1093 = vmatprep.subr.mxu0 0.0
      %1094 = vmatpush1.msra.mxu0 %v809
      %1095 = vmatprep.subr.mxu0 0.0
      %1096 = vmatpush1.msra.mxu0 %v812
      %1097 = vmatprep.subr.mxu0 0.0
      %1098 = vmatpush1.msra.mxu0 %v815
      %1099 = vmatprep.subr.mxu0 0.0
      %1100 = vmatpush1.msra.mxu0 %v818
      %1101 = vmatprep.subr.mxu0 0.0
      %1102 = vmatpush1.msra.mxu0 %v821
      %1103 = vmatprep.subr.mxu0 0.0
      %1104 = vmatpush1.msra.mxu0 %v824
      %1105 = vmatprep.subr.mxu0 0.0
      %1106 = vmatpush1.msra.mxu0 0.0
      %1107 = vmatprep.subr.mxu0 0.0
      %1108 = vmatpush1.msra.mxu0 0.0
      %1109 = vmatprep.subr.mxu0 0.0
      %1110 = vmatpush1.msra.mxu0 0.0
      %1111 = vmatprep.subr.mxu0 0.0
      %1112 = vmatpush1.msra.mxu0 0.0
      %1113 = vmatprep.subr.mxu0 0.0
      %1114 = vmatpush1.msra.mxu0 0.0
      %1115 = vmatprep.subr.mxu0 0.0
      %1116 = vmatpush1.msra.mxu0 0.0
      %1117 = vmatprep.subr.mxu0 0.0
      %1118 = vmatpush1.msra.mxu0 0.0
      %1119 = vmatprep.subr.mxu0 0.0
      %1120 = vmatpush1.msra.mxu0 0.0
      %1121 = vmatprep.subr.mxu0 0.0
      %1122 = vmatpush1.msra.mxu0 0.0
      %1123 = vmatprep.subr.mxu0 0.0
      %1124 = vmatpush1.msra.mxu0 0.0
      %1125 = vmatprep.subr.mxu0 0.0
      %1126 = vmatpush1.msra.mxu0 0.0
      %1127 = vmatprep.subr.mxu0 0.0
      %1128 = vmatpush1.msra.mxu0 0.0
      %1129 = vmatprep.subr.mxu0 0.0
      %1130 = vmatpush1.msra.mxu0 0.0
      %1131 = vmatprep.subr.mxu0 0.0
      %1132 = vmatpush1.msra.mxu0 0.0
      %1133 = vmatprep.subr.mxu0 0.0
      %1134 = vmatpush1.msra.mxu0 0.0
      %1135 = vmatprep.subr.mxu0 0.0
      %1136 = vmatpush1.msra.mxu0 0.0
      %1137 = vmatprep.mubr.f32.mxu0 0.0
      %1138 = vmatmul.mubr.f32.gmra.mrb[0].mxu0 %v286
      %v1139 = vpop.f32.mrb[0].mxu0
      %v1140 = vadd.f32 %v998, %v1139
      %v1141 = vpop.f32.mrb[0].mxu0
      %1142 = vdwg.mxu0
      %v1143 = vadd.f32 %v912, %v1069
      %v1144 = vxor.u32 %v1143, 2147483648
      %v1145 = vmul.f32 %v1144, 1.442695
      %v1146 = vpow.pop %v1145
      %v1147 = vadd.f32 %v1146, 1.0
      %v1148 = vrcp.pop %v1147
      %v1149 = vmul.f32 1.0, %v1148
      %v1150 = vadd.f32 %v914, %v1071
      %v1151 = vxor.u32 %v1150, 2147483648
      %v1152 = vmul.f32 %v1151, 1.442695
      %v1153 = vpow.pop %v1152
      %v1154 = vadd.f32 %v1153, 1.0
      %v1155 = vrcp.pop %v1154
      %v1156 = vmul.f32 1.0, %v1155
      %v1157 = vmul.f32 %v1149, %v1140
      %v1158 = vadd.f32 %v983, %v1157
      %v1159 = vtanh.pop %v1158
      %v1160 = vsub.f32 1.0, %v1156
      %v1161 = vmul.f32 %v1160, %v1159
      %v1162 = vmul.f32 %v1156, %v286
      %v1163 = vadd.f32 %v1161, %v1162
      %s1164 = scalar_lea.vmem [#allocation2], %s280
      %1165 = vst [vmem:[%s1164] sm:$0x1] %v726
      %s1166 = scalar_lea.vmem [#allocation3], %s287
      %1167 = vst [vmem:[%s1166] sm:$0x1] %v1163
    $region150: #{greedy_decode.1} parent=1 // loop_footer
      %s284 = sadd.s32 1, %s280
    $region151: #{greedy_decode.1} parent=1 // loop_footer_branch
      %279 = sbr.rel target = $region147
    $region152: #{greedy_decode.1} parent=1 // loop_exit
      _
    loop: start=0, step=1, limit=8
    $region153: #{greedy_decode.1} parent=1 // loop_pre_header
      _
    $region154: #{greedy_decode.1} parent=1 // loop_header
      %s1169 = sphi 0, %s1173
      %p1170 = scmp.ge.s32.totalorder %s1169, 8
      %v1174 = vphi 0.0, %v1805
      %v1175 = vphi 0.0, %v2439
    $region155: #{greedy_decode.1} parent=1 // loop_header_branch
      %1172 = sbr.rel (%p1170) target = $region159
    $region156: #{greedy_decode.1} parent=1 // loop_body
      %s1176 = ssub.s32 7, %s1169
      %s1177 = scalar_lea.vmem [#allocation2], %s1169
      %v1178 = vld [vmem:[%s1177] sm:$0x1]
      %s1179 = scalar_lea.vmem [#allocation3], %s1169
      %v1180 = vld [vmem:[%s1179] sm:$0x1]
      %v1181 = vld [vmem:[#allocation14] sm:$0xff]
      %v1182 = vld [vmem:[#allocation14 + $0x8] sm:$0xff]
      %v1183 = vld [vmem:[#allocation14 + $0x10] sm:$0xff]
      %v1184 = vld [vmem:[#allocation14 + $0x18] sm:$0xff]
      %v1185 = vld [vmem:[#allocation14 + $0x20] sm:$0xff]
      %v1186 = vld [vmem:[#allocation14 + $0x28] sm:$0xff]
      %v1187 = vld [vmem:[#allocation14 + $0x30] sm:$0xff]
      %v1188 = vld [vmem:[#allocation14 + $0x38] sm:$0xff]
      %v1189 = vld [vmem:[#allocation14 + $0x40] sm:$0xff]
      %v1190 = vld [vmem:[#allocation14 + $0x48] sm:$0xff]
      %v1191 = vld [vmem:[#allocation14 + $0x50] sm:$0xff]
      %v1192 = vld [vmem:[#allocation14 + $0x58] sm:$0xff]
      %v1193 = vld [vmem:[#allocation14 + $0x60] sm:$0xff]
      %v1194 = vld [vmem:[#allocation14 + $0x68] sm:$0xff]
      %v1195 = vld [vmem:[#allocation14 + $0x70] sm:$0xff]
      %v1196 = vld [vmem:[#allocation14 + $0x78] sm:$0xff]
      %v1197 = vld [vmem:[#allocation14 + $0x80] sm:$0xff]
      %v1198 = vld [vmem:[#allocation14 + $0x88] sm:$0xff]
      %v1199 = vld [vmem:[#allocation14 + $0x90] sm:$0xff]
      %v1200 = vld [vmem:[#allocation14 + $0x98] sm:$0xff]
      %v1201 = vld [vmem:[#allocation14 + $0xa0] sm:$0xff]
      %v1202 = vld [vmem:[#allocation14 + $0xa8] sm:$0xff]
      %v1203 = vld [vmem:[#allocation14 + $0xb0] sm:$0xff]
      %v1204 = vld [vmem:[#allocation14 + $0xb8] sm:$0xff]
      %v1205 = vld [vmem:[#allocation14 + $0xc0] sm:$0xff]
      %v1206 = vld [vmem:[#allocation14 + $0xc8] sm:$0xff]
      %v1207 = vld [vmem:[#allocation14 + $0xd0] sm:$0xff]
      %v1208 = vld [vmem:[#allocation14 + $0xd8] sm:$0xff]
      %v1209 = vld [vmem:[#allocation14 + $0xe0] sm:$0xff]
      %v1210 = vld [vmem:[#allocation14 + $0xe8] sm:$0xff]
      %v1211 = vld [vmem:[#allocation14 + $0xf0] sm:$0xff]
      %v1212 = vld [vmem:[#allocation14 + $0xf8] sm:$0xff]
      %v1213 = vld [vmem:[#allocation14 + $0x100] sm:$0xff]
      %v1214 = vld [vmem:[#allocation14 + $0x108] sm:$0xff]
      %v1215 = vld [vmem:[#allocation14 + $0x110] sm:$0xff]
      %v1216 = vld [vmem:[#allocation14 + $0x118] sm:$0xff]
      %v1217 = vld [vmem:[#allocation14 + $0x120] sm:$0xff]
      %v1218 = vld [vmem:[#allocation14 + $0x128] sm:$0xff]
      %v1219 = vld [vmem:[#allocation14 + $0x130] sm:$0xff]
      %v1220 = vld [vmem:[#allocation14 + $0x138] sm:$0xff]
      %v1221 = vld [vmem:[#allocation14 + $0x140] sm:$0xff]
      %v1222 = vld [vmem:[#allocation14 + $0x148] sm:$0xff]
      %v1223 = vld [vmem:[#allocation14 + $0x150] sm:$0xff]
      %v1224 = vld [vmem:[#allocation14 + $0x158] sm:$0xff]
      %v1225 = vld [vmem:[#allocation14 + $0x160] sm:$0xff]
      %v1226 = vld [vmem:[#allocation14 + $0x168] sm:$0xff]
      %v1227 = vld [vmem:[#allocation14 + $0x170] sm:$0xff]
      %v1228 = vld [vmem:[#allocation14 + $0x178] sm:$0xff]
      %v1229 = vld [vmem:[#allocation16] sm:$0xff]
      %v1230 = vld [vmem:[#allocation16 + $0x8] sm:$0xff]
      %v1231 = vld [vmem:[#allocation16 + $0x10] sm:$0xff]
      %v1232 = vld [vmem:[#allocation16 + $0x18] sm:$0xff]
      %v1233 = vld [vmem:[#allocation16 + $0x20] sm:$0xff]
      %v1234 = vld [vmem:[#allocation16 + $0x28] sm:$0xff]
      %v1235 = vld [vmem:[#allocation16 + $0x30] sm:$0xff]
      %v1236 = vld [vmem:[#allocation16 + $0x38] sm:$0xff]
      %v1237 = vld [vmem:[#allocation16 + $0x40] sm:$0xff]
      %v1238 = vld [vmem:[#allocation16 + $0x48] sm:$0xff]
      %v1239 = vld [vmem:[#allocation16 + $0x50] sm:$0xff]
      %v1240 = vld [vmem:[#allocation16 + $0x58] sm:$0xff]
      %v1241 = vld [vmem:[#allocation16 + $0x60] sm:$0xff]
      %v1242 = vld [vmem:[#allocation16 + $0x68] sm:$0xff]
      %v1243 = vld [vmem:[#allocation16 + $0x70] sm:$0xff]
      %v1244 = vld [vmem:[#allocation16 + $0x78] sm:$0xff]
      %v1245 = vld [vmem:[#allocation16 + $0x80] sm:$0xff]
      %v1246 = vld [vmem:[#allocation16 + $0x88] sm:$0xff]
      %v1247 = vld [vmem:[#allocation16 + $0x90] sm:$0xff]
      %v1248 = vld [vmem:[#allocation16 + $0x98] sm:$0xff]
      %v1249 = vld [vmem:[#allocation16 + $0xa0] sm:$0xff]
      %v1250 = vld [vmem:[#allocation16 + $0xa8] sm:$0xff]
      %v1251 = vld [vmem:[#allocation16 + $0xb0] sm:$0xff]
      %v1252 = vld [vmem:[#allocation16 + $0xb8] sm:$0xff]
      %v1253 = vld [vmem:[#allocation16 + $0xc0] sm:$0xff]
      %v1254 = vld [vmem:[#allocation16 + $0xc8] sm:$0xff]
      %v1255 = vld [vmem:[#allocation16 + $0xd0] sm:$0xff]
      %v1256 = vld [vmem:[#allocation16 + $0xd8] sm:$0xff]
      %v1257 = vld [vmem:[#allocation16 + $0xe0] sm:$0xff]
      %v1258 = vld [vmem:[#allocation16 + $0xe8] sm:$0xff]
      %v1259 = vld [vmem:[#allocation16 + $0xf0] sm:$0xff]
      %v1260 = vld [vmem:[#allocation16 + $0xf8] sm:$0xff]
      %v1261 = vld [vmem:[#allocation16 + $0x100] sm:$0xff]
      %v1262 = vld [vmem:[#allocation16 + $0x108] sm:$0xff]
      %v1263 = vld [vmem:[#allocation16 + $0x110] sm:$0xff]
      %v1264 = vld [vmem:[#allocation16 + $0x118] sm:$0xff]
      %v1265 = vld [vmem:[#allocation16 + $0x120] sm:$0xff]
      %v1266 = vld [vmem:[#allocation16 + $0x128] sm:$0xff]
      %v1267 = vld [vmem:[#allocation16 + $0x130] sm:$0xff]
      %v1268 = vld [vmem:[#allocation16 + $0x138] sm:$0xff]
      %v1269 = vld [vmem:[#allocation16 + $0x140] sm:$0xff]
      %v1270 = vld [vmem:[#allocation16 + $0x148] sm:$0xff]
      %v1271 = vld [vmem:[#allocation16 + $0x150] sm:$0xff]
      %v1272 = vld [vmem:[#allocation16 + $0x158] sm:$0xff]
      %v1273 = vld [vmem:[#allocation16 + $0x160] sm:$0xff]
      %v1274 = vld [vmem:[#allocation16 + $0x168] sm:$0xff]
      %v1275 = vld [vmem:[#allocation16 + $0x170] sm:$0xff]
      %v1276 = vld [vmem:[#allocation16 + $0x178] sm:$0xff]
      %1277 = vmatprep.subr.mxu0 %v1230
      %1278 = vmatpush1.msra.mxu0 %v1229
      %1279 = vmatprep.subr.mxu0 %v1233
      %1280 = vmatpush1.msra.mxu0 %v1232
      %1281 = vmatprep.subr.mxu0 %v1236
      %1282 = vmatpush1.msra.mxu0 %v1235
      %1283 = vmatprep.subr.mxu0 %v1239
      %1284 = vmatpush1.msra.mxu0 %v1238
      %1285 = vmatprep.subr.mxu0 %v1242
      %1286 = vmatpush1.msra.mxu0 %v1241
      %1287 = vmatprep.subr.mxu0 %v1245
      %1288 = vmatpush1.msra.mxu0 %v1244
      %1289 = vmatprep.subr.mxu0 %v1248
      %1290 = vmatpush1.msra.mxu0 %v1247
      %1291 = vmatprep.subr.mxu0 %v1251
      %1292 = vmatpush1.msra.mxu0 %v1250
      %1293 = vmatprep.subr.mxu0 %v1254
      %1294 = vmatpush1.msra.mxu0 %v1253
      %1295 = vmatprep.subr.mxu0 %v1257
      %1296 = vmatpush1.msra.mxu0 %v1256
      %1297 = vmatprep.subr.mxu0 %v1260
      %1298 = vmatpush1.msra.mxu0 %v1259
      %1299 = vmatprep.subr.mxu0 %v1263
      %1300 = vmatpush1.msra.mxu0 %v1262
      %1301 = vmatprep.subr.mxu0 %v1266
      %1302 = vmatpush1.msra.mxu0 %v1265
      %1303 = vmatprep.subr.mxu0 %v1269
      %1304 = vmatpush1.msra.mxu0 %v1268
      %1305 = vmatprep.subr.mxu0 %v1272
      %1306 = vmatpush1.msra.mxu0 %v1271
      %1307 = vmatprep.subr.mxu0 %v1275
      %1308 = vmatpush1.msra.mxu0 %v1274
      %1309 = vmatprep.subr.mxu0 0.0
      %1310 = vmatpush1.msra.mxu0 0.0
      %1311 = vmatprep.subr.mxu0 0.0
      %1312 = vmatpush1.msra.mxu0 0.0
      %1313 = vmatprep.subr.mxu0 0.0
      %1314 = vmatpush1.msra.mxu0 0.0
      %1315 = vmatprep.subr.mxu0 0.0
      %1316 = vmatpush1.msra.mxu0 0.0
      %1317 = vmatprep.subr.mxu0 0.0
      %1318 = vmatpush1.msra.mxu0 0.0
      %1319 = vmatprep.subr.mxu0 0.0
      %1320 = vmatpush1.msra.mxu0 0.0
      %1321 = vmatprep.subr.mxu0 0.0
      %1322 = vmatpush1.msra.mxu0 0.0
      %1323 = vmatprep.subr.mxu0 0.0
      %1324 = vmatpush1.msra.mxu0 0.0
      %1325 = vmatprep.subr.mxu0 0.0
      %1326 = vmatpush1.msra.mxu0 0.0
      %1327 = vmatprep.subr.mxu0 0.0
      %1328 = vmatpush1.msra.mxu0 0.0
      %1329 = vmatprep.subr.mxu0 0.0
      %1330 = vmatpush1.msra.mxu0 0.0
      %1331 = vmatprep.subr.mxu0 0.0
      %1332 = vmatpush1.msra.mxu0 0.0
      %1333 = vmatprep.subr.mxu0 0.0
      %1334 = vmatpush1.msra.mxu0 0.0
      %1335 = vmatprep.subr.mxu0 0.0
      %1336 = vmatpush1.msra.mxu0 0.0
      %1337 = vmatprep.subr.mxu0 0.0
      %1338 = vmatpush1.msra.mxu0 0.0
      %1339 = vmatprep.subr.mxu0 0.0
      %1340 = vmatpush1.msra.mxu0 0.0
      %1341 = vmatprep.mubr.f32.mxu0 0.0
      %1342 = vmatmul.mubr.f32.gmra.mrb[0].mxu0 %v1180
      %v1343 = vpop.f32.mrb[0].mxu0
      %v1344 = vadd.f32 0.0, %v1343
      %v1345 = vpop.f32.mrb[0].mxu0
      %v1346 = vadd.f32 0.0, %v1345
      %1347 = vdwg.mxu0
      %1348 = vmatprep.subr.mxu0 0.0
      %1349 = vmatpush1.msra.mxu0 %v1231
      %1350 = vmatprep.subr.mxu0 0.0
      %1351 = vmatpush1.msra.mxu0 %v1234
      %1352 = vmatprep.subr.mxu0 0.0
      %1353 = vmatpush1.msra.mxu0 %v1237
      %1354 = vmatprep.subr.mxu0 0.0
      %1355 = vmatpush1.msra.mxu0 %v1240
      %1356 = vmatprep.subr.mxu0 0.0
      %1357 = vmatpush1.msra.mxu0 %v1243
      %1358 = vmatprep.subr.mxu0 0.0
      %1359 = vmatpush1.msra.mxu0 %v1246
      %1360 = vmatprep.subr.mxu0 0.0
      %1361 = vmatpush1.msra.mxu0 %v1249
      %1362 = vmatprep.subr.mxu0 0.0
      %1363 = vmatpush1.msra.mxu0 %v1252
      %1364 = vmatprep.subr.mxu0 0.0
      %1365 = vmatpush1.msra.mxu0 %v1255
      %1366 = vmatprep.subr.mxu0 0.0
      %1367 = vmatpush1.msra.mxu0 %v1258
      %1368 = vmatprep.subr.mxu0 0.0
      %1369 = vmatpush1.msra.mxu0 %v1261
      %1370 = vmatprep.subr.mxu0 0.0
      %1371 = vmatpush1.msra.mxu0 %v1264
      %1372 = vmatprep.subr.mxu0 0.0
      %1373 = vmatpush1.msra.mxu0 %v1267
      %1374 = vmatprep.subr.mxu0 0.0
      %1375 = vmatpush1.msra.mxu0 %v1270
      %1376 = vmatprep.subr.mxu0 0.0
      %1377 = vmatpush1.msra.mxu0 %v1273
      %1378 = vmatprep.subr.mxu0 0.0
      %1379 = vmatpush1.msra.mxu0 %v1276
      %1380 = vmatprep.subr.mxu0 0.0
      %1381 = vmatpush1.msra.mxu0 0.0
      %1382 = vmatprep.subr.mxu0 0.0
      %1383 = vmatpush1.msra.mxu0 0.0
      %1384 = vmatprep.subr.mxu0 0.0
      %1385 = vmatpush1.msra.mxu0 0.0
      %1386 = vmatprep.subr.mxu0 0.0
      %1387 = vmatpush1.msra.mxu0 0.0
      %1388 = vmatprep.subr.mxu0 0.0
      %1389 = vmatpush1.msra.mxu0 0.0
      %1390 = vmatprep.subr.mxu0 0.0
      %1391 = vmatpush1.msra.mxu0 0.0
      %1392 = vmatprep.subr.mxu0 0.0
      %1393 = vmatpush1.msra.mxu0 0.0
      %1394 = vmatprep.subr.mxu0 0.0
      %1395 = vmatpush1.msra.mxu0 0.0
      %1396 = vmatprep.subr.mxu0 0.0
      %1397 = vmatpush1.msra.mxu0 0.0
      %1398 = vmatprep.subr.mxu0 0.0
      %1399 = vmatpush1.msra.mxu0 0.0
      %1400 = vmatprep.subr.mxu0 0.0
      %1401 = vmatpush1.msra.mxu0 0.0
      %1402 = vmatprep.subr.mxu0 0.0
      %1403 = vmatpush1.msra.mxu0 0.0
      %1404 = vmatprep.subr.mxu0 0.0
      %1405 = vmatpush1.msra.mxu0 0.0
      %1406 = vmatprep.subr.mxu0 0.0
      %1407 = vmatpush1.msra.mxu0 0.0
      %1408 = vmatprep.subr.mxu0 0.0
      %1409 = vmatpush1.msra.mxu0 0.0
      %1410 = vmatprep.subr.mxu0 0.0
      %1411 = vmatpush1.msra.mxu0 0.0
      %1412 = vmatprep.mubr.f32.mxu0 0.0
      %1413 = vmatmul.mubr.f32.gmra.mrb[0].mxu0 %v1180
      %v1414 = vpop.f32.mrb[0].mxu0
      %v1415 = vadd.f32 0.0, %v1414
      %v1416 = vpop.f32.mrb[0].mxu0
      %1417 = vdwg.mxu0
      %1418 = vmatprep.subr.mxu0 %v1182
      %1419 = vmatpush1.msra.mxu0 %v1181
      %1420 = vmatprep.subr.mxu0 %v1185
      %1421 = vmatpush1.msra.mxu0 %v1184
      %1422 = vmatprep.subr.mxu0 %v1188
      %1423 = vmatpush1.msra.mxu0 %v1187
      %1424 = vmatprep.subr.mxu0 %v1191
      %1425 = vmatpush1.msra.mxu0 %v1190
      %1426 = vmatprep.subr.mxu0 %v1194
      %1427 = vmatpush1.msra.mxu0 %v1193
      %1428 = vmatprep.subr.mxu0 %v1197
      %1429 = vmatpush1.msra.mxu0 %v1196
      %1430 = vmatprep.subr.mxu0 %v1200
      %1431 = vmatpush1.msra.mxu0 %v1199
      %1432 = vmatprep.subr.mxu0 %v1203
      %1433 = vmatpush1.msra.mxu0 %v1202
      %1434 = vmatprep.subr.mxu0 %v1206
      %1435 = vmatpush1.msra.mxu0 %v1205
      %1436 = vmatprep.subr.mxu0 %v1209
      %1437 = vmatpush1.msra.mxu0 %v1208
      %1438 = vmatprep.subr.mxu0 %v1212
      %1439 = vmatpush1.msra.mxu0 %v1211
      %1440 = vmatprep.subr.mxu0 %v1215
      %1441 = vmatpush1.msra.mxu0 %v1214
      %1442 = vmatprep.subr.mxu0 %v1218
      %1443 = vmatpush1.msra.mxu0 %v1217
      %1444 = vmatprep.subr.mxu0 %v1221
      %1445 = vmatpush1.msra.mxu0 %v1220
      %1446 = vmatprep.subr.mxu0 %v1224
      %1447 = vmatpush1.msra.mxu0 %v1223
      %1448 = vmatprep.subr.mxu0 %v1227
      %1449 = vmatpush1.msra.mxu0 %v1226
      %1450 = vmatprep.subr.mxu0 0.0
      %1451 = vmatpush1.msra.mxu0 0.0
      %1452 = vmatprep.subr.mxu0 0.0
      %1453 = vmatpush1.msra.mxu0 0.0
      %1454 = vmatprep.subr.mxu0 0.0
      %1455 = vmatpush1.msra.mxu0 0.0
      %1456 = vmatprep.subr.mxu0 0.0
      %1457 = vmatpush1.msra.mxu0 0.0
      %1458 = vmatprep.subr.mxu0 0.0
      %1459 = vmatpush1.msra.mxu0 0.0
      %1460 = vmatprep.subr.mxu0 0.0
      %1461 = vmatpush1.msra.mxu0 0.0
      %1462 = vmatprep.subr.mxu0 0.0
      %1463 = vmatpush1.msra.mxu0 0.0
      %1464 = vmatprep.subr.mxu0 0.0
      %1465 = vmatpush1.msra.mxu0 0.0
      %1466 = vmatprep.subr.mxu0 0.0
      %1467 = vmatpush1.msra.mxu0 0.0
      %1468 = vmatprep.subr.mxu0 0.0
      %1469 = vmatpush1.msra.mxu0 0.0
      %1470 = vmatprep.subr.mxu0 0.0
      %1471 = vmatpush1.msra.mxu0 0.0
      %1472 = vmatprep.subr.mxu0 0.0
      %1473 = vmatpush1.msra.mxu0 0.0
      %1474 = vmatprep.subr.mxu0 0.0
      %1475 = vmatpush1.msra.mxu0 0.0
      %1476 = vmatprep.subr.mxu0 0.0
      %1477 = vmatpush1.msra.mxu0 0.0
      %1478 = vmatprep.subr.mxu0 0.0
      %1479 = vmatpush1.msra.mxu0 0.0
      %1480 = vmatprep.subr.mxu0 0.0
      %1481 = vmatpush1.msra.mxu0 0.0
      %1482 = vmatprep.mubr.f32.mxu0 0.0
      %1483 = vmatmul.mubr.f32.gmra.mrb[0].mxu0 %v1178
      %v1484 = vpop.f32.mrb[0].mxu0
      %v1485 = vadd.f32 %v1344, %v1484
      %v1486 = vpop.f32.mrb[0].mxu0
      %v1487 = vadd.f32 %v1346, %v1486
      %1488 = vdwg.mxu0
      %1489 = vmatprep.subr.mxu0 0.0
      %1490 = vmatpush1.msra.mxu0 %v1183
      %1491 = vmatprep.subr.mxu0 0.0
      %1492 = vmatpush1.msra.mxu0 %v1186
      %1493 = vmatprep.subr.mxu0 0.0
      %1494 = vmatpush1.msra.mxu0 %v1189
      %1495 = vmatprep.subr.mxu0 0.0
      %1496 = vmatpush1.msra.mxu0 %v1192
      %1497 = vmatprep.subr.mxu0 0.0
      %1498 = vmatpush1.msra.mxu0 %v1195
      %1499 = vmatprep.subr.mxu0 0.0
      %1500 = vmatpush1.msra.mxu0 %v1198
      %1501 = vmatprep.subr.mxu0 0.0
      %1502 = vmatpush1.msra.mxu0 %v1201
      %1503 = vmatprep.subr.mxu0 0.0
      %1504 = vmatpush1.msra.mxu0 %v1204
      %1505 = vmatprep.subr.mxu0 0.0
      %1506 = vmatpush1.msra.mxu0 %v1207
      %1507 = vmatprep.subr.mxu0 0.0
      %1508 = vmatpush1.msra.mxu0 %v1210
      %1509 = vmatprep.subr.mxu0 0.0
      %1510 = vmatpush1.msra.mxu0 %v1213
      %1511 = vmatprep.subr.mxu0 0.0
      %1512 = vmatpush1.msra.mxu0 %v1216
      %1513 = vmatprep.subr.mxu0 0.0
      %1514 = vmatpush1.msra.mxu0 %v1219
      %1515 = vmatprep.subr.mxu0 0.0
      %1516 = vmatpush1.msra.mxu0 %v1222
      %1517 = vmatprep.subr.mxu0 0.0
      %1518 = vmatpush1.msra.mxu0 %v1225
      %1519 = vmatprep.subr.mxu0 0.0
      %1520 = vmatpush1.msra.mxu0 %v1228
      %1521 = vmatprep.subr.mxu0 0.0
      %1522 = vmatpush1.msra.mxu0 0.0
      %1523 = vmatprep.subr.mxu0 0.0
      %1524 = vmatpush1.msra.mxu0 0.0
      %1525 = vmatprep.subr.mxu0 0.0
      %1526 = vmatpush1.msra.mxu0 0.0
      %1527 = vmatprep.subr.mxu0 0.0
      %1528 = vmatpush1.msra.mxu0 0.0
      %1529 = vmatprep.subr.mxu0 0.0
      %1530 = vmatpush1.msra.mxu0 0.0
      %1531 = vmatprep.subr.mxu0 0.0
      %1532 = vmatpush1.msra.mxu0 0.0
      %1533 = vmatprep.subr.mxu0 0.0
      %1534 = vmatpush1.msra.mxu0 0.0
      %1535 = vmatprep.subr.mxu0 0.0
      %1536 = vmatpush1.msra.mxu0 0.0
      %1537 = vmatprep.subr.mxu0 0.0
      %1538 = vmatpush1.msra.mxu0 0.0
      %1539 = vmatprep.subr.mxu0 0.0
      %1540 = vmatpush1.msra.mxu0 0.0
      %1541 = vmatprep.subr.mxu0 0.0
      %1542 = vmatpush1.msra.mxu0 0.0
      %1543 = vmatprep.subr.mxu0 0.0
      %1544 = vmatpush1.msra.mxu0 0.0
      %1545 = vmatprep.subr.mxu0 0.0
      %1546 = vmatpush1.msra.mxu0 0.0
      %1547 = vmatprep.subr.mxu0 0.0
      %1548 = vmatpush1.msra.mxu0 0.0
      %1549 = vmatprep.subr.mxu0 0.0
      %1550 = vmatpush1.msra.mxu0 0.0
      %1551 = vmatprep.subr.mxu0 0.0
      %1552 = vmatpush1.msra.mxu0 0.0
      %1553 = vmatprep.mubr.f32.mxu0 0.0
      %1554 = vmatmul.mubr.f32.gmra.mrb[0].mxu0 %v1178
      %v1555 = vpop.f32.mrb[0].mxu0
      %v1556 = vadd.f32 %v1415, %v1555
      %v1557 = vpop.f32.mrb[0].mxu0
      %1558 = vdwg.mxu0
      %v1559 = vld [vmem:[%s9] sm:$0x7]
      %v1561 = vlaneseq
      %v1562 = vshrl.u32 %v1561, 7
      %v1563 = vsub.s32 0, %v1562
      %v1564 = vrot.slane %v1559, %v1563
      %v1565 = vlaneseq
      %v1566 = vshrl.u32 %v1565, 7
      %v1567 = vsub.s32 1, %v1566
      %v1568 = vrot.slane %v1559, %v1567
      %v1569 = vlaneseq
      %v1570 = vshrl.u32 %v1569, 7
      %v1571 = vsub.s32 2, %v1570
      %v1572 = vrot.slane %v1559, %v1571
      %v1576 = vadd.f32 %v1485, %v1564
      %v1577 = vadd.f32 %v1487, %v1568
      %v1578 = vadd.f32 %v1556, %v1572
      %v1579 = vld [vmem:[#allocation17] sm:$0xff]
      %v1580 = vld [vmem:[#allocation17 + $0x8] sm:$0xff]
      %v1581 = vld [vmem:[#allocation17 + $0x10] sm:$0xff]
      %v1582 = vld [vmem:[#allocation17 + $0x18] sm:$0xff]
      %v1583 = vld [vmem:[#allocation17 + $0x20] sm:$0xff]
      %v1584 = vld [vmem:[#allocation17 + $0x28] sm:$0xff]
      %v1585 = vld [vmem:[#allocation17 + $0x30] sm:$0xff]
      %v1586 = vld [vmem:[#allocation17 + $0x38] sm:$0xff]
      %v1587 = vld [vmem:[#allocation17 + $0x40] sm:$0xff]
      %v1588 = vld [vmem:[#allocation17 + $0x48] sm:$0xff]
      %v1589 = vld [vmem:[#allocation17 + $0x50] sm:$0xff]
      %v1590 = vld [vmem:[#allocation17 + $0x58] sm:$0xff]
      %v1591 = vld [vmem:[#allocation17 + $0x60] sm:$0xff]
      %v1592 = vld [vmem:[#allocation17 + $0x68] sm:$0xff]
      %v1593 = vld [vmem:[#allocation17 + $0x70] sm:$0xff]
      %v1594 = vld [vmem:[#allocation17 + $0x78] sm:$0xff]
      %v1595 = vld [vmem:[#allocation17 + $0x80] sm:$0xff]
      %v1596 = vld [vmem:[#allocation17 + $0x88] sm:$0xff]
      %v1597 = vld [vmem:[#allocation17 + $0x90] sm:$0xff]
      %v1598 = vld [vmem:[#allocation17 + $0x98] sm:$0xff]
      %v1599 = vld [vmem:[#allocation17 + $0xa0] sm:$0xff]
      %v1600 = vld [vmem:[#allocation17 + $0xa8] sm:$0xff]
      %v1601 = vld [vmem:[#allocation17 + $0xb0] sm:$0xff]
      %v1602 = vld [vmem:[#allocation17 + $0xb8] sm:$0xff]
      %v1603 = vld [vmem:[#allocation17 + $0xc0] sm:$0xff]
      %v1604 = vld [vmem:[#allocation17 + $0xc8] sm:$0xff]
      %v1605 = vld [vmem:[#allocation17 + $0xd0] sm:$0xff]
      %v1606 = vld [vmem:[#allocation17 + $0xd8] sm:$0xff]
      %v1607 = vld [vmem:[#allocation17 + $0xe0] sm:$0xff]
      %v1608 = vld [vmem:[#allocation17 + $0xe8] sm:$0xff]
      %v1609 = vld [vmem:[#allocation17 + $0xf0] sm:$0xff]
      %v1610 = vld [vmem:[#allocation17 + $0xf8] sm:$0xff]
      %v1611 = vld [vmem:[#allocation17 + $0x100] sm:$0xff]
      %v1612 = vld [vmem:[#allocation17 + $0x108] sm:$0xff]
      %v1613 = vld [vmem:[#allocation17 + $0x110] sm:$0xff]
      %v1614 = vld [vmem:[#allocation17 + $0x118] sm:$0xff]
      %v1615 = vld [vmem:[#allocation17 + $0x120] sm:$0xff]
      %v1616 = vld [vmem:[#allocation17 + $0x128] sm:$0xff]
      %v1617 = vld [vmem:[#allocation17 + $0x130] sm:$0xff]
      %v1618 = vld [vmem:[#allocation17 + $0x138] sm:$0xff]
      %v1619 = vld [vmem:[#allocation17 + $0x140] sm:$0xff]
      %v1620 = vld [vmem:[#allocation17 + $0x148] sm:$0xff]
      %v1621 = vld [vmem:[#allocation17 + $0x150] sm:$0xff]
      %v1622 = vld [vmem:[#allocation17 + $0x158] sm:$0xff]
      %v1623 = vld [vmem:[#allocation17 + $0x160] sm:$0xff]
      %v1624 = vld [vmem:[#allocation17 + $0x168] sm:$0xff]
      %v1625 = vld [vmem:[#allocation17 + $0x170] sm:$0xff]
      %v1626 = vld [vmem:[#allocation17 + $0x178] sm:$0xff]
      %v1627 = vld [vmem:[%s10] sm:$0x7]
      %v1629 = vlaneseq
      %v1630 = vshrl.u32 %v1629, 7
      %v1631 = vsub.s32 0, %v1630
      %v1632 = vrot.slane %v1627, %v1631
      %v1633 = vlaneseq
      %v1634 = vshrl.u32 %v1633, 7
      %v1635 = vsub.s32 1, %v1634
      %v1636 = vrot.slane %v1627, %v1635
      %v1637 = vlaneseq
      %v1638 = vshrl.u32 %v1637, 7
      %v1639 = vsub.s32 2, %v1638
      %v1640 = vrot.slane %v1627, %v1639
      %1644 = vmatprep.subr.mxu0 %v1580
      %1645 = vmatpush1.msra.mxu0 %v1579
      %1646 = vmatprep.subr.mxu0 %v1583
      %1647 = vmatpush1.msra.mxu0 %v1582
      %1648 = vmatprep.subr.mxu0 %v1586
      %1649 = vmatpush1.msra.mxu0 %v1585
      %1650 = vmatprep.subr.mxu0 %v1589
      %1651 = vmatpush1.msra.mxu0 %v1588
      %1652 = vmatprep.subr.mxu0 %v1592
      %1653 = vmatpush1.msra.mxu0 %v1591
      %1654 = vmatprep.subr.mxu0 %v1595
      %1655 = vmatpush1.msra.mxu0 %v1594
      %1656 = vmatprep.subr.mxu0 %v1598
      %1657 = vmatpush1.msra.mxu0 %v1597
      %1658 = vmatprep.subr.mxu0 %v1601
      %1659 = vmatpush1.msra.mxu0 %v1600
      %1660 = vmatprep.subr.mxu0 %v1604
      %1661 = vmatpush1.msra.mxu0 %v1603
      %1662 = vmatprep.subr.mxu0 %v1607
      %1663 = vmatpush1.msra.mxu0 %v1606
      %1664 = vmatprep.subr.mxu0 %v1610
      %1665 = vmatpush1.msra.mxu0 %v1609
      %1666 = vmatprep.subr.mxu0 %v1613
      %1667 = vmatpush1.msra.mxu0 %v1612
      %1668 = vmatprep.subr.mxu0 %v1616
      %1669 = vmatpush1.msra.mxu0 %v1615
      %1670 = vmatprep.subr.mxu0 %v1619
      %1671 = vmatpush1.msra.mxu0 %v1618
      %1672 = vmatprep.subr.mxu0 %v1622
      %1673 = vmatpush1.msra.mxu0 %v1621
      %1674 = vmatprep.subr.mxu0 %v1625
      %1675 = vmatpush1.msra.mxu0 %v1624
      %1676 = vmatprep.subr.mxu0 0.0
      %1677 = vmatpush1.msra.mxu0 0.0
      %1678 = vmatprep.subr.mxu0 0.0
      %1679 = vmatpush1.msra.mxu0 0.0
      %1680 = vmatprep.subr.mxu0 0.0
      %1681 = vmatpush1.msra.mxu0 0.0
      %1682 = vmatprep.subr.mxu0 0.0
      %1683 = vmatpush1.msra.mxu0 0.0
      %1684 = vmatprep.subr.mxu0 0.0
      %1685 = vmatpush1.msra.mxu0 0.0
      %1686 = vmatprep.subr.mxu0 0.0
      %1687 = vmatpush1.msra.mxu0 0.0
      %1688 = vmatprep.subr.mxu0 0.0
      %1689 = vmatpush1.msra.mxu0 0.0
      %1690 = vmatprep.subr.mxu0 0.0
      %1691 = vmatpush1.msra.mxu0 0.0
      %1692 = vmatprep.subr.mxu0 0.0
      %1693 = vmatpush1.msra.mxu0 0.0
      %1694 = vmatprep.subr.mxu0 0.0
      %1695 = vmatpush1.msra.mxu0 0.0
      %1696 = vmatprep.subr.mxu0 0.0
      %1697 = vmatpush1.msra.mxu0 0.0
      %1698 = vmatprep.subr.mxu0 0.0
      %1699 = vmatpush1.msra.mxu0 0.0
      %1700 = vmatprep.subr.mxu0 0.0
      %1701 = vmatpush1.msra.mxu0 0.0
      %1702 = vmatprep.subr.mxu0 0.0
      %1703 = vmatpush1.msra.mxu0 0.0
      %1704 = vmatprep.subr.mxu0 0.0
      %1705 = vmatpush1.msra.mxu0 0.0
      %1706 = vmatprep.subr.mxu0 0.0
      %1707 = vmatpush1.msra.mxu0 0.0
      %1708 = vmatprep.mubr.f32.mxu0 0.0
      %1709 = vmatmul.mubr.f32.gmra.mrb[0].mxu0 %v1174
      %v1710 = vpop.f32.mrb[0].mxu0
      %v1711 = vadd.f32 %v1632, %v1710
      %v1712 = vpop.f32.mrb[0].mxu0
      %v1713 = vadd.f32 %v1636, %v1712
      %1714 = vdwg.mxu0
      %1715 = vmatprep.subr.mxu0 0.0
      %1716 = vmatpush1.msra.mxu0 %v1581
      %1717 = vmatprep.subr.mxu0 0.0
      %1718 = vmatpush1.msra.mxu0 %v1584
      %1719 = vmatprep.subr.mxu0 0.0
      %1720 = vmatpush1.msra.mxu0 %v1587
      %1721 = vmatprep.subr.mxu0 0.0
      %1722 = vmatpush1.msra.mxu0 %v1590
      %1723 = vmatprep.subr.mxu0 0.0
      %1724 = vmatpush1.msra.mxu0 %v1593
      %1725 = vmatprep.subr.mxu0 0.0
      %1726 = vmatpush1.msra.mxu0 %v1596
      %1727 = vmatprep.subr.mxu0 0.0
      %1728 = vmatpush1.msra.mxu0 %v1599
      %1729 = vmatprep.subr.mxu0 0.0
      %1730 = vmatpush1.msra.mxu0 %v1602
      %1731 = vmatprep.subr.mxu0 0.0
      %1732 = vmatpush1.msra.mxu0 %v1605
      %1733 = vmatprep.subr.mxu0 0.0
      %1734 = vmatpush1.msra.mxu0 %v1608
      %1735 = vmatprep.subr.mxu0 0.0
      %1736 = vmatpush1.msra.mxu0 %v1611
      %1737 = vmatprep.subr.mxu0 0.0
      %1738 = vmatpush1.msra.mxu0 %v1614
      %1739 = vmatprep.subr.mxu0 0.0
      %1740 = vmatpush1.msra.mxu0 %v1617
      %1741 = vmatprep.subr.mxu0 0.0
      %1742 = vmatpush1.msra.mxu0 %v1620
      %1743 = vmatprep.subr.mxu0 0.0
      %1744 = vmatpush1.msra.mxu0 %v1623
      %1745 = vmatprep.subr.mxu0 0.0
      %1746 = vmatpush1.msra.mxu0 %v1626
      %1747 = vmatprep.subr.mxu0 0.0
      %1748 = vmatpush1.msra.mxu0 0.0
      %1749 = vmatprep.subr.mxu0 0.0
      %1750 = vmatpush1.msra.mxu0 0.0
      %1751 = vmatprep.subr.mxu0 0.0
      %1752 = vmatpush1.msra.mxu0 0.0
      %1753 = vmatprep.subr.mxu0 0.0
      %1754 = vmatpush1.msra.mxu0 0.0
      %1755 = vmatprep.subr.mxu0 0.0
      %1756 = vmatpush1.msra.mxu0 0.0
      %1757 = vmatprep.subr.mxu0 0.0
      %1758 = vmatpush1.msra.mxu0 0.0
      %1759 = vmatprep.subr.mxu0 0.0
      %1760 = vmatpush1.msra.mxu0 0.0
      %1761 = vmatprep.subr.mxu0 0.0
      %1762 = vmatpush1.msra.mxu0 0.0
      %1763 = vmatprep.subr.mxu0 0.0
      %1764 = vmatpush1.msra.mxu0 0.0
      %1765 = vmatprep.subr.mxu0 0.0
      %1766 = vmatpush1.msra.mxu0 0.0
      %1767 = vmatprep.subr.mxu0 0.0
      %1768 = vmatpush1.msra.mxu0 0.0
      %1769 = vmatprep.subr.mxu0 0.0
      %1770 = vmatpush1.msra.mxu0 0.0
      %1771 = vmatprep.subr.mxu0 0.0
      %1772 = vmatpush1.msra.mxu0 0.0
      %1773 = vmatprep.subr.mxu0 0.0
      %1774 = vmatpush1.msra.mxu0 0.0
      %1775 = vmatprep.subr.mxu0 0.0
      %1776 = vmatpush1.msra.mxu0 0.0
      %1777 = vmatprep.subr.mxu0 0.0
      %1778 = vmatpush1.msra.mxu0 0.0
      %1779 = vmatprep.mubr.f32.mxu0 0.0
      %1780 = vmatmul.mubr.f32.gmra.mrb[0].mxu0 %v1174
      %v1781 = vpop.f32.mrb[0].mxu0
      %v1782 = vadd.f32 %v1640, %v1781
      %v1783 = vpop.f32.mrb[0].mxu0
      %1784 = vdwg.mxu0
      %v1785 = vadd.f32 %v1576, %v1711
      %v1786 = vxor.u32 %v1785, 2147483648
      %v1787 = vmul.f32 %v1786, 1.442695
      %v1788 = vpow.pop %v1787
      %v1789 = vadd.f32 %v1788, 1.0
      %v1790 = vrcp.pop %v1789
      %v1791 = vmul.f32 1.0, %v1790
      %v1792 = vadd.f32 %v1577, %v1713
      %v1793 = vxor.u32 %v1792, 2147483648
      %v1794 = vmul.f32 %v1793, 1.442695
      %v1795 = vpow.pop %v1794
      %v1796 = vadd.f32 %v1795, 1.0
      %v1797 = vrcp.pop %v1796
      %v1798 = vmul.f32 1.0, %v1797
      %v1799 = vmul.f32 %v1791, %v1782
      %v1800 = vadd.f32 %v1578, %v1799
      %v1801 = vtanh.pop %v1800
      %v1802 = vsub.f32 1.0, %v1798
      %v1803 = vmul.f32 %v1802, %v1801
      %v1804 = vmul.f32 %v1798, %v1174
      %v1805 = vadd.f32 %v1803, %v1804
      %s1806 = scalar_lea.vmem [#allocation2], %s1176
      %v1807 = vld [vmem:[%s1806] sm:$0x1]
      %s1808 = scalar_lea.vmem [#allocation3], %s1176
      %v1809 = vld [vmem:[%s1808] sm:$0x1]
      %s1810 = scalar_lea.vmem [#allocation14], 384
      %v1811 = vld [vmem:[%s1810] sm:$0xff]
      %v1812 = vld [vmem:[%s1810 + $0x8] sm:$0xff]
      %v1813 = vld [vmem:[%s1810 + $0x10] sm:$0xff]
      %v1814 = vld [vmem:[%s1810 + $0x18] sm:$0xff]
      %v1815 = vld [vmem:[%s1810 + $0x20] sm:$0xff]
      %v1816 = vld [vmem:[%s1810 + $0x28] sm:$0xff]
      %v1817 = vld [vmem:[%s1810 + $0x30] sm:$0xff]
      %v1818 = vld [vmem:[%s1810 + $0x38] sm:$0xff]
      %v1819 = vld [vmem:[%s1810 + $0x40] sm:$0xff]
      %v1820 = vld [vmem:[%s1810 + $0x48] sm:$0xff]
      %v1821 = vld [vmem:[%s1810 + $0x50] sm:$0xff]
      %v1822 = vld [vmem:[%s1810 + $0x58] sm:$0xff]
      %v1823 = vld [vmem:[%s1810 + $0x60] sm:$0xff]
      %v1824 = vld [vmem:[%s1810 + $0x68] sm:$0xff]
      %v1825 = vld [vmem:[%s1810 + $0x70] sm:$0xff]
      %v1826 = vld [vmem:[%s1810 + $0x78] sm:$0xff]
      %v1827 = vld [vmem:[%s1810 + $0x80] sm:$0xff]
      %v1828 = vld [vmem:[%s1810 + $0x88] sm:$0xff]
      %v1829 = vld [vmem:[%s1810 + $0x90] sm:$0xff]
      %v1830 = vld [vmem:[%s1810 + $0x98] sm:$0xff]
      %v1831 = vld [vmem:[%s1810 + $0xa0] sm:$0xff]
      %v1832 = vld [vmem:[%s1810 + $0xa8] sm:$0xff]
      %v1833 = vld [vmem:[%s1810 + $0xb0] sm:$0xff]
      %v1834 = vld [vmem:[%s1810 + $0xb8] sm:$0xff]
      %v1835 = vld [vmem:[%s1810 + $0xc0] sm:$0xff]
      %v1836 = vld [vmem:[%s1810 + $0xc8] sm:$0xff]
      %v1837 = vld [vmem:[%s1810 + $0xd0] sm:$0xff]
      %v1838 = vld [vmem:[%s1810 + $0xd8] sm:$0xff]
      %v1839 = vld [vmem:[%s1810 + $0xe0] sm:$0xff]
      %v1840 = vld [vmem:[%s1810 + $0xe8] sm:$0xff]
      %v1841 = vld [vmem:[%s1810 + $0xf0] sm:$0xff]
      %v1842 = vld [vmem:[%s1810 + $0xf8] sm:$0xff]
      %v1843 = vld [vmem:[%s1810 + $0x100] sm:$0xff]
      %v1844 = vld [vmem:[%s1810 + $0x108] sm:$0xff]
      %v1845 = vld [vmem:[%s1810 + $0x110] sm:$0xff]
      %v1846 = vld [vmem:[%s1810 + $0x118] sm:$0xff]
      %v1847 = vld [vmem:[%s1810 + $0x120] sm:$0xff]
      %v1848 = vld [vmem:[%s1810 + $0x128] sm:$0xff]
      %v1849 = vld [vmem:[%s1810 + $0x130] sm:$0xff]
      %v1850 = vld [vmem:[%s1810 + $0x138] sm:$0xff]
      %v1851 = vld [vmem:[%s1810 + $0x140] sm:$0xff]
      %v1852 = vld [vmem:[%s1810 + $0x148] sm:$0xff]
      %v1853 = vld [vmem:[%s1810 + $0x150] sm:$0xff]
      %v1854 = vld [vmem:[%s1810 + $0x158] sm:$0xff]
      %v1855 = vld [vmem:[%s1810 + $0x160] sm:$0xff]
      %v1856 = vld [vmem:[%s1810 + $0x168] sm:$0xff]
      %v1857 = vld [vmem:[%s1810 + $0x170] sm:$0xff]
      %v1858 = vld [vmem:[%s1810 + $0x178] sm:$0xff]
      %s1859 = scalar_lea.vmem [#allocation16], 384
      %v1860 = vld [vmem:[%s1859] sm:$0xff]
      %v1861 = vld [vmem:[%s1859 + $0x8] sm:$0xff]
      %v1862 = vld [vmem:[%s1859 + $0x10] sm:$0xff]
      %v1863 = vld [vmem:[%s1859 + $0x18] sm:$0xff]
      %v1864 = vld [vmem:[%s1859 + $0x20] sm:$0xff]
      %v1865 = vld [vmem:[%s1859 + $0x28] sm:$0xff]
      %v1866 = vld [vmem:[%s1859 + $0x30] sm:$0xff]
      %v1867 = vld [vmem:[%s1859 + $0x38] sm:$0xff]
      %v1868 = vld [vmem:[%s1859 + $0x40] sm:$0xff]
      %v1869 = vld [vmem:[%s1859 + $0x48] sm:$0xff]
      %v1870 = vld [vmem:[%s1859 + $0x50] sm:$0xff]
      %v1871 = vld [vmem:[%s1859 + $0x58] sm:$0xff]
      %v1872 = vld [vmem:[%s1859 + $0x60] sm:$0xff]
      %v1873 = vld [vmem:[%s1859 + $0x68] sm:$0xff]
      %v1874 = vld [vmem:[%s1859 + $0x70] sm:$0xff]
      %v1875 = vld [vmem:[%s1859 + $0x78] sm:$0xff]
      %v1876 = vld [vmem:[%s1859 + $0x80] sm:$0xff]
      %v1877 = vld [vmem:[%s1859 + $0x88] sm:$0xff]
      %v1878 = vld [vmem:[%s1859 + $0x90] sm:$0xff]
      %v1879 = vld [vmem:[%s1859 + $0x98] sm:$0xff]
      %v1880 = vld [vmem:[%s1859 + $0xa0] sm:$0xff]
      %v1881 = vld [vmem:[%s1859 + $0xa8] sm:$0xff]
      %v1882 = vld [vmem:[%s1859 + $0xb0] sm:$0xff]
      %v1883 = vld [vmem:[%s1859 + $0xb8] sm:$0xff]
      %v1884 = vld [vmem:[%s1859 + $0xc0] sm:$0xff]
      %v1885 = vld [vmem:[%s1859 + $0xc8] sm:$0xff]
      %v1886 = vld [vmem:[%s1859 + $0xd0] sm:$0xff]
      %v1887 = vld [vmem:[%s1859 + $0xd8] sm:$0xff]
      %v1888 = vld [vmem:[%s1859 + $0xe0] sm:$0xff]
      %v1889 = vld [vmem:[%s1859 + $0xe8] sm:$0xff]
      %v1890 = vld [vmem:[%s1859 + $0xf0] sm:$0xff]
      %v1891 = vld [vmem:[%s1859 + $0xf8] sm:$0xff]
      %v1892 = vld [vmem:[%s1859 + $0x100] sm:$0xff]
      %v1893 = vld [vmem:[%s1859 + $0x108] sm:$0xff]
      %v1894 = vld [vmem:[%s1859 + $0x110] sm:$0xff]
      %v1895 = vld [vmem:[%s1859 + $0x118] sm:$0xff]
      %v1896 = vld [vmem:[%s1859 + $0x120] sm:$0xff]
      %v1897 = vld [vmem:[%s1859 + $0x128] sm:$0xff]
      %v1898 = vld [vmem:[%s1859 + $0x130] sm:$0xff]
      %v1899 = vld [vmem:[%s1859 + $0x138] sm:$0xff]
      %v1900 = vld [vmem:[%s1859 + $0x140] sm:$0xff]
      %v1901 = vld [vmem:[%s1859 + $0x148] sm:$0xff]
      %v1902 = vld [vmem:[%s1859 + $0x150] sm:$0xff]
      %v1903 = vld [vmem:[%s1859 + $0x158] sm:$0xff]
      %v1904 = vld [vmem:[%s1859 + $0x160] sm:$0xff]
      %v1905 = vld [vmem:[%s1859 + $0x168] sm:$0xff]
      %v1906 = vld [vmem:[%s1859 + $0x170] sm:$0xff]
      %v1907 = vld [vmem:[%s1859 + $0x178] sm:$0xff]
      %1908 = vmatprep.subr.mxu0 %v1861
      %1909 = vmatpush1.msra.mxu0 %v1860
      %1910 = vmatprep.subr.mxu0 %v1864
      %1911 = vmatpush1.msra.mxu0 %v1863
      %1912 = vmatprep.subr.mxu0 %v1867
      %1913 = vmatpush1.msra.mxu0 %v1866
      %1914 = vmatprep.subr.mxu0 %v1870
      %1915 = vmatpush1.msra.mxu0 %v1869
      %1916 = vmatprep.subr.mxu0 %v1873
      %1917 = vmatpush1.msra.mxu0 %v1872
      %1918 = vmatprep.subr.mxu0 %v1876
      %1919 = vmatpush1.msra.mxu0 %v1875
      %1920 = vmatprep.subr.mxu0 %v1879
      %1921 = vmatpush1.msra.mxu0 %v1878
      %1922 = vmatprep.subr.mxu0 %v1882
      %1923 = vmatpush1.msra.mxu0 %v1881
      %1924 = vmatprep.subr.mxu0 %v1885
      %1925 = vmatpush1.msra.mxu0 %v1884
      %1926 = vmatprep.subr.mxu0 %v1888
      %1927 = vmatpush1.msra.mxu0 %v1887
      %1928 = vmatprep.subr.mxu0 %v1891
      %1929 = vmatpush1.msra.mxu0 %v1890
      %1930 = vmatprep.subr.mxu0 %v1894
      %1931 = vmatpush1.msra.mxu0 %v1893
      %1932 = vmatprep.subr.mxu0 %v1897
      %1933 = vmatpush1.msra.mxu0 %v1896
      %1934 = vmatprep.subr.mxu0 %v1900
      %1935 = vmatpush1.msra.mxu0 %v1899
      %1936 = vmatprep.subr.mxu0 %v1903
      %1937 = vmatpush1.msra.mxu0 %v1902
      %1938 = vmatprep.subr.mxu0 %v1906
      %1939 = vmatpush1.msra.mxu0 %v1905
      %1940 = vmatprep.subr.mxu0 0.0
      %1941 = vmatpush1.msra.mxu0 0.0
      %1942 = vmatprep.subr.mxu0 0.0
      %1943 = vmatpush1.msra.mxu0 0.0
      %1944 = vmatprep.subr.mxu0 0.0
      %1945 = vmatpush1.msra.mxu0 0.0
      %1946 = vmatprep.subr.mxu0 0.0
      %1947 = vmatpush1.msra.mxu0 0.0
      %1948 = vmatprep.subr.mxu0 0.0
      %1949 = vmatpush1.msra.mxu0 0.0
      %1950 = vmatprep.subr.mxu0 0.0
      %1951 = vmatpush1.msra.mxu0 0.0
      %1952 = vmatprep.subr.mxu0 0.0
      %1953 = vmatpush1.msra.mxu0 0.0
      %1954 = vmatprep.subr.mxu0 0.0
      %1955 = vmatpush1.msra.mxu0 0.0
      %1956 = vmatprep.subr.mxu0 0.0
      %1957 = vmatpush1.msra.mxu0 0.0
      %1958 = vmatprep.subr.mxu0 0.0
      %1959 = vmatpush1.msra.mxu0 0.0
      %1960 = vmatprep.subr.mxu0 0.0
      %1961 = vmatpush1.msra.mxu0 0.0
      %1962 = vmatprep.subr.mxu0 0.0
      %1963 = vmatpush1.msra.mxu0 0.0
      %1964 = vmatprep.subr.mxu0 0.0
      %1965 = vmatpush1.msra.mxu0 0.0
      %1966 = vmatprep.subr.mxu0 0.0
      %1967 = vmatpush1.msra.mxu0 0.0
      %1968 = vmatprep.subr.mxu0 0.0
      %1969 = vmatpush1.msra.mxu0 0.0
      %1970 = vmatprep.subr.mxu0 0.0
      %1971 = vmatpush1.msra.mxu0 0.0
      %1972 = vmatprep.mubr.f32.mxu0 0.0
      %1973 = vmatmul.mubr.f32.gmra.mrb[0].mxu0 %v1809
      %v1974 = vpop.f32.mrb[0].mxu0
      %v1975 = vadd.f32 0.0, %v1974
      %v1976 = vpop.f32.mrb[0].mxu0
      %v1977 = vadd.f32 0.0, %v1976
      %1978 = vdwg.mxu0
      %1979 = vmatprep.subr.mxu0 0.0
      %1980 = vmatpush1.msra.mxu0 %v1862
      %1981 = vmatprep.subr.mxu0 0.0
      %1982 = vmatpush1.msra.mxu0 %v1865
      %1983 = vmatprep.subr.mxu0 0.0
      %1984 = vmatpush1.msra.mxu0 %v1868
      %1985 = vmatprep.subr.mxu0 0.0
      %1986 = vmatpush1.msra.mxu0 %v1871
      %1987 = vmatprep.subr.mxu0 0.0
      %1988 = vmatpush1.msra.mxu0 %v1874
      %1989 = vmatprep.subr.mxu0 0.0
      %1990 = vmatpush1.msra.mxu0 %v1877
      %1991 = vmatprep.subr.mxu0 0.0
      %1992 = vmatpush1.msra.mxu0 %v1880
      %1993 = vmatprep.subr.mxu0 0.0
      %1994 = vmatpush1.msra.mxu0 %v1883
      %1995 = vmatprep.subr.mxu0 0.0
      %1996 = vmatpush1.msra.mxu0 %v1886
      %1997 = vmatprep.subr.mxu0 0.0
      %1998 = vmatpush1.msra.mxu0 %v1889
      %1999 = vmatprep.subr.mxu0 0.0
      %2000 = vmatpush1.msra.mxu0 %v1892
      %2001 = vmatprep.subr.mxu0 0.0
      %2002 = vmatpush1.msra.mxu0 %v1895
      %2003 = vmatprep.subr.mxu0 0.0
      %2004 = vmatpush1.msra.mxu0 %v1898
      %2005 = vmatprep.subr.mxu0 0.0
      %2006 = vmatpush1.msra.mxu0 %v1901
      %2007 = vmatprep.subr.mxu0 0.0
      %2008 = vmatpush1.msra.mxu0 %v1904
      %2009 = vmatprep.subr.mxu0 0.0
      %2010 = vmatpush1.msra.mxu0 %v1907
      %2011 = vmatprep.subr.mxu0 0.0
      %2012 = vmatpush1.msra.mxu0 0.0
      %2013 = vmatprep.subr.mxu0 0.0
      %2014 = vmatpush1.msra.mxu0 0.0
      %2015 = vmatprep.subr.mxu0 0.0
      %2016 = vmatpush1.msra.mxu0 0.0
      %2017 = vmatprep.subr.mxu0 0.0
      %2018 = vmatpush1.msra.mxu0 0.0
      %2019 = vmatprep.subr.mxu0 0.0
      %2020 = vmatpush1.msra.mxu0 0.0
      %2021 = vmatprep.subr.mxu0 0.0
      %2022 = vmatpush1.msra.mxu0 0.0
      %2023 = vmatprep.subr.mxu0 0.0
      %2024 = vmatpush1.msra.mxu0 0.0
      %2025 = vmatprep.subr.mxu0 0.0
      %2026 = vmatpush1.msra.mxu0 0.0
      %2027 = vmatprep.subr.mxu0 0.0
      %2028 = vmatpush1.msra.mxu0 0.0
      %2029 = vmatprep.subr.mxu0 0.0
      %2030 = vmatpush1.msra.mxu0 0.0
      %2031 = vmatprep.subr.mxu0 0.0
      %2032 = vmatpush1.msra.mxu0 0.0
      %2033 = vmatprep.subr.mxu0 0.0
      %2034 = vmatpush1.msra.mxu0 0.0
      %2035 = vmatprep.subr.mxu0 0.0
      %2036 = vmatpush1.msra.mxu0 0.0
      %2037 = vmatprep.subr.mxu0 0.0
      %2038 = vmatpush1.msra.mxu0 0.0
      %2039 = vmatprep.subr.mxu0 0.0
      %2040 = vmatpush1.msra.mxu0 0.0
      %2041 = vmatprep.subr.mxu0 0.0
      %2042 = vmatpush1.msra.mxu0 0.0
      %2043 = vmatprep.mubr.f32.mxu0 0.0
      %2044 = vmatmul.mubr.f32.gmra.mrb[0].mxu0 %v1809
      %v2045 = vpop.f32.mrb[0].mxu0
      %v2046 = vadd.f32 0.0, %v2045
      %v2047 = vpop.f32.mrb[0].mxu0
      %2048 = vdwg.mxu0
      %2049 = vmatprep.subr.mxu0 %v1812
      %2050 = vmatpush1.msra.mxu0 %v1811
      %2051 = vmatprep.subr.mxu0 %v1815
      %2052 = vmatpush1.msra.mxu0 %v1814
      %2053 = vmatprep.subr.mxu0 %v1818
      %2054 = vmatpush1.msra.mxu0 %v1817
      %2055 = vmatprep.subr.mxu0 %v1821
      %2056 = vmatpush1.msra.mxu0 %v1820
      %2057 = vmatprep.subr.mxu0 %v1824
      %2058 = vmatpush1.msra.mxu0 %v1823
      %2059 = vmatprep.subr.mxu0 %v1827
      %2060 = vmatpush1.msra.mxu0 %v1826
      %2061 = vmatprep.subr.mxu0 %v1830
      %2062 = vmatpush1.msra.mxu0 %v1829
      %2063 = vmatprep.subr.mxu0 %v1833
      %2064 = vmatpush1.msra.mxu0 %v1832
      %2065 = vmatprep.subr.mxu0 %v1836
      %2066 = vmatpush1.msra.mxu0 %v1835
      %2067 = vmatprep.subr.mxu0 %v1839
      %2068 = vmatpush1.msra.mxu0 %v1838
      %2069 = vmatprep.subr.mxu0 %v1842
      %2070 = vmatpush1.msra.mxu0 %v1841
      %2071 = vmatprep.subr.mxu0 %v1845
      %2072 = vmatpush1.msra.mxu0 %v1844
      %2073 = vmatprep.subr.mxu0 %v1848
      %2074 = vmatpush1.msra.mxu0 %v1847
      %2075 = vmatprep.subr.mxu0 %v1851
      %2076 = vmatpush1.msra.mxu0 %v1850
      %2077 = vmatprep.subr.mxu0 %v1854
      %2078 = vmatpush1.msra.mxu0 %v1853
      %2079 = vmatprep.subr.mxu0 %v1857
      %2080 = vmatpush1.msra.mxu0 %v1856
      %2081 = vmatprep.subr.mxu0 0.0
      %2082 = vmatpush1.msra.mxu0 0.0
      %2083 = vmatprep.subr.mxu0 0.0
      %2084 = vmatpush1.msra.mxu0 0.0
      %2085 = vmatprep.subr.mxu0 0.0
      %2086 = vmatpush1.msra.mxu0 0.0
      %2087 = vmatprep.subr.mxu0 0.0
      %2088 = vmatpush1.msra.mxu0 0.0
      %2089 = vmatprep.subr.mxu0 0.0
      %2090 = vmatpush1.msra.mxu0 0.0
      %2091 = vmatprep.subr.mxu0 0.0
      %2092 = vmatpush1.msra.mxu0 0.0
      %2093 = vmatprep.subr.mxu0 0.0
      %2094 = vmatpush1.msra.mxu0 0.0
      %2095 = vmatprep.subr.mxu0 0.0
      %2096 = vmatpush1.msra.mxu0 0.0
      %2097 = vmatprep.subr.mxu0 0.0
      %2098 = vmatpush1.msra.mxu0 0.0
      %2099 = vmatprep.subr.mxu0 0.0
      %2100 = vmatpush1.msra.mxu0 0.0
      %2101 = vmatprep.subr.mxu0 0.0
      %2102 = vmatpush1.msra.mxu0 0.0
      %2103 = vmatprep.subr.mxu0 0.0
      %2104 = vmatpush1.msra.mxu0 0.0
      %2105 = vmatprep.subr.mxu0 0.0
      %2106 = vmatpush1.msra.mxu0 0.0
      %2107 = vmatprep.subr.mxu0 0.0
      %2108 = vmatpush1.msra.mxu0 0.0
      %2109 = vmatprep.subr.mxu0 0.0
      %2110 = vmatpush1.msra.mxu0 0.0
      %2111 = vmatprep.subr.mxu0 0.0
      %2112 = vmatpush1.msra.mxu0 0.0
      %2113 = vmatprep.mubr.f32.mxu0 0.0
      %2114 = vmatmul.mubr.f32.gmra.mrb[0].mxu0 %v1807
      %v2115 = vpop.f32.mrb[0].mxu0
      %v2116 = vadd.f32 %v1975, %v2115
      %v2117 = vpop.f32.mrb[0].mxu0
      %v2118 = vadd.f32 %v1977, %v2117
      %2119 = vdwg.mxu0
      %2120 = vmatprep.subr.mxu0 0.0
      %2121 = vmatpush1.msra.mxu0 %v1813
      %2122 = vmatprep.subr.mxu0 0.0
      %2123 = vmatpush1.msra.mxu0 %v1816
      %2124 = vmatprep.subr.mxu0 0.0
      %2125 = vmatpush1.msra.mxu0 %v1819
      %2126 = vmatprep.subr.mxu0 0.0
      %2127 = vmatpush1.msra.mxu0 %v1822
      %2128 = vmatprep.subr.mxu0 0.0
      %2129 = vmatpush1.msra.mxu0 %v1825
      %2130 = vmatprep.subr.mxu0 0.0
      %2131 = vmatpush1.msra.mxu0 %v1828
      %2132 = vmatprep.subr.mxu0 0.0
      %2133 = vmatpush1.msra.mxu0 %v1831
      %2134 = vmatprep.subr.mxu0 0.0
      %2135 = vmatpush1.msra.mxu0 %v1834
      %2136 = vmatprep.subr.mxu0 0.0
      %2137 = vmatpush1.msra.mxu0 %v1837
      %2138 = vmatprep.subr.mxu0 0.0
      %2139 = vmatpush1.msra.mxu0 %v1840
      %2140 = vmatprep.subr.mxu0 0.0
      %2141 = vmatpush1.msra.mxu0 %v1843
      %2142 = vmatprep.subr.mxu0 0.0
      %2143 = vmatpush1.msra.mxu0 %v1846
      %2144 = vmatprep.subr.mxu0 0.0
      %2145 = vmatpush1.msra.mxu0 %v1849
      %2146 = vmatprep.subr.mxu0 0.0
      %2147 = vmatpush1.msra.mxu0 %v1852
      %2148 = vmatprep.subr.mxu0 0.0
      %2149 = vmatpush1.msra.mxu0 %v1855
      %2150 = vmatprep.subr.mxu0 0.0
      %2151 = vmatpush1.msra.mxu0 %v1858
      %2152 = vmatprep.subr.mxu0 0.0
      %2153 = vmatpush1.msra.mxu0 0.0
      %2154 = vmatprep.subr.mxu0 0.0
      %2155 = vmatpush1.msra.mxu0 0.0
      %2156 = vmatprep.subr.mxu0 0.0
      %2157 = vmatpush1.msra.mxu0 0.0
      %2158 = vmatprep.subr.mxu0 0.0
      %2159 = vmatpush1.msra.mxu0 0.0
      %2160 = vmatprep.subr.mxu0 0.0
      %2161 = vmatpush1.msra.mxu0 0.0
      %2162 = vmatprep.subr.mxu0 0.0
      %2163 = vmatpush1.msra.mxu0 0.0
      %2164 = vmatprep.subr.mxu0 0.0
      %2165 = vmatpush1.msra.mxu0 0.0
      %2166 = vmatprep.subr.mxu0 0.0
      %2167 = vmatpush1.msra.mxu0 0.0
      %2168 = vmatprep.subr.mxu0 0.0
      %2169 = vmatpush1.msra.mxu0 0.0
      %2170 = vmatprep.subr.mxu0 0.0
      %2171 = vmatpush1.msra.mxu0 0.0
      %2172 = vmatprep.subr.mxu0 0.0
      %2173 = vmatpush1.msra.mxu0 0.0
      %2174 = vmatprep.subr.mxu0 0.0
      %2175 = vmatpush1.msra.mxu0 0.0
      %2176 = vmatprep.subr.mxu0 0.0
      %2177 = vmatpush1.msra.mxu0 0.0
      %2178 = vmatprep.subr.mxu0 0.0
      %2179 = vmatpush1.msra.mxu0 0.0
      %2180 = vmatprep.subr.mxu0 0.0
      %2181 = vmatpush1.msra.mxu0 0.0
      %2182 = vmatprep.subr.mxu0 0.0
      %2183 = vmatpush1.msra.mxu0 0.0
      %2184 = vmatprep.mubr.f32.mxu0 0.0
      %2185 = vmatmul.mubr.f32.gmra.mrb[0].mxu0 %v1807
      %v2186 = vpop.f32.mrb[0].mxu0
      %v2187 = vadd.f32 %v2046, %v2186
      %v2188 = vpop.f32.mrb[0].mxu0
      %2189 = vdwg.mxu0
      %s2190 = scalar_lea.vmem %s9, 3
      %v2191 = vld [vmem:[%s2190] sm:$0x7]
      %v2193 = vlaneseq
      %v2194 = vshrl.u32 %v2193, 7
      %v2195 = vsub.s32 0, %v2194
      %v2196 = vrot.slane %v2191, %v2195
      %v2197 = vlaneseq
      %v2198 = vshrl.u32 %v2197, 7
      %v2199 = vsub.s32 1, %v2198
      %v2200 = vrot.slane %v2191, %v2199
      %v2201 = vlaneseq
      %v2202 = vshrl.u32 %v2201, 7
      %v2203 = vsub.s32 2, %v2202
      %v2204 = vrot.slane %v2191, %v2203
      %v2208 = vadd.f32 %v2116, %v2196
      %v2209 = vadd.f32 %v2118, %v2200
      %v2210 = vadd.f32 %v2187, %v2204
      %s2211 = scalar_lea.vmem [#allocation17], 384
      %v2212 = vld [vmem:[%s2211] sm:$0xff]
      %v2213 = vld [vmem:[%s2211 + $0x8] sm:$0xff]
      %v2214 = vld [vmem:[%s2211 + $0x10] sm:$0xff]
      %v2215 = vld [vmem:[%s2211 + $0x18] sm:$0xff]
      %v2216 = vld [vmem:[%s2211 + $0x20] sm:$0xff]
      %v2217 = vld [vmem:[%s2211 + $0x28] sm:$0xff]
      %v2218 = vld [vmem:[%s2211 + $0x30] sm:$0xff]
      %v2219 = vld [vmem:[%s2211 + $0x38] sm:$0xff]
      %v2220 = vld [vmem:[%s2211 + $0x40] sm:$0xff]
      %v2221 = vld [vmem:[%s2211 + $0x48] sm:$0xff]
      %v2222 = vld [vmem:[%s2211 + $0x50] sm:$0xff]
      %v2223 = vld [vmem:[%s2211 + $0x58] sm:$0xff]
      %v2224 = vld [vmem:[%s2211 + $0x60] sm:$0xff]
      %v2225 = vld [vmem:[%s2211 + $0x68] sm:$0xff]
      %v2226 = vld [vmem:[%s2211 + $0x70] sm:$0xff]
      %v2227 = vld [vmem:[%s2211 + $0x78] sm:$0xff]
      %v2228 = vld [vmem:[%s2211 + $0x80] sm:$0xff]
      %v2229 = vld [vmem:[%s2211 + $0x88] sm:$0xff]
      %v2230 = vld [vmem:[%s2211 + $0x90] sm:$0xff]
      %v2231 = vld [vmem:[%s2211 + $0x98] sm:$0xff]
      %v2232 = vld [vmem:[%s2211 + $0xa0] sm:$0xff]
      %v2233 = vld [vmem:[%s2211 + $0xa8] sm:$0xff]
      %v2234 = vld [vmem:[%s2211 + $0xb0] sm:$0xff]
      %v2235 = vld [vmem:[%s2211 + $0xb8] sm:$0xff]
      %v2236 = vld [vmem:[%s2211 + $0xc0] sm:$0xff]
      %v2237 = vld [vmem:[%s2211 + $0xc8] sm:$0xff]
      %v2238 = vld [vmem:[%s2211 + $0xd0] sm:$0xff]
      %v2239 = vld [vmem:[%s2211 + $0xd8] sm:$0xff]
      %v2240 = vld [vmem:[%s2211 + $0xe0] sm:$0xff]
      %v2241 = vld [vmem:[%s2211 + $0xe8] sm:$0xff]
      %v2242 = vld [vmem:[%s2211 + $0xf0] sm:$0xff]
      %v2243 = vld [vmem:[%s2211 + $0xf8] sm:$0xff]
      %v2244 = vld [vmem:[%s2211 + $0x100] sm:$0xff]
      %v2245 = vld [vmem:[%s2211 + $0x108] sm:$0xff]
      %v2246 = vld [vmem:[%s2211 + $0x110] sm:$0xff]
      %v2247 = vld [vmem:[%s2211 + $0x118] sm:$0xff]
      %v2248 = vld [vmem:[%s2211 + $0x120] sm:$0xff]
      %v2249 = vld [vmem:[%s2211 + $0x128] sm:$0xff]
      %v2250 = vld [vmem:[%s2211 + $0x130] sm:$0xff]
      %v2251 = vld [vmem:[%s2211 + $0x138] sm:$0xff]
      %v2252 = vld [vmem:[%s2211 + $0x140] sm:$0xff]
      %v2253 = vld [vmem:[%s2211 + $0x148] sm:$0xff]
      %v2254 = vld [vmem:[%s2211 + $0x150] sm:$0xff]
      %v2255 = vld [vmem:[%s2211 + $0x158] sm:$0xff]
      %v2256 = vld [vmem:[%s2211 + $0x160] sm:$0xff]
      %v2257 = vld [vmem:[%s2211 + $0x168] sm:$0xff]
      %v2258 = vld [vmem:[%s2211 + $0x170] sm:$0xff]
      %v2259 = vld [vmem:[%s2211 + $0x178] sm:$0xff]
      %s2260 = scalar_lea.vmem %s10, 3
      %v2261 = vld [vmem:[%s2260] sm:$0x7]
      %v2263 = vlaneseq
      %v2264 = vshrl.u32 %v2263, 7
      %v2265 = vsub.s32 0, %v2264
      %v2266 = vrot.slane %v2261, %v2265
      %v2267 = vlaneseq
      %v2268 = vshrl.u32 %v2267, 7
      %v2269 = vsub.s32 1, %v2268
      %v2270 = vrot.slane %v2261, %v2269
      %v2271 = vlaneseq
      %v2272 = vshrl.u32 %v2271, 7
      %v2273 = vsub.s32 2, %v2272
      %v2274 = vrot.slane %v2261, %v2273
      %2278 = vmatprep.subr.mxu0 %v2213
      %2279 = vmatpush1.msra.mxu0 %v2212
      %2280 = vmatprep.subr.mxu0 %v2216
      %2281 = vmatpush1.msra.mxu0 %v2215
      %2282 = vmatprep.subr.mxu0 %v2219
      %2283 = vmatpush1.msra.mxu0 %v2218
      %2284 = vmatprep.subr.mxu0 %v2222
      %2285 = vmatpush1.msra.mxu0 %v2221
      %2286 = vmatprep.subr.mxu0 %v2225
      %2287 = vmatpush1.msra.mxu0 %v2224
      %2288 = vmatprep.subr.mxu0 %v2228
      %2289 = vmatpush1.msra.mxu0 %v2227
      %2290 = vmatprep.subr.mxu0 %v2231
      %2291 = vmatpush1.msra.mxu0 %v2230
      %2292 = vmatprep.subr.mxu0 %v2234
      %2293 = vmatpush1.msra.mxu0 %v2233
      %2294 = vmatprep.subr.mxu0 %v2237
      %2295 = vmatpush1.msra.mxu0 %v2236
      %2296 = vmatprep.subr.mxu0 %v2240
      %2297 = vmatpush1.msra.mxu0 %v2239
      %2298 = vmatprep.subr.mxu0 %v2243
      %2299 = vmatpush1.msra.mxu0 %v2242
      %2300 = vmatprep.subr.mxu0 %v2246
      %2301 = vmatpush1.msra.mxu0 %v2245
      %2302 = vmatprep.subr.mxu0 %v2249
      %2303 = vmatpush1.msra.mxu0 %v2248
      %2304 = vmatprep.subr.mxu0 %v2252
      %2305 = vmatpush1.msra.mxu0 %v2251
      %2306 = vmatprep.subr.mxu0 %v2255
      %2307 = vmatpush1.msra.mxu0 %v2254
      %2308 = vmatprep.subr.mxu0 %v2258
      %2309 = vmatpush1.msra.mxu0 %v2257
      %2310 = vmatprep.subr.mxu0 0.0
      %2311 = vmatpush1.msra.mxu0 0.0
      %2312 = vmatprep.subr.mxu0 0.0
      %2313 = vmatpush1.msra.mxu0 0.0
      %2314 = vmatprep.subr.mxu0 0.0
      %2315 = vmatpush1.msra.mxu0 0.0
      %2316 = vmatprep.subr.mxu0 0.0
      %2317 = vmatpush1.msra.mxu0 0.0
      %2318 = vmatprep.subr.mxu0 0.0
      %2319 = vmatpush1.msra.mxu0 0.0
      %2320 = vmatprep.subr.mxu0 0.0
      %2321 = vmatpush1.msra.mxu0 0.0
      %2322 = vmatprep.subr.mxu0 0.0
      %2323 = vmatpush1.msra.mxu0 0.0
      %2324 = vmatprep.subr.mxu0 0.0
      %2325 = vmatpush1.msra.mxu0 0.0
      %2326 = vmatprep.subr.mxu0 0.0
      %2327 = vmatpush1.msra.mxu0 0.0
      %2328 = vmatprep.subr.mxu0 0.0
      %2329 = vmatpush1.msra.mxu0 0.0
      %2330 = vmatprep.subr.mxu0 0.0
      %2331 = vmatpush1.msra.mxu0 0.0
      %2332 = vmatprep.subr.mxu0 0.0
      %2333 = vmatpush1.msra.mxu0 0.0
      %2334 = vmatprep.subr.mxu0 0.0
      %2335 = vmatpush1.msra.mxu0 0.0
      %2336 = vmatprep.subr.mxu0 0.0
      %2337 = vmatpush1.msra.mxu0 0.0
      %2338 = vmatprep.subr.mxu0 0.0
      %2339 = vmatpush1.msra.mxu0 0.0
      %2340 = vmatprep.subr.mxu0 0.0
      %2341 = vmatpush1.msra.mxu0 0.0
      %2342 = vmatprep.mubr.f32.mxu0 0.0
      %2343 = vmatmul.mubr.f32.gmra.mrb[0].mxu0 %v1175
      %v2344 = vpop.f32.mrb[0].mxu0
      %v2345 = vadd.f32 %v2266, %v2344
      %v2346 = vpop.f32.mrb[0].mxu0
      %v2347 = vadd.f32 %v2270, %v2346
      %2348 = vdwg.mxu0
      %2349 = vmatprep.subr.mxu0 0.0
      %2350 = vmatpush1.msra.mxu0 %v2214
      %2351 = vmatprep.subr.mxu0 0.0
      %2352 = vmatpush1.msra.mxu0 %v2217
      %2353 = vmatprep.subr.mxu0 0.0
      %2354 = vmatpush1.msra.mxu0 %v2220
      %2355 = vmatprep.subr.mxu0 0.0
      %2356 = vmatpush1.msra.mxu0 %v2223
      %2357 = vmatprep.subr.mxu0 0.0
      %2358 = vmatpush1.msra.mxu0 %v2226
      %2359 = vmatprep.subr.mxu0 0.0
      %2360 = vmatpush1.msra.mxu0 %v2229
      %2361 = vmatprep.subr.mxu0 0.0
      %2362 = vmatpush1.msra.mxu0 %v2232
      %2363 = vmatprep.subr.mxu0 0.0
      %2364 = vmatpush1.msra.mxu0 %v2235
      %2365 = vmatprep.subr.mxu0 0.0
      %2366 = vmatpush1.msra.mxu0 %v2238
      %2367 = vmatprep.subr.mxu0 0.0
      %2368 = vmatpush1.msra.mxu0 %v2241
      %2369 = vmatprep.subr.mxu0 0.0
      %2370 = vmatpush1.msra.mxu0 %v2244
      %2371 = vmatprep.subr.mxu0 0.0
      %2372 = vmatpush1.msra.mxu0 %v2247
      %2373 = vmatprep.subr.mxu0 0.0
      %2374 = vmatpush1.msra.mxu0 %v2250
      %2375 = vmatprep.subr.mxu0 0.0
      %2376 = vmatpush1.msra.mxu0 %v2253
      %2377 = vmatprep.subr.mxu0 0.0
      %2378 = vmatpush1.msra.mxu0 %v2256
      %2379 = vmatprep.subr.mxu0 0.0
      %2380 = vmatpush1.msra.mxu0 %v2259
      %2381 = vmatprep.subr.mxu0 0.0
      %2382 = vmatpush1.msra.mxu0 0.0
      %2383 = vmatprep.subr.mxu0 0.0
      %2384 = vmatpush1.msra.mxu0 0.0
      %2385 = vmatprep.subr.mxu0 0.0
      %2386 = vmatpush1.msra.mxu0 0.0
      %2387 = vmatprep.subr.mxu0 0.0
      %2388 = vmatpush1.msra.mxu0 0.0
      %2389 = vmatprep.subr.mxu0 0.0
      %2390 = vmatpush1.msra.mxu0 0.0
      %2391 = vmatprep.subr.mxu0 0.0
      %2392 = vmatpush1.msra.mxu0 0.0
      %2393 = vmatprep.subr.mxu0 0.0
      %2394 = vmatpush1.msra.mxu0 0.0
      %2395 = vmatprep.subr.mxu0 0.0
      %2396 = vmatpush1.msra.mxu0 0.0
      %2397 = vmatprep.subr.mxu0 0.0
      %2398 = vmatpush1.msra.mxu0 0.0
      %2399 = vmatprep.subr.mxu0 0.0
      %2400 = vmatpush1.msra.mxu0 0.0
      %2401 = vmatprep.subr.mxu0 0.0
      %2402 = vmatpush1.msra.mxu0 0.0
      %2403 = vmatprep.subr.mxu0 0.0
      %2404 = vmatpush1.msra.mxu0 0.0
      %2405 = vmatprep.subr.mxu0 0.0
      %2406 = vmatpush1.msra.mxu0 0.0
      %2407 = vmatprep.subr.mxu0 0.0
      %2408 = vmatpush1.msra.mxu0 0.0
      %2409 = vmatprep.subr.mxu0 0.0
      %2410 = vmatpush1.msra.mxu0 0.0
      %2411 = vmatprep.subr.mxu0 0.0
      %2412 = vmatpush1.msra.mxu0 0.0
      %2413 = vmatprep.mubr.f32.mxu0 0.0
      %2414 = vmatmul.mubr.f32.gmra.mrb[0].mxu0 %v1175
      %v2415 = vpop.f32.mrb[0].mxu0
      %v2416 = vadd.f32 %v2274, %v2415
      %v2417 = vpop.f32.mrb[0].mxu0
      %2418 = vdwg.mxu0
      %v2419 = vadd.f32 %v2208, %v2345
      %v2420 = vxor.u32 %v2419, 2147483648
      %v2421 = vmul.f32 %v2420, 1.442695
      %v2422 = vpow.pop %v2421
      %v2423 = vadd.f32 %v2422, 1.0
      %v2424 = vrcp.pop %v2423
      %v2425 = vmul.f32 1.0, %v2424
      %v2426 = vadd.f32 %v2209, %v2347
      %v2427 = vxor.u32 %v2426, 2147483648
      %v2428 = vmul.f32 %v2427, 1.442695
      %v2429 = vpow.pop %v2428
      %v2430 = vadd.f32 %v2429, 1.0
      %v2431 = vrcp.pop %v2430
      %v2432 = vmul.f32 1.0, %v2431
      %v2433 = vmul.f32 %v2425, %v2416
      %v2434 = vadd.f32 %v2210, %v2433
      %v2435 = vtanh.pop %v2434
      %v2436 = vsub.f32 1.0, %v2432
      %v2437 = vmul.f32 %v2436, %v2435
      %v2438 = vmul.f32 %v2432, %v1175
      %v2439 = vadd.f32 %v2437, %v2438
      %s2440 = scalar_lea.vmem [#allocation4], %s1169
      %2441 = vst [vmem:[%s2440] sm:$0x1] %v1805
      %s2442 = scalar_lea.vmem [#allocation5], %s1176
      %2443 = vst [vmem:[%s2442] sm:$0x1] %v2439
    $region157: #{greedy_decode.1} parent=1 // loop_footer
      %s1173 = sadd.s32 1, %s1169
    $region158: #{greedy_decode.1} parent=1 // loop_footer_branch
      %1168 = sbr.rel target = $region154
    $region159: #{greedy_decode.1} parent=1 // loop_exit
      _
    %v2444 = vld [vmem:[#allocation4] sm:$0xff]
    %v2445 = vld [vmem:[#allocation5] sm:$0xff]
    %v2446 = vadd.f32 %v2444, %v2445
    loop: start=0, step=1, limit=5
    $region160: #{greedy_decode.1} parent=1 // loop_pre_header
      _
    $region161: #{greedy_decode.1} parent=1 // loop_header
      %s2448 = sphi 0, %s2452
      %p2449 = scmp.ge.s32.totalorder %s2448, 5
      %v2453 = vphi %v285, %v2890
      %v2454 = vphi %v286, %v3327
      %s2455 = sphi 1, %s3820
    $region162: #{greedy_decode.1} parent=1 // loop_header_branch
      %2451 = sbr.rel (%p2449) target = $region166
    $region163: #{greedy_decode.1} parent=1 // loop_body
      %s2456 = scalar_lea.vmem [#allocation10], %s2455
      %v2457 = vld [vmem:[%s2456] sm:$0x1]
      %v2458 = vld [vmem:[#allocation19] sm:$0xff]
      %v2459 = vld [vmem:[#allocation19 + $0x8] sm:$0xff]
      %v2460 = vld [vmem:[#allocation19 + $0x10] sm:$0xff]
      %v2461 = vld [vmem:[#allocation19 + $0x18] sm:$0xff]
      %v2462 = vld [vmem:[#allocation19 + $0x20] sm:$0xff]
      %v2463 = vld [vmem:[#allocation19 + $0x28] sm:$0xff]
      %v2464 = vld [vmem:[#allocation19 + $0x30] sm:$0xff]
      %v2465 = vld [vmem:[#allocation19 + $0x38] sm:$0xff]
      %v2466 = vld [vmem:[#allocation19 + $0x40] sm:$0xff]
      %v2467 = vld [vmem:[#allocation19 + $0x48] sm:$0xff]
      %v2468 = vld [vmem:[#allocation19 + $0x50] sm:$0xff]
      %v2469 = vld [vmem:[#allocation19 + $0x58] sm:$0xff]
      %v2470 = vld [vmem:[#allocation19 + $0x60] sm:$0xff]
      %v2471 = vld [vmem:[#allocation19 + $0x68] sm:$0xff]
      %v2472 = vld [vmem:[#allocation19 + $0x70] sm:$0xff]
      %v2473 = vld [vmem:[#allocation19 + $0x78] sm:$0xff]
      %v2474 = vld [vmem:[#allocation19 + $0x80] sm:$0xff]
      %v2475 = vld [vmem:[#allocation19 + $0x88] sm:$0xff]
      %v2476 = vld [vmem:[#allocation19 + $0x90] sm:$0xff]
      %v2477 = vld [vmem:[#allocation19 + $0x98] sm:$0xff]
      %v2478 = vld [vmem:[#allocation19 + $0xa0] sm:$0xff]
      %v2479 = vld [vmem:[#allocation19 + $0xa8] sm:$0xff]
      %v2480 = vld [vmem:[#allocation19 + $0xb0] sm:$0xff]
      %v2481 = vld [vmem:[#allocation19 + $0xb8] sm:$0xff]
      %v2482 = vld [vmem:[#allocation19 + $0xc0] sm:$0xff]
      %v2483 = vld [vmem:[#allocation19 + $0xc8] sm:$0xff]
      %v2484 = vld [vmem:[#allocation19 + $0xd0] sm:$0xff]
      %v2485 = vld [vmem:[#allocation19 + $0xd8] sm:$0xff]
      %v2486 = vld [vmem:[#allocation19 + $0xe0] sm:$0xff]
      %v2487 = vld [vmem:[#allocation19 + $0xe8] sm:$0xff]
      %v2488 = vld [vmem:[#allocation19 + $0xf0] sm:$0xff]
      %v2489 = vld [vmem:[#allocation19 + $0xf8] sm:$0xff]
      %v2490 = vld [vmem:[#allocation19 + $0x100] sm:$0xff]
      %v2491 = vld [vmem:[#allocation19 + $0x108] sm:$0xff]
      %v2492 = vld [vmem:[#allocation19 + $0x110] sm:$0xff]
      %v2493 = vld [vmem:[#allocation19 + $0x118] sm:$0xff]
      %v2494 = vld [vmem:[#allocation19 + $0x120] sm:$0xff]
      %v2495 = vld [vmem:[#allocation19 + $0x128] sm:$0xff]
      %v2496 = vld [vmem:[#allocation19 + $0x130] sm:$0xff]
      %v2497 = vld [vmem:[#allocation19 + $0x138] sm:$0xff]
      %v2498 = vld [vmem:[#allocation19 + $0x140] sm:$0xff]
      %v2499 = vld [vmem:[#allocation19 + $0x148] sm:$0xff]
      %v2500 = vld [vmem:[#allocation19 + $0x150] sm:$0xff]
      %v2501 = vld [vmem:[#allocation19 + $0x158] sm:$0xff]
      %v2502 = vld [vmem:[#allocation19 + $0x160] sm:$0xff]
      %v2503 = vld [vmem:[#allocation19 + $0x168] sm:$0xff]
      %v2504 = vld [vmem:[#allocation19 + $0x170] sm:$0xff]
      %v2505 = vld [vmem:[#allocation19 + $0x178] sm:$0xff]
      %v2506 = vld [vmem:[#allocation20] sm:$0xff]
      %v2507 = vld [vmem:[#allocation20 + $0x8] sm:$0xff]
      %v2508 = vld [vmem:[#allocation20 + $0x10] sm:$0xff]
      %v2509 = vld [vmem:[#allocation20 + $0x18] sm:$0xff]
      %v2510 = vld [vmem:[#allocation20 + $0x20] sm:$0xff]
      %v2511 = vld [vmem:[#allocation20 + $0x28] sm:$0xff]
      %v2512 = vld [vmem:[#allocation20 + $0x30] sm:$0xff]
      %v2513 = vld [vmem:[#allocation20 + $0x38] sm:$0xff]
      %v2514 = vld [vmem:[#allocation20 + $0x40] sm:$0xff]
      %v2515 = vld [vmem:[#allocation20 + $0x48] sm:$0xff]
      %v2516 = vld [vmem:[#allocation20 + $0x50] sm:$0xff]
      %v2517 = vld [vmem:[#allocation20 + $0x58] sm:$0xff]
      %v2518 = vld [vmem:[#allocation20 + $0x60] sm:$0xff]
      %v2519 = vld [vmem:[#allocation20 + $0x68] sm:$0xff]
      %v2520 = vld [vmem:[#allocation20 + $0x70] sm:$0xff]
      %v2521 = vld [vmem:[#allocation20 + $0x78] sm:$0xff]
      %v2522 = vld [vmem:[#allocation20 + $0x80] sm:$0xff]
      %v2523 = vld [vmem:[#allocation20 + $0x88] sm:$0xff]
      %v2524 = vld [vmem:[#allocation20 + $0x90] sm:$0xff]
      %v2525 = vld [vmem:[#allocation20 + $0x98] sm:$0xff]
      %v2526 = vld [vmem:[#allocation20 + $0xa0] sm:$0xff]
      %v2527 = vld [vmem:[#allocation20 + $0xa8] sm:$0xff]
      %v2528 = vld [vmem:[#allocation20 + $0xb0] sm:$0xff]
      %v2529 = vld [vmem:[#allocation20 + $0xb8] sm:$0xff]
      %v2530 = vld [vmem:[#allocation20 + $0xc0] sm:$0xff]
      %v2531 = vld [vmem:[#allocation20 + $0xc8] sm:$0xff]
      %v2532 = vld [vmem:[#allocation20 + $0xd0] sm:$0xff]
      %v2533 = vld [vmem:[#allocation20 + $0xd8] sm:$0xff]
      %v2534 = vld [vmem:[#allocation20 + $0xe0] sm:$0xff]
      %v2535 = vld [vmem:[#allocation20 + $0xe8] sm:$0xff]
      %v2536 = vld [vmem:[#allocation20 + $0xf0] sm:$0xff]
      %v2537 = vld [vmem:[#allocation20 + $0xf8] sm:$0xff]
      %v2538 = vld [vmem:[#allocation20 + $0x100] sm:$0xff]
      %v2539 = vld [vmem:[#allocation20 + $0x108] sm:$0xff]
      %v2540 = vld [vmem:[#allocation20 + $0x110] sm:$0xff]
      %v2541 = vld [vmem:[#allocation20 + $0x118] sm:$0xff]
      %v2542 = vld [vmem:[#allocation20 + $0x120] sm:$0xff]
      %v2543 = vld [vmem:[#allocation20 + $0x128] sm:$0xff]
      %v2544 = vld [vmem:[#allocation20 + $0x130] sm:$0xff]
      %v2545 = vld [vmem:[#allocation20 + $0x138] sm:$0xff]
      %v2546 = vld [vmem:[#allocation20 + $0x140] sm:$0xff]
      %v2547 = vld [vmem:[#allocation20 + $0x148] sm:$0xff]
      %v2548 = vld [vmem:[#allocation20 + $0x150] sm:$0xff]
      %v2549 = vld [vmem:[#allocation20 + $0x158] sm:$0xff]
      %v2550 = vld [vmem:[#allocation20 + $0x160] sm:$0xff]
      %v2551 = vld [vmem:[#allocation20 + $0x168] sm:$0xff]
      %v2552 = vld [vmem:[#allocation20 + $0x170] sm:$0xff]
      %v2553 = vld [vmem:[#allocation20 + $0x178] sm:$0xff]
      %v2554 = vld [vmem:[#allocation22] sm:$0x7]
      %v2555 = vld [vmem:[#allocation23] sm:$0x7]
      %v2557 = vlaneseq
      %v2558 = vshrl.u32 %v2557, 7
      %v2559 = vsub.s32 0, %v2558
      %v2560 = vrot.slane %v2554, %v2559
      %v2561 = vlaneseq
      %v2562 = vshrl.u32 %v2561, 7
      %v2563 = vsub.s32 1, %v2562
      %v2564 = vrot.slane %v2554, %v2563
      %v2565 = vlaneseq
      %v2566 = vshrl.u32 %v2565, 7
      %v2567 = vsub.s32 2, %v2566
      %v2568 = vrot.slane %v2554, %v2567
      %2572 = vmatprep.subr.mxu0 %v2459
      %2573 = vmatpush1.msra.mxu0 %v2458
      %2574 = vmatprep.subr.mxu0 %v2462
      %2575 = vmatpush1.msra.mxu0 %v2461
      %2576 = vmatprep.subr.mxu0 %v2465
      %2577 = vmatpush1.msra.mxu0 %v2464
      %2578 = vmatprep.subr.mxu0 %v2468
      %2579 = vmatpush1.msra.mxu0 %v2467
      %2580 = vmatprep.subr.mxu0 %v2471
      %2581 = vmatpush1.msra.mxu0 %v2470
      %2582 = vmatprep.subr.mxu0 %v2474
      %2583 = vmatpush1.msra.mxu0 %v2473
      %2584 = vmatprep.subr.mxu0 %v2477
      %2585 = vmatpush1.msra.mxu0 %v2476
      %2586 = vmatprep.subr.mxu0 %v2480
      %2587 = vmatpush1.msra.mxu0 %v2479
      %2588 = vmatprep.subr.mxu0 %v2483
      %2589 = vmatpush1.msra.mxu0 %v2482
      %2590 = vmatprep.subr.mxu0 %v2486
      %2591 = vmatpush1.msra.mxu0 %v2485
      %2592 = vmatprep.subr.mxu0 %v2489
      %2593 = vmatpush1.msra.mxu0 %v2488
      %2594 = vmatprep.subr.mxu0 %v2492
      %2595 = vmatpush1.msra.mxu0 %v2491
      %2596 = vmatprep.subr.mxu0 %v2495
      %2597 = vmatpush1.msra.mxu0 %v2494
      %2598 = vmatprep.subr.mxu0 %v2498
      %2599 = vmatpush1.msra.mxu0 %v2497
      %2600 = vmatprep.subr.mxu0 %v2501
      %2601 = vmatpush1.msra.mxu0 %v2500
      %2602 = vmatprep.subr.mxu0 %v2504
      %2603 = vmatpush1.msra.mxu0 %v2503
      %2604 = vmatprep.subr.mxu0 0.0
      %2605 = vmatpush1.msra.mxu0 0.0
      %2606 = vmatprep.subr.mxu0 0.0
      %2607 = vmatpush1.msra.mxu0 0.0
      %2608 = vmatprep.subr.mxu0 0.0
      %2609 = vmatpush1.msra.mxu0 0.0
      %2610 = vmatprep.subr.mxu0 0.0
      %2611 = vmatpush1.msra.mxu0 0.0
      %2612 = vmatprep.subr.mxu0 0.0
      %2613 = vmatpush1.msra.mxu0 0.0
      %2614 = vmatprep.subr.mxu0 0.0
      %2615 = vmatpush1.msra.mxu0 0.0
      %2616 = vmatprep.subr.mxu0 0.0
      %2617 = vmatpush1.msra.mxu0 0.0
      %2618 = vmatprep.subr.mxu0 0.0
      %2619 = vmatpush1.msra.mxu0 0.0
      %2620 = vmatprep.subr.mxu0 0.0
      %2621 = vmatpush1.msra.mxu0 0.0
      %2622 = vmatprep.subr.mxu0 0.0
      %2623 = vmatpush1.msra.mxu0 0.0
      %2624 = vmatprep.subr.mxu0 0.0
      %2625 = vmatpush1.msra.mxu0 0.0
      %2626 = vmatprep.subr.mxu0 0.0
      %2627 = vmatpush1.msra.mxu0 0.0
      %2628 = vmatprep.subr.mxu0 0.0
      %2629 = vmatpush1.msra.mxu0 0.0
      %2630 = vmatprep.subr.mxu0 0.0
      %2631 = vmatpush1.msra.mxu0 0.0
      %2632 = vmatprep.subr.mxu0 0.0
      %2633 = vmatpush1.msra.mxu0 0.0
      %2634 = vmatprep.subr.mxu0 0.0
      %2635 = vmatpush1.msra.mxu0 0.0
      %2636 = vmatprep.mubr.f32.mxu0 0.0
      %2637 = vmatmul.mubr.f32.gmra.mrb[0].mxu0 %v2457
      %v2638 = vpop.f32.mrb[0].mxu0
      %v2639 = vadd.f32 %v2560, %v2638
      %v2640 = vpop.f32.mrb[0].mxu0
      %v2641 = vadd.f32 %v2564, %v2640
      %2642 = vdwg.mxu0
      %2643 = vmatprep.subr.mxu0 0.0
      %2644 = vmatpush1.msra.mxu0 %v2460
      %2645 = vmatprep.subr.mxu0 0.0
      %2646 = vmatpush1.msra.mxu0 %v2463
      %2647 = vmatprep.subr.mxu0 0.0
      %2648 = vmatpush1.msra.mxu0 %v2466
      %2649 = vmatprep.subr.mxu0 0.0
      %2650 = vmatpush1.msra.mxu0 %v2469
      %2651 = vmatprep.subr.mxu0 0.0
      %2652 = vmatpush1.msra.mxu0 %v2472
      %2653 = vmatprep.subr.mxu0 0.0
      %2654 = vmatpush1.msra.mxu0 %v2475
      %2655 = vmatprep.subr.mxu0 0.0
      %2656 = vmatpush1.msra.mxu0 %v2478
      %2657 = vmatprep.subr.mxu0 0.0
      %2658 = vmatpush1.msra.mxu0 %v2481
      %2659 = vmatprep.subr.mxu0 0.0
      %2660 = vmatpush1.msra.mxu0 %v2484
      %2661 = vmatprep.subr.mxu0 0.0
      %2662 = vmatpush1.msra.mxu0 %v2487
      %2663 = vmatprep.subr.mxu0 0.0
      %2664 = vmatpush1.msra.mxu0 %v2490
      %2665 = vmatprep.subr.mxu0 0.0
      %2666 = vmatpush1.msra.mxu0 %v2493
      %2667 = vmatprep.subr.mxu0 0.0
      %2668 = vmatpush1.msra.mxu0 %v2496
      %2669 = vmatprep.subr.mxu0 0.0
      %2670 = vmatpush1.msra.mxu0 %v2499
      %2671 = vmatprep.subr.mxu0 0.0
      %2672 = vmatpush1.msra.mxu0 %v2502
      %2673 = vmatprep.subr.mxu0 0.0
      %2674 = vmatpush1.msra.mxu0 %v2505
      %2675 = vmatprep.subr.mxu0 0.0
      %2676 = vmatpush1.msra.mxu0 0.0
      %2677 = vmatprep.subr.mxu0 0.0
      %2678 = vmatpush1.msra.mxu0 0.0
      %2679 = vmatprep.subr.mxu0 0.0
      %2680 = vmatpush1.msra.mxu0 0.0
      %2681 = vmatprep.subr.mxu0 0.0
      %2682 = vmatpush1.msra.mxu0 0.0
      %2683 = vmatprep.subr.mxu0 0.0
      %2684 = vmatpush1.msra.mxu0 0.0
      %2685 = vmatprep.subr.mxu0 0.0
      %2686 = vmatpush1.msra.mxu0 0.0
      %2687 = vmatprep.subr.mxu0 0.0
      %2688 = vmatpush1.msra.mxu0 0.0
      %2689 = vmatprep.subr.mxu0 0.0
      %2690 = vmatpush1.msra.mxu0 0.0
      %2691 = vmatprep.subr.mxu0 0.0
      %2692 = vmatpush1.msra.mxu0 0.0
      %2693 = vmatprep.subr.mxu0 0.0
      %2694 = vmatpush1.msra.mxu0 0.0
      %2695 = vmatprep.subr.mxu0 0.0
      %2696 = vmatpush1.msra.mxu0 0.0
      %2697 = vmatprep.subr.mxu0 0.0
      %2698 = vmatpush1.msra.mxu0 0.0
      %2699 = vmatprep.subr.mxu0 0.0
      %2700 = vmatpush1.msra.mxu0 0.0
      %2701 = vmatprep.subr.mxu0 0.0
      %2702 = vmatpush1.msra.mxu0 0.0
      %2703 = vmatprep.subr.mxu0 0.0
      %2704 = vmatpush1.msra.mxu0 0.0
      %2705 = vmatprep.subr.mxu0 0.0
      %2706 = vmatpush1.msra.mxu0 0.0
      %2707 = vmatprep.mubr.f32.mxu0 0.0
      %2708 = vmatmul.mubr.f32.gmra.mrb[0].mxu0 %v2457
      %v2709 = vpop.f32.mrb[0].mxu0
      %v2710 = vadd.f32 %v2568, %v2709
      %v2711 = vpop.f32.mrb[0].mxu0
      %2712 = vdwg.mxu0
      %v2714 = vlaneseq
      %v2715 = vshrl.u32 %v2714, 7
      %v2716 = vsub.s32 0, %v2715
      %v2717 = vrot.slane %v2555, %v2716
      %v2718 = vlaneseq
      %v2719 = vshrl.u32 %v2718, 7
      %v2720 = vsub.s32 1, %v2719
      %v2721 = vrot.slane %v2555, %v2720
      %v2722 = vlaneseq
      %v2723 = vshrl.u32 %v2722, 7
      %v2724 = vsub.s32 2, %v2723
      %v2725 = vrot.slane %v2555, %v2724
      %2729 = vmatprep.subr.mxu0 %v2507
      %2730 = vmatpush1.msra.mxu0 %v2506
      %2731 = vmatprep.subr.mxu0 %v2510
      %2732 = vmatpush1.msra.mxu0 %v2509
      %2733 = vmatprep.subr.mxu0 %v2513
      %2734 = vmatpush1.msra.mxu0 %v2512
      %2735 = vmatprep.subr.mxu0 %v2516
      %2736 = vmatpush1.msra.mxu0 %v2515
      %2737 = vmatprep.subr.mxu0 %v2519
      %2738 = vmatpush1.msra.mxu0 %v2518
      %2739 = vmatprep.subr.mxu0 %v2522
      %2740 = vmatpush1.msra.mxu0 %v2521
      %2741 = vmatprep.subr.mxu0 %v2525
      %2742 = vmatpush1.msra.mxu0 %v2524
      %2743 = vmatprep.subr.mxu0 %v2528
      %2744 = vmatpush1.msra.mxu0 %v2527
      %2745 = vmatprep.subr.mxu0 %v2531
      %2746 = vmatpush1.msra.mxu0 %v2530
      %2747 = vmatprep.subr.mxu0 %v2534
      %2748 = vmatpush1.msra.mxu0 %v2533
      %2749 = vmatprep.subr.mxu0 %v2537
      %2750 = vmatpush1.msra.mxu0 %v2536
      %2751 = vmatprep.subr.mxu0 %v2540
      %2752 = vmatpush1.msra.mxu0 %v2539
      %2753 = vmatprep.subr.mxu0 %v2543
      %2754 = vmatpush1.msra.mxu0 %v2542
      %2755 = vmatprep.subr.mxu0 %v2546
      %2756 = vmatpush1.msra.mxu0 %v2545
      %2757 = vmatprep.subr.mxu0 %v2549
      %2758 = vmatpush1.msra.mxu0 %v2548
      %2759 = vmatprep.subr.mxu0 %v2552
      %2760 = vmatpush1.msra.mxu0 %v2551
      %2761 = vmatprep.subr.mxu0 0.0
      %2762 = vmatpush1.msra.mxu0 0.0
      %2763 = vmatprep.subr.mxu0 0.0
      %2764 = vmatpush1.msra.mxu0 0.0
      %2765 = vmatprep.subr.mxu0 0.0
      %2766 = vmatpush1.msra.mxu0 0.0
      %2767 = vmatprep.subr.mxu0 0.0
      %2768 = vmatpush1.msra.mxu0 0.0
      %2769 = vmatprep.subr.mxu0 0.0
      %2770 = vmatpush1.msra.mxu0 0.0
      %2771 = vmatprep.subr.mxu0 0.0
      %2772 = vmatpush1.msra.mxu0 0.0
      %2773 = vmatprep.subr.mxu0 0.0
      %2774 = vmatpush1.msra.mxu0 0.0
      %2775 = vmatprep.subr.mxu0 0.0
      %2776 = vmatpush1.msra.mxu0 0.0
      %2777 = vmatprep.subr.mxu0 0.0
      %2778 = vmatpush1.msra.mxu0 0.0
      %2779 = vmatprep.subr.mxu0 0.0
      %2780 = vmatpush1.msra.mxu0 0.0
      %2781 = vmatprep.subr.mxu0 0.0
      %2782 = vmatpush1.msra.mxu0 0.0
      %2783 = vmatprep.subr.mxu0 0.0
      %2784 = vmatpush1.msra.mxu0 0.0
      %2785 = vmatprep.subr.mxu0 0.0
      %2786 = vmatpush1.msra.mxu0 0.0
      %2787 = vmatprep.subr.mxu0 0.0
      %2788 = vmatpush1.msra.mxu0 0.0
      %2789 = vmatprep.subr.mxu0 0.0
      %2790 = vmatpush1.msra.mxu0 0.0
      %2791 = vmatprep.subr.mxu0 0.0
      %2792 = vmatpush1.msra.mxu0 0.0
      %2793 = vmatprep.mubr.f32.mxu0 0.0
      %2794 = vmatmul.mubr.f32.gmra.mrb[0].mxu0 %v2453
      %v2795 = vpop.f32.mrb[0].mxu0
      %v2796 = vadd.f32 %v2717, %v2795
      %v2797 = vpop.f32.mrb[0].mxu0
      %v2798 = vadd.f32 %v2721, %v2797
      %2799 = vdwg.mxu0
      %2800 = vmatprep.subr.mxu0 0.0
      %2801 = vmatpush1.msra.mxu0 %v2508
      %2802 = vmatprep.subr.mxu0 0.0
      %2803 = vmatpush1.msra.mxu0 %v2511
      %2804 = vmatprep.subr.mxu0 0.0
      %2805 = vmatpush1.msra.mxu0 %v2514
      %2806 = vmatprep.subr.mxu0 0.0
      %2807 = vmatpush1.msra.mxu0 %v2517
      %2808 = vmatprep.subr.mxu0 0.0
      %2809 = vmatpush1.msra.mxu0 %v2520
      %2810 = vmatprep.subr.mxu0 0.0
      %2811 = vmatpush1.msra.mxu0 %v2523
      %2812 = vmatprep.subr.mxu0 0.0
      %2813 = vmatpush1.msra.mxu0 %v2526
      %2814 = vmatprep.subr.mxu0 0.0
      %2815 = vmatpush1.msra.mxu0 %v2529
      %2816 = vmatprep.subr.mxu0 0.0
      %2817 = vmatpush1.msra.mxu0 %v2532
      %2818 = vmatprep.subr.mxu0 0.0
      %2819 = vmatpush1.msra.mxu0 %v2535
      %2820 = vmatprep.subr.mxu0 0.0
      %2821 = vmatpush1.msra.mxu0 %v2538
      %2822 = vmatprep.subr.mxu0 0.0
      %2823 = vmatpush1.msra.mxu0 %v2541
      %2824 = vmatprep.subr.mxu0 0.0
      %2825 = vmatpush1.msra.mxu0 %v2544
      %2826 = vmatprep.subr.mxu0 0.0
      %2827 = vmatpush1.msra.mxu0 %v2547
      %2828 = vmatprep.subr.mxu0 0.0
      %2829 = vmatpush1.msra.mxu0 %v2550
      %2830 = vmatprep.subr.mxu0 0.0
      %2831 = vmatpush1.msra.mxu0 %v2553
      %2832 = vmatprep.subr.mxu0 0.0
      %2833 = vmatpush1.msra.mxu0 0.0
      %2834 = vmatprep.subr.mxu0 0.0
      %2835 = vmatpush1.msra.mxu0 0.0
      %2836 = vmatprep.subr.mxu0 0.0
      %2837 = vmatpush1.msra.mxu0 0.0
      %2838 = vmatprep.subr.mxu0 0.0
      %2839 = vmatpush1.msra.mxu0 0.0
      %2840 = vmatprep.subr.mxu0 0.0
      %2841 = vmatpush1.msra.mxu0 0.0
      %2842 = vmatprep.subr.mxu0 0.0
      %2843 = vmatpush1.msra.mxu0 0.0
      %2844 = vmatprep.subr.mxu0 0.0
      %2845 = vmatpush1.msra.mxu0 0.0
      %2846 = vmatprep.subr.mxu0 0.0
      %2847 = vmatpush1.msra.mxu0 0.0
      %2848 = vmatprep.subr.mxu0 0.0
      %2849 = vmatpush1.msra.mxu0 0.0
      %2850 = vmatprep.subr.mxu0 0.0
      %2851 = vmatpush1.msra.mxu0 0.0
      %2852 = vmatprep.subr.mxu0 0.0
      %2853 = vmatpush1.msra.mxu0 0.0
      %2854 = vmatprep.subr.mxu0 0.0
      %2855 = vmatpush1.msra.mxu0 0.0
      %2856 = vmatprep.subr.mxu0 0.0
      %2857 = vmatpush1.msra.mxu0 0.0
      %2858 = vmatprep.subr.mxu0 0.0
      %2859 = vmatpush1.msra.mxu0 0.0
      %2860 = vmatprep.subr.mxu0 0.0
      %2861 = vmatpush1.msra.mxu0 0.0
      %2862 = vmatprep.subr.mxu0 0.0
      %2863 = vmatpush1.msra.mxu0 0.0
      %2864 = vmatprep.mubr.f32.mxu0 0.0
      %2865 = vmatmul.mubr.f32.gmra.mrb[0].mxu0 %v2453
      %v2866 = vpop.f32.mrb[0].mxu0
      %v2867 = vadd.f32 %v2725, %v2866
      %v2868 = vpop.f32.mrb[0].mxu0
      %2869 = vdwg.mxu0
      %v2870 = vadd.f32 %v2639, %v2796
      %v2871 = vxor.u32 %v2870, 2147483648
      %v2872 = vmul.f32 %v2871, 1.442695
      %v2873 = vpow.pop %v2872
      %v2874 = vadd.f32 %v2873, 1.0
      %v2875 = vrcp.pop %v2874
      %v2876 = vmul.f32 1.0, %v2875
      %v2877 = vadd.f32 %v2641, %v2798
      %v2878 = vxor.u32 %v2877, 2147483648
      %v2879 = vmul.f32 %v2878, 1.442695
      %v2880 = vpow.pop %v2879
      %v2881 = vadd.f32 %v2880, 1.0
      %v2882 = vrcp.pop %v2881
      %v2883 = vmul.f32 1.0, %v2882
      %v2884 = vmul.f32 %v2876, %v2867
      %v2885 = vadd.f32 %v2710, %v2884
      %v2886 = vtanh.pop %v2885
      %v2887 = vsub.f32 1.0, %v2883
      %v2888 = vmul.f32 %v2887, %v2886
      %v2889 = vmul.f32 %v2883, %v2453
      %v2890 = vadd.f32 %v2888, %v2889
      %s2891 = scalar_lea.vmem [#allocation19], 384
      %v2892 = vld [vmem:[%s2891] sm:$0xff]
      %v2893 = vld [vmem:[%s2891 + $0x8] sm:$0xff]
      %v2894 = vld [vmem:[%s2891 + $0x10] sm:$0xff]
      %v2895 = vld [vmem:[%s2891 + $0x18] sm:$0xff]
      %v2896 = vld [vmem:[%s2891 + $0x20] sm:$0xff]
      %v2897 = vld [vmem:[%s2891 + $0x28] sm:$0xff]
      %v2898 = vld [vmem:[%s2891 + $0x30] sm:$0xff]
      %v2899 = vld [vmem:[%s2891 + $0x38] sm:$0xff]
      %v2900 = vld [vmem:[%s2891 + $0x40] sm:$0xff]
      %v2901 = vld [vmem:[%s2891 + $0x48] sm:$0xff]
      %v2902 = vld [vmem:[%s2891 + $0x50] sm:$0xff]
      %v2903 = vld [vmem:[%s2891 + $0x58] sm:$0xff]
      %v2904 = vld [vmem:[%s2891 + $0x60] sm:$0xff]
      %v2905 = vld [vmem:[%s2891 + $0x68] sm:$0xff]
      %v2906 = vld [vmem:[%s2891 + $0x70] sm:$0xff]
      %v2907 = vld [vmem:[%s2891 + $0x78] sm:$0xff]
      %v2908 = vld [vmem:[%s2891 + $0x80] sm:$0xff]
      %v2909 = vld [vmem:[%s2891 + $0x88] sm:$0xff]
      %v2910 = vld [vmem:[%s2891 + $0x90] sm:$0xff]
      %v2911 = vld [vmem:[%s2891 + $0x98] sm:$0xff]
      %v2912 = vld [vmem:[%s2891 + $0xa0] sm:$0xff]
      %v2913 = vld [vmem:[%s2891 + $0xa8] sm:$0xff]
      %v2914 = vld [vmem:[%s2891 + $0xb0] sm:$0xff]
      %v2915 = vld [vmem:[%s2891 + $0xb8] sm:$0xff]
      %v2916 = vld [vmem:[%s2891 + $0xc0] sm:$0xff]
      %v2917 = vld [vmem:[%s2891 + $0xc8] sm:$0xff]
      %v2918 = vld [vmem:[%s2891 + $0xd0] sm:$0xff]
      %v2919 = vld [vmem:[%s2891 + $0xd8] sm:$0xff]
      %v2920 = vld [vmem:[%s2891 + $0xe0] sm:$0xff]
      %v2921 = vld [vmem:[%s2891 + $0xe8] sm:$0xff]
      %v2922 = vld [vmem:[%s2891 + $0xf0] sm:$0xff]
      %v2923 = vld [vmem:[%s2891 + $0xf8] sm:$0xff]
      %v2924 = vld [vmem:[%s2891 + $0x100] sm:$0xff]
      %v2925 = vld [vmem:[%s2891 + $0x108] sm:$0xff]
      %v2926 = vld [vmem:[%s2891 + $0x110] sm:$0xff]
      %v2927 = vld [vmem:[%s2891 + $0x118] sm:$0xff]
      %v2928 = vld [vmem:[%s2891 + $0x120] sm:$0xff]
      %v2929 = vld [vmem:[%s2891 + $0x128] sm:$0xff]
      %v2930 = vld [vmem:[%s2891 + $0x130] sm:$0xff]
      %v2931 = vld [vmem:[%s2891 + $0x138] sm:$0xff]
      %v2932 = vld [vmem:[%s2891 + $0x140] sm:$0xff]
      %v2933 = vld [vmem:[%s2891 + $0x148] sm:$0xff]
      %v2934 = vld [vmem:[%s2891 + $0x150] sm:$0xff]
      %v2935 = vld [vmem:[%s2891 + $0x158] sm:$0xff]
      %v2936 = vld [vmem:[%s2891 + $0x160] sm:$0xff]
      %v2937 = vld [vmem:[%s2891 + $0x168] sm:$0xff]
      %v2938 = vld [vmem:[%s2891 + $0x170] sm:$0xff]
      %v2939 = vld [vmem:[%s2891 + $0x178] sm:$0xff]
      %s2940 = scalar_lea.vmem [#allocation20], 384
      %v2941 = vld [vmem:[%s2940] sm:$0xff]
      %v2942 = vld [vmem:[%s2940 + $0x8] sm:$0xff]
      %v2943 = vld [vmem:[%s2940 + $0x10] sm:$0xff]
      %v2944 = vld [vmem:[%s2940 + $0x18] sm:$0xff]
      %v2945 = vld [vmem:[%s2940 + $0x20] sm:$0xff]
      %v2946 = vld [vmem:[%s2940 + $0x28] sm:$0xff]
      %v2947 = vld [vmem:[%s2940 + $0x30] sm:$0xff]
      %v2948 = vld [vmem:[%s2940 + $0x38] sm:$0xff]
      %v2949 = vld [vmem:[%s2940 + $0x40] sm:$0xff]
      %v2950 = vld [vmem:[%s2940 + $0x48] sm:$0xff]
      %v2951 = vld [vmem:[%s2940 + $0x50] sm:$0xff]
      %v2952 = vld [vmem:[%s2940 + $0x58] sm:$0xff]
      %v2953 = vld [vmem:[%s2940 + $0x60] sm:$0xff]
      %v2954 = vld [vmem:[%s2940 + $0x68] sm:$0xff]
      %v2955 = vld [vmem:[%s2940 + $0x70] sm:$0xff]
      %v2956 = vld [vmem:[%s2940 + $0x78] sm:$0xff]
      %v2957 = vld [vmem:[%s2940 + $0x80] sm:$0xff]
      %v2958 = vld [vmem:[%s2940 + $0x88] sm:$0xff]
      %v2959 = vld [vmem:[%s2940 + $0x90] sm:$0xff]
      %v2960 = vld [vmem:[%s2940 + $0x98] sm:$0xff]
      %v2961 = vld [vmem:[%s2940 + $0xa0] sm:$0xff]
      %v2962 = vld [vmem:[%s2940 + $0xa8] sm:$0xff]
      %v2963 = vld [vmem:[%s2940 + $0xb0] sm:$0xff]
      %v2964 = vld [vmem:[%s2940 + $0xb8] sm:$0xff]
      %v2965 = vld [vmem:[%s2940 + $0xc0] sm:$0xff]
      %v2966 = vld [vmem:[%s2940 + $0xc8] sm:$0xff]
      %v2967 = vld [vmem:[%s2940 + $0xd0] sm:$0xff]
      %v2968 = vld [vmem:[%s2940 + $0xd8] sm:$0xff]
      %v2969 = vld [vmem:[%s2940 + $0xe0] sm:$0xff]
      %v2970 = vld [vmem:[%s2940 + $0xe8] sm:$0xff]
      %v2971 = vld [vmem:[%s2940 + $0xf0] sm:$0xff]
      %v2972 = vld [vmem:[%s2940 + $0xf8] sm:$0xff]
      %v2973 = vld [vmem:[%s2940 + $0x100] sm:$0xff]
      %v2974 = vld [vmem:[%s2940 + $0x108] sm:$0xff]
      %v2975 = vld [vmem:[%s2940 + $0x110] sm:$0xff]
      %v2976 = vld [vmem:[%s2940 + $0x118] sm:$0xff]
      %v2977 = vld [vmem:[%s2940 + $0x120] sm:$0xff]
      %v2978 = vld [vmem:[%s2940 + $0x128] sm:$0xff]
      %v2979 = vld [vmem:[%s2940 + $0x130] sm:$0xff]
      %v2980 = vld [vmem:[%s2940 + $0x138] sm:$0xff]
      %v2981 = vld [vmem:[%s2940 + $0x140] sm:$0xff]
      %v2982 = vld [vmem:[%s2940 + $0x148] sm:$0xff]
      %v2983 = vld [vmem:[%s2940 + $0x150] sm:$0xff]
      %v2984 = vld [vmem:[%s2940 + $0x158] sm:$0xff]
      %v2985 = vld [vmem:[%s2940 + $0x160] sm:$0xff]
      %v2986 = vld [vmem:[%s2940 + $0x168] sm:$0xff]
      %v2987 = vld [vmem:[%s2940 + $0x170] sm:$0xff]
      %v2988 = vld [vmem:[%s2940 + $0x178] sm:$0xff]
      %s2989 = scalar_lea.vmem [#allocation22], 3
      %v2990 = vld [vmem:[%s2989] sm:$0x7]
      %s2991 = scalar_lea.vmem [#allocation23], 3
      %v2992 = vld [vmem:[%s2991] sm:$0x7]
      %v2994 = vlaneseq
      %v2995 = vshrl.u32 %v2994, 7
      %v2996 = vsub.s32 0, %v2995
      %v2997 = vrot.slane %v2990, %v2996
      %v2998 = vlaneseq
      %v2999 = vshrl.u32 %v2998, 7
      %v3000 = vsub.s32 1, %v2999
      %v3001 = vrot.slane %v2990, %v3000
      %v3002 = vlaneseq
      %v3003 = vshrl.u32 %v3002, 7
      %v3004 = vsub.s32 2, %v3003
      %v3005 = vrot.slane %v2990, %v3004
      %3009 = vmatprep.subr.mxu0 %v2893
      %3010 = vmatpush1.msra.mxu0 %v2892
      %3011 = vmatprep.subr.mxu0 %v2896
      %3012 = vmatpush1.msra.mxu0 %v2895
      %3013 = vmatprep.subr.mxu0 %v2899
      %3014 = vmatpush1.msra.mxu0 %v2898
      %3015 = vmatprep.subr.mxu0 %v2902
      %3016 = vmatpush1.msra.mxu0 %v2901
      %3017 = vmatprep.subr.mxu0 %v2905
      %3018 = vmatpush1.msra.mxu0 %v2904
      %3019 = vmatprep.subr.mxu0 %v2908
      %3020 = vmatpush1.msra.mxu0 %v2907
      %3021 = vmatprep.subr.mxu0 %v2911
      %3022 = vmatpush1.msra.mxu0 %v2910
      %3023 = vmatprep.subr.mxu0 %v2914
      %3024 = vmatpush1.msra.mxu0 %v2913
      %3025 = vmatprep.subr.mxu0 %v2917
      %3026 = vmatpush1.msra.mxu0 %v2916
      %3027 = vmatprep.subr.mxu0 %v2920
      %3028 = vmatpush1.msra.mxu0 %v2919
      %3029 = vmatprep.subr.mxu0 %v2923
      %3030 = vmatpush1.msra.mxu0 %v2922
      %3031 = vmatprep.subr.mxu0 %v2926
      %3032 = vmatpush1.msra.mxu0 %v2925
      %3033 = vmatprep.subr.mxu0 %v2929
      %3034 = vmatpush1.msra.mxu0 %v2928
      %3035 = vmatprep.subr.mxu0 %v2932
      %3036 = vmatpush1.msra.mxu0 %v2931
      %3037 = vmatprep.subr.mxu0 %v2935
      %3038 = vmatpush1.msra.mxu0 %v2934
      %3039 = vmatprep.subr.mxu0 %v2938
      %3040 = vmatpush1.msra.mxu0 %v2937
      %3041 = vmatprep.subr.mxu0 0.0
      %3042 = vmatpush1.msra.mxu0 0.0
      %3043 = vmatprep.subr.mxu0 0.0
      %3044 = vmatpush1.msra.mxu0 0.0
      %3045 = vmatprep.subr.mxu0 0.0
      %3046 = vmatpush1.msra.mxu0 0.0
      %3047 = vmatprep.subr.mxu0 0.0
      %3048 = vmatpush1.msra.mxu0 0.0
      %3049 = vmatprep.subr.mxu0 0.0
      %3050 = vmatpush1.msra.mxu0 0.0
      %3051 = vmatprep.subr.mxu0 0.0
      %3052 = vmatpush1.msra.mxu0 0.0
      %3053 = vmatprep.subr.mxu0 0.0
      %3054 = vmatpush1.msra.mxu0 0.0
      %3055 = vmatprep.subr.mxu0 0.0
      %3056 = vmatpush1.msra.mxu0 0.0
      %3057 = vmatprep.subr.mxu0 0.0
      %3058 = vmatpush1.msra.mxu0 0.0
      %3059 = vmatprep.subr.mxu0 0.0
      %3060 = vmatpush1.msra.mxu0 0.0
      %3061 = vmatprep.subr.mxu0 0.0
      %3062 = vmatpush1.msra.mxu0 0.0
      %3063 = vmatprep.subr.mxu0 0.0
      %3064 = vmatpush1.msra.mxu0 0.0
      %3065 = vmatprep.subr.mxu0 0.0
      %3066 = vmatpush1.msra.mxu0 0.0
      %3067 = vmatprep.subr.mxu0 0.0
      %3068 = vmatpush1.msra.mxu0 0.0
      %3069 = vmatprep.subr.mxu0 0.0
      %3070 = vmatpush1.msra.mxu0 0.0
      %3071 = vmatprep.subr.mxu0 0.0
      %3072 = vmatpush1.msra.mxu0 0.0
      %3073 = vmatprep.mubr.f32.mxu0 0.0
      %3074 = vmatmul.mubr.f32.gmra.mrb[0].mxu0 %v2890
      %v3075 = vpop.f32.mrb[0].mxu0
      %v3076 = vadd.f32 %v2997, %v3075
      %v3077 = vpop.f32.mrb[0].mxu0
      %v3078 = vadd.f32 %v3001, %v3077
      %3079 = vdwg.mxu0
      %3080 = vmatprep.subr.mxu0 0.0
      %3081 = vmatpush1.msra.mxu0 %v2894
      %3082 = vmatprep.subr.mxu0 0.0
      %3083 = vmatpush1.msra.mxu0 %v2897
      %3084 = vmatprep.subr.mxu0 0.0
      %3085 = vmatpush1.msra.mxu0 %v2900
      %3086 = vmatprep.subr.mxu0 0.0
      %3087 = vmatpush1.msra.mxu0 %v2903
      %3088 = vmatprep.subr.mxu0 0.0
      %3089 = vmatpush1.msra.mxu0 %v2906
      %3090 = vmatprep.subr.mxu0 0.0
      %3091 = vmatpush1.msra.mxu0 %v2909
      %3092 = vmatprep.subr.mxu0 0.0
      %3093 = vmatpush1.msra.mxu0 %v2912
      %3094 = vmatprep.subr.mxu0 0.0
      %3095 = vmatpush1.msra.mxu0 %v2915
      %3096 = vmatprep.subr.mxu0 0.0
      %3097 = vmatpush1.msra.mxu0 %v2918
      %3098 = vmatprep.subr.mxu0 0.0
      %3099 = vmatpush1.msra.mxu0 %v2921
      %3100 = vmatprep.subr.mxu0 0.0
      %3101 = vmatpush1.msra.mxu0 %v2924
      %3102 = vmatprep.subr.mxu0 0.0
      %3103 = vmatpush1.msra.mxu0 %v2927
      %3104 = vmatprep.subr.mxu0 0.0
      %3105 = vmatpush1.msra.mxu0 %v2930
      %3106 = vmatprep.subr.mxu0 0.0
      %3107 = vmatpush1.msra.mxu0 %v2933
      %3108 = vmatprep.subr.mxu0 0.0
      %3109 = vmatpush1.msra.mxu0 %v2936
      %3110 = vmatprep.subr.mxu0 0.0
      %3111 = vmatpush1.msra.mxu0 %v2939
      %3112 = vmatprep.subr.mxu0 0.0
      %3113 = vmatpush1.msra.mxu0 0.0
      %3114 = vmatprep.subr.mxu0 0.0
      %3115 = vmatpush1.msra.mxu0 0.0
      %3116 = vmatprep.subr.mxu0 0.0
      %3117 = vmatpush1.msra.mxu0 0.0
      %3118 = vmatprep.subr.mxu0 0.0
      %3119 = vmatpush1.msra.mxu0 0.0
      %3120 = vmatprep.subr.mxu0 0.0
      %3121 = vmatpush1.msra.mxu0 0.0
      %3122 = vmatprep.subr.mxu0 0.0
      %3123 = vmatpush1.msra.mxu0 0.0
      %3124 = vmatprep.subr.mxu0 0.0
      %3125 = vmatpush1.msra.mxu0 0.0
      %3126 = vmatprep.subr.mxu0 0.0
      %3127 = vmatpush1.msra.mxu0 0.0
      %3128 = vmatprep.subr.mxu0 0.0
      %3129 = vmatpush1.msra.mxu0 0.0
      %3130 = vmatprep.subr.mxu0 0.0
      %3131 = vmatpush1.msra.mxu0 0.0
      %3132 = vmatprep.subr.mxu0 0.0
      %3133 = vmatpush1.msra.mxu0 0.0
      %3134 = vmatprep.subr.mxu0 0.0
      %3135 = vmatpush1.msra.mxu0 0.0
      %3136 = vmatprep.subr.mxu0 0.0
      %3137 = vmatpush1.msra.mxu0 0.0
      %3138 = vmatprep.subr.mxu0 0.0
      %3139 = vmatpush1.msra.mxu0 0.0
      %3140 = vmatprep.subr.mxu0 0.0
      %3141 = vmatpush1.msra.mxu0 0.0
      %3142 = vmatprep.subr.mxu0 0.0
      %3143 = vmatpush1.msra.mxu0 0.0
      %3144 = vmatprep.mubr.f32.mxu0 0.0
      %3145 = vmatmul.mubr.f32.gmra.mrb[0].mxu0 %v2890
      %v3146 = vpop.f32.mrb[0].mxu0
      %v3147 = vadd.f32 %v3005, %v3146
      %v3148 = vpop.f32.mrb[0].mxu0
      %3149 = vdwg.mxu0
      %v3151 = vlaneseq
      %v3152 = vshrl.u32 %v3151, 7
      %v3153 = vsub.s32 0, %v3152
      %v3154 = vrot.slane %v2992, %v3153
      %v3155 = vlaneseq
      %v3156 = vshrl.u32 %v3155, 7
      %v3157 = vsub.s32 1, %v3156
      %v3158 = vrot.slane %v2992, %v3157
      %v3159 = vlaneseq
      %v3160 = vshrl.u32 %v3159, 7
      %v3161 = vsub.s32 2, %v3160
      %v3162 = vrot.slane %v2992, %v3161
      %3166 = vmatprep.subr.mxu0 %v2942
      %3167 = vmatpush1.msra.mxu0 %v2941
      %3168 = vmatprep.subr.mxu0 %v2945
      %3169 = vmatpush1.msra.mxu0 %v2944
      %3170 = vmatprep.subr.mxu0 %v2948
      %3171 = vmatpush1.msra.mxu0 %v2947
      %3172 = vmatprep.subr.mxu0 %v2951
      %3173 = vmatpush1.msra.mxu0 %v2950
      %3174 = vmatprep.subr.mxu0 %v2954
      %3175 = vmatpush1.msra.mxu0 %v2953
      %3176 = vmatprep.subr.mxu0 %v2957
      %3177 = vmatpush1.msra.mxu0 %v2956
      %3178 = vmatprep.subr.mxu0 %v2960
      %3179 = vmatpush1.msra.mxu0 %v2959
      %3180 = vmatprep.subr.mxu0 %v2963
      %3181 = vmatpush1.msra.mxu0 %v2962
      %3182 = vmatprep.subr.mxu0 %v2966
      %3183 = vmatpush1.msra.mxu0 %v2965
      %3184 = vmatprep.subr.mxu0 %v2969
      %3185 = vmatpush1.msra.mxu0 %v2968
      %3186 = vmatprep.subr.mxu0 %v2972
      %3187 = vmatpush1.msra.mxu0 %v2971
      %3188 = vmatprep.subr.mxu0 %v2975
      %3189 = vmatpush1.msra.mxu0 %v2974
      %3190 = vmatprep.subr.mxu0 %v2978
      %3191 = vmatpush1.msra.mxu0 %v2977
      %3192 = vmatprep.subr.mxu0 %v2981
      %3193 = vmatpush1.msra.mxu0 %v2980
      %3194 = vmatprep.subr.mxu0 %v2984
      %3195 = vmatpush1.msra.mxu0 %v2983
      %3196 = vmatprep.subr.mxu0 %v2987
      %3197 = vmatpush1.msra.mxu0 %v2986
      %3198 = vmatprep.subr.mxu0 0.0
      %3199 = vmatpush1.msra.mxu0 0.0
      %3200 = vmatprep.subr.mxu0 0.0
      %3201 = vmatpush1.msra.mxu0 0.0
      %3202 = vmatprep.subr.mxu0 0.0
      %3203 = vmatpush1.msra.mxu0 0.0
      %3204 = vmatprep.subr.mxu0 0.0
      %3205 = vmatpush1.msra.mxu0 0.0
      %3206 = vmatprep.subr.mxu0 0.0
      %3207 = vmatpush1.msra.mxu0 0.0
      %3208 = vmatprep.subr.mxu0 0.0
      %3209 = vmatpush1.msra.mxu0 0.0
      %3210 = vmatprep.subr.mxu0 0.0
      %3211 = vmatpush1.msra.mxu0 0.0
      %3212 = vmatprep.subr.mxu0 0.0
      %3213 = vmatpush1.msra.mxu0 0.0
      %3214 = vmatprep.subr.mxu0 0.0
      %3215 = vmatpush1.msra.mxu0 0.0
      %3216 = vmatprep.subr.mxu0 0.0
      %3217 = vmatpush1.msra.mxu0 0.0
      %3218 = vmatprep.subr.mxu0 0.0
      %3219 = vmatpush1.msra.mxu0 0.0
      %3220 = vmatprep.subr.mxu0 0.0
      %3221 = vmatpush1.msra.mxu0 0.0
      %3222 = vmatprep.subr.mxu0 0.0
      %3223 = vmatpush1.msra.mxu0 0.0
      %3224 = vmatprep.subr.mxu0 0.0
      %3225 = vmatpush1.msra.mxu0 0.0
      %3226 = vmatprep.subr.mxu0 0.0
      %3227 = vmatpush1.msra.mxu0 0.0
      %3228 = vmatprep.subr.mxu0 0.0
      %3229 = vmatpush1.msra.mxu0 0.0
      %3230 = vmatprep.mubr.f32.mxu0 0.0
      %3231 = vmatmul.mubr.f32.gmra.mrb[0].mxu0 %v2454
      %v3232 = vpop.f32.mrb[0].mxu0
      %v3233 = vadd.f32 %v3154, %v3232
      %v3234 = vpop.f32.mrb[0].mxu0
      %v3235 = vadd.f32 %v3158, %v3234
      %3236 = vdwg.mxu0
      %3237 = vmatprep.subr.mxu0 0.0
      %3238 = vmatpush1.msra.mxu0 %v2943
      %3239 = vmatprep.subr.mxu0 0.0
      %3240 = vmatpush1.msra.mxu0 %v2946
      %3241 = vmatprep.subr.mxu0 0.0
      %3242 = vmatpush1.msra.mxu0 %v2949
      %3243 = vmatprep.subr.mxu0 0.0
      %3244 = vmatpush1.msra.mxu0 %v2952
      %3245 = vmatprep.subr.mxu0 0.0
      %3246 = vmatpush1.msra.mxu0 %v2955
      %3247 = vmatprep.subr.mxu0 0.0
      %3248 = vmatpush1.msra.mxu0 %v2958
      %3249 = vmatprep.subr.mxu0 0.0
      %3250 = vmatpush1.msra.mxu0 %v2961
      %3251 = vmatprep.subr.mxu0 0.0
      %3252 = vmatpush1.msra.mxu0 %v2964
      %3253 = vmatprep.subr.mxu0 0.0
      %3254 = vmatpush1.msra.mxu0 %v2967
      %3255 = vmatprep.subr.mxu0 0.0
      %3256 = vmatpush1.msra.mxu0 %v2970
      %3257 = vmatprep.subr.mxu0 0.0
      %3258 = vmatpush1.msra.mxu0 %v2973
      %3259 = vmatprep.subr.mxu0 0.0
      %3260 = vmatpush1.msra.mxu0 %v2976
      %3261 = vmatprep.subr.mxu0 0.0
      %3262 = vmatpush1.msra.mxu0 %v2979
      %3263 = vmatprep.subr.mxu0 0.0
      %3264 = vmatpush1.msra.mxu0 %v2982
      %3265 = vmatprep.subr.mxu0 0.0
      %3266 = vmatpush1.msra.mxu0 %v2985
      %3267 = vmatprep.subr.mxu0 0.0
      %3268 = vmatpush1.msra.mxu0 %v2988
      %3269 = vmatprep.subr.mxu0 0.0
      %3270 = vmatpush1.msra.mxu0 0.0
      %3271 = vmatprep.subr.mxu0 0.0
      %3272 = vmatpush1.msra.mxu0 0.0
      %3273 = vmatprep.subr.mxu0 0.0
      %3274 = vmatpush1.msra.mxu0 0.0
      %3275 = vmatprep.subr.mxu0 0.0
      %3276 = vmatpush1.msra.mxu0 0.0
      %3277 = vmatprep.subr.mxu0 0.0
      %3278 = vmatpush1.msra.mxu0 0.0
      %3279 = vmatprep.subr.mxu0 0.0
      %3280 = vmatpush1.msra.mxu0 0.0
      %3281 = vmatprep.subr.mxu0 0.0
      %3282 = vmatpush1.msra.mxu0 0.0
      %3283 = vmatprep.subr.mxu0 0.0
      %3284 = vmatpush1.msra.mxu0 0.0
      %3285 = vmatprep.subr.mxu0 0.0
      %3286 = vmatpush1.msra.mxu0 0.0
      %3287 = vmatprep.subr.mxu0 0.0
      %3288 = vmatpush1.msra.mxu0 0.0
      %3289 = vmatprep.subr.mxu0 0.0
      %3290 = vmatpush1.msra.mxu0 0.0
      %3291 = vmatprep.subr.mxu0 0.0
      %3292 = vmatpush1.msra.mxu0 0.0
      %3293 = vmatprep.subr.mxu0 0.0
      %3294 = vmatpush1.msra.mxu0 0.0
      %3295 = vmatprep.subr.mxu0 0.0
      %3296 = vmatpush1.msra.mxu0 0.0
      %3297 = vmatprep.subr.mxu0 0.0
      %3298 = vmatpush1.msra.mxu0 0.0
      %3299 = vmatprep.subr.mxu0 0.0
      %3300 = vmatpush1.msra.mxu0 0.0
      %3301 = vmatprep.mubr.f32.mxu0 0.0
      %3302 = vmatmul.mubr.f32.gmra.mrb[0].mxu0 %v2454
      %v3303 = vpop.f32.mrb[0].mxu0
      %v3304 = vadd.f32 %v3162, %v3303
      %v3305 = vpop.f32.mrb[0].mxu0
      %3306 = vdwg.mxu0
      %v3307 = vadd.f32 %v3076, %v3233
      %v3308 = vxor.u32 %v3307, 2147483648
      %v3309 = vmul.f32 %v3308, 1.442695
      %v3310 = vpow.pop %v3309
      %v3311 = vadd.f32 %v3310, 1.0
      %v3312 = vrcp.pop %v3311
      %v3313 = vmul.f32 1.0, %v3312
      %v3314 = vadd.f32 %v3078, %v3235
      %v3315 = vxor.u32 %v3314, 2147483648
      %v3316 = vmul.f32 %v3315, 1.442695
      %v3317 = vpow.pop %v3316
      %v3318 = vadd.f32 %v3317, 1.0
      %v3319 = vrcp.pop %v3318
      %v3320 = vmul.f32 1.0, %v3319
      %v3321 = vmul.f32 %v3313, %v3304
      %v3322 = vadd.f32 %v3147, %v3321
      %v3323 = vtanh.pop %v3322
      %v3324 = vsub.f32 1.0, %v3320
      %v3325 = vmul.f32 %v3324, %v3323
      %v3326 = vmul.f32 %v3320, %v2454
      %v3327 = vadd.f32 %v3325, %v3326
      %3328 = vmatprep.subr.mxu0 0.0
      %3329 = vmatpush1.xpose.msra.mxu0 %v2446
      %3330 = vmatprep.subr.mxu0 0.0
      %3331 = vmatpush1.xpose.msra.mxu0 0.0
      %3332 = vmatprep.subr.mxu0 0.0
      %3333 = vmatpush1.xpose.msra.mxu0 0.0
      %3334 = vmatprep.subr.mxu0 0.0
      %3335 = vmatpush1.xpose.msra.mxu0 0.0
      %3336 = vmatprep.subr.mxu0 0.0
      %3337 = vmatpush1.xpose.msra.mxu0 0.0
      %3338 = vmatprep.subr.mxu0 0.0
      %3339 = vmatpush1.xpose.msra.mxu0 0.0
      %3340 = vmatprep.subr.mxu0 0.0
      %3341 = vmatpush1.xpose.msra.mxu0 0.0
      %3342 = vmatprep.subr.mxu0 0.0
      %3343 = vmatpush1.xpose.msra.mxu0 0.0
      %3344 = vmatprep.subr.mxu0 0.0
      %3345 = vmatpush1.xpose.msra.mxu0 0.0
      %3346 = vmatprep.subr.mxu0 0.0
      %3347 = vmatpush1.xpose.msra.mxu0 0.0
      %3348 = vmatprep.subr.mxu0 0.0
      %3349 = vmatpush1.xpose.msra.mxu0 0.0
      %3350 = vmatprep.subr.mxu0 0.0
      %3351 = vmatpush1.xpose.msra.mxu0 0.0
      %3352 = vmatprep.subr.mxu0 0.0
      %3353 = vmatpush1.xpose.msra.mxu0 0.0
      %3354 = vmatprep.subr.mxu0 0.0
      %3355 = vmatpush1.xpose.msra.mxu0 0.0
      %3356 = vmatprep.subr.mxu0 0.0
      %3357 = vmatpush1.xpose.msra.mxu0 0.0
      %3358 = vmatprep.subr.mxu0 0.0
      %3359 = vmatpush1.xpose.msra.mxu0 0.0
      %3360 = vmatprep.subr.mxu0 0.0
      %3361 = vmatpush1.xpose.msra.mxu0 0.0
      %3362 = vmatprep.subr.mxu0 0.0
      %3363 = vmatpush1.xpose.msra.mxu0 0.0
      %3364 = vmatprep.subr.mxu0 0.0
      %3365 = vmatpush1.xpose.msra.mxu0 0.0
      %3366 = vmatprep.subr.mxu0 0.0
      %3367 = vmatpush1.xpose.msra.mxu0 0.0
      %3368 = vmatprep.subr.mxu0 0.0
      %3369 = vmatpush1.xpose.msra.mxu0 0.0
      %3370 = vmatprep.subr.mxu0 0.0
      %3371 = vmatpush1.xpose.msra.mxu0 0.0
      %3372 = vmatprep.subr.mxu0 0.0
      %3373 = vmatpush1.xpose.msra.mxu0 0.0
      %3374 = vmatprep.subr.mxu0 0.0
      %3375 = vmatpush1.xpose.msra.mxu0 0.0
      %3376 = vmatprep.subr.mxu0 0.0
      %3377 = vmatpush1.xpose.msra.mxu0 0.0
      %3378 = vmatprep.subr.mxu0 0.0
      %3379 = vmatpush1.xpose.msra.mxu0 0.0
      %3380 = vmatprep.subr.mxu0 0.0
      %3381 = vmatpush1.xpose.msra.mxu0 0.0
      %3382 = vmatprep.subr.mxu0 0.0
      %3383 = vmatpush1.xpose.msra.mxu0 0.0
      %3384 = vmatprep.subr.mxu0 0.0
      %3385 = vmatpush1.xpose.msra.mxu0 0.0
      %3386 = vmatprep.subr.mxu0 0.0
      %3387 = vmatpush1.xpose.msra.mxu0 0.0
      %3388 = vmatprep.subr.mxu0 0.0
      %3389 = vmatpush1.xpose.msra.mxu0 0.0
      %3390 = vmatprep.subr.mxu0 0.0
      %3391 = vmatpush1.xpose.msra.mxu0 0.0
      %3392 = vmatprep.mubr.f32.mxu0 0.0
      %3393 = vmatmul.mubr.f32.gmra.mrb[0].mxu0 %v3327
      %v3394 = vpop.f32.mrb[0].mxu0
      %v3395 = vadd.f32 0.0, %v3394
      %v3396 = vpop.f32.mrb[0].mxu0
      %3397 = vdwg.mxu0
      %vm3398 = vcmask 57344
      %v3399 = vsel %vm3398, %v3395, -inf
      %3400 = vmax.xlane.f32.xlu0 %v3399
      %v3401 = vpop.xlane.xlu0 %3400
      %v3402 = vsub.f32 %v3395, %v3401
      %v3403 = vmul.f32 %v3402, 1.442695
      %v3404 = vpow.pop %v3403
      %v3405 = vsel %vm3398, %v3404, 0.0
      %3406 = vadd.xlane.f32.xlu0 %v3405
      %v3407 = vpop.xlane.xlu0 %3406
      %v3408 = vrcp.pop %v3407
      %v3409 = vmul.f32 %v3404, %v3408
      %vm3410 = vcmask 64512
      %v3412 = vsel %vm3410, %v3409, 0
      %3414 = vmatprep.subr.mxu0 0.0
      %3415 = vmatpush1.msra.mxu0 %v2446
      %3416 = vmatprep.subr.mxu0 0.0
      %3417 = vmatpush1.msra.mxu0 0.0
      %3418 = vmatprep.subr.mxu0 0.0
      %3419 = vmatpush1.msra.mxu0 0.0
      %3420 = vmatprep.subr.mxu0 0.0
      %3421 = vmatpush1.msra.mxu0 0.0
      %3422 = vmatprep.subr.mxu0 0.0
      %3423 = vmatpush1.msra.mxu0 0.0
      %3424 = vmatprep.subr.mxu0 0.0
      %3425 = vmatpush1.msra.mxu0 0.0
      %3426 = vmatprep.subr.mxu0 0.0
      %3427 = vmatpush1.msra.mxu0 0.0
      %3428 = vmatprep.subr.mxu0 0.0
      %3429 = vmatpush1.msra.mxu0 0.0
      %3430 = vmatprep.subr.mxu0 0.0
      %3431 = vmatpush1.msra.mxu0 0.0
      %3432 = vmatprep.subr.mxu0 0.0
      %3433 = vmatpush1.msra.mxu0 0.0
      %3434 = vmatprep.subr.mxu0 0.0
      %3435 = vmatpush1.msra.mxu0 0.0
      %3436 = vmatprep.subr.mxu0 0.0
      %3437 = vmatpush1.msra.mxu0 0.0
      %3438 = vmatprep.subr.mxu0 0.0
      %3439 = vmatpush1.msra.mxu0 0.0
      %3440 = vmatprep.subr.mxu0 0.0
      %3441 = vmatpush1.msra.mxu0 0.0
      %3442 = vmatprep.subr.mxu0 0.0
      %3443 = vmatpush1.msra.mxu0 0.0
      %3444 = vmatprep.subr.mxu0 0.0
      %3445 = vmatpush1.msra.mxu0 0.0
      %3446 = vmatprep.subr.mxu0 0.0
      %3447 = vmatpush1.msra.mxu0 0.0
      %3448 = vmatprep.subr.mxu0 0.0
      %3449 = vmatpush1.msra.mxu0 0.0
      %3450 = vmatprep.subr.mxu0 0.0
      %3451 = vmatpush1.msra.mxu0 0.0
      %3452 = vmatprep.subr.mxu0 0.0
      %3453 = vmatpush1.msra.mxu0 0.0
      %3454 = vmatprep.subr.mxu0 0.0
      %3455 = vmatpush1.msra.mxu0 0.0
      %3456 = vmatprep.subr.mxu0 0.0
      %3457 = vmatpush1.msra.mxu0 0.0
      %3458 = vmatprep.subr.mxu0 0.0
      %3459 = vmatpush1.msra.mxu0 0.0
      %3460 = vmatprep.subr.mxu0 0.0
      %3461 = vmatpush1.msra.mxu0 0.0
      %3462 = vmatprep.subr.mxu0 0.0
      %3463 = vmatpush1.msra.mxu0 0.0
      %3464 = vmatprep.subr.mxu0 0.0
      %3465 = vmatpush1.msra.mxu0 0.0
      %3466 = vmatprep.subr.mxu0 0.0
      %3467 = vmatpush1.msra.mxu0 0.0
      %3468 = vmatprep.subr.mxu0 0.0
      %3469 = vmatpush1.msra.mxu0 0.0
      %3470 = vmatprep.subr.mxu0 0.0
      %3471 = vmatpush1.msra.mxu0 0.0
      %3472 = vmatprep.subr.mxu0 0.0
      %3473 = vmatpush1.msra.mxu0 0.0
      %3474 = vmatprep.subr.mxu0 0.0
      %3475 = vmatpush1.msra.mxu0 0.0
      %3476 = vmatprep.subr.mxu0 0.0
      %3477 = vmatpush1.msra.mxu0 0.0
      %3478 = vmatprep.mubr.f32.mxu0 0.0
      %3479 = vmatmul.mubr.f32.gmra.mrb[0].mxu0 %v3412
      %v3480 = vpop.f32.mrb[0].mxu0
      %v3481 = vadd.f32 0.0, %v3480
      %v3482 = vpop.f32.mrb[0].mxu0
      %3483 = vdwg.mxu0
      %v3484 = vld [vmem:[#allocation25] sm:$0xff]
      %v3485 = vld [vmem:[#allocation25 + $0x8] sm:$0xff]
      %v3486 = vld [vmem:[#allocation25 + $0x10] sm:$0xff]
      %v3487 = vld [vmem:[#allocation25 + $0x18] sm:$0xff]
      %v3488 = vld [vmem:[#allocation25 + $0x20] sm:$0xff]
      %v3489 = vld [vmem:[#allocation25 + $0x28] sm:$0xff]
      %v3490 = vld [vmem:[#allocation25 + $0x30] sm:$0xff]
      %v3491 = vld [vmem:[#allocation25 + $0x38] sm:$0xff]
      %v3492 = vld [vmem:[#allocation25 + $0x40] sm:$0xff]
      %v3493 = vld [vmem:[#allocation25 + $0x48] sm:$0xff]
      %v3494 = vld [vmem:[#allocation25 + $0x50] sm:$0xff]
      %v3495 = vld [vmem:[#allocation25 + $0x58] sm:$0xff]
      %v3496 = vld [vmem:[#allocation25 + $0x60] sm:$0xff]
      %v3497 = vld [vmem:[#allocation25 + $0x68] sm:$0xff]
      %v3498 = vld [vmem:[#allocation25 + $0x70] sm:$0xff]
      %v3499 = vld [vmem:[#allocation25 + $0x78] sm:$0xff]
      %v3500 = vld [vmem:[#allocation26] sm:$0xff]
      %v3501 = vld [vmem:[#allocation26 + $0x8] sm:$0xff]
      %v3502 = vld [vmem:[#allocation26 + $0x10] sm:$0xff]
      %v3503 = vld [vmem:[#allocation26 + $0x18] sm:$0xff]
      %v3504 = vld [vmem:[#allocation26 + $0x20] sm:$0xff]
      %v3505 = vld [vmem:[#allocation26 + $0x28] sm:$0xff]
      %v3506 = vld [vmem:[#allocation26 + $0x30] sm:$0xff]
      %v3507 = vld [vmem:[#allocation26 + $0x38] sm:$0xff]
      %v3508 = vld [vmem:[#allocation26 + $0x40] sm:$0xff]
      %v3509 = vld [vmem:[#allocation26 + $0x48] sm:$0xff]
      %v3510 = vld [vmem:[#allocation26 + $0x50] sm:$0xff]
      %v3511 = vld [vmem:[#allocation26 + $0x58] sm:$0xff]
      %v3512 = vld [vmem:[#allocation26 + $0x60] sm:$0xff]
      %v3513 = vld [vmem:[#allocation26 + $0x68] sm:$0xff]
      %v3514 = vld [vmem:[#allocation26 + $0x70] sm:$0xff]
      %v3515 = vld [vmem:[#allocation26 + $0x78] sm:$0xff]
      %3516 = vmatprep.subr.mxu0 0.0
      %3517 = vmatpush1.msra.mxu0 %v3500
      %3518 = vmatprep.subr.mxu0 0.0
      %3519 = vmatpush1.msra.mxu0 %v3501
      %3520 = vmatprep.subr.mxu0 0.0
      %3521 = vmatpush1.msra.mxu0 %v3502
      %3522 = vmatprep.subr.mxu0 0.0
      %3523 = vmatpush1.msra.mxu0 %v3503
      %3524 = vmatprep.subr.mxu0 0.0
      %3525 = vmatpush1.msra.mxu0 %v3504
      %3526 = vmatprep.subr.mxu0 0.0
      %3527 = vmatpush1.msra.mxu0 %v3505
      %3528 = vmatprep.subr.mxu0 0.0
      %3529 = vmatpush1.msra.mxu0 %v3506
      %3530 = vmatprep.subr.mxu0 0.0
      %3531 = vmatpush1.msra.mxu0 %v3507
      %3532 = vmatprep.subr.mxu0 0.0
      %3533 = vmatpush1.msra.mxu0 %v3508
      %3534 = vmatprep.subr.mxu0 0.0
      %3535 = vmatpush1.msra.mxu0 %v3509
      %3536 = vmatprep.subr.mxu0 0.0
      %3537 = vmatpush1.msra.mxu0 %v3510
      %3538 = vmatprep.subr.mxu0 0.0
      %3539 = vmatpush1.msra.mxu0 %v3511
      %3540 = vmatprep.subr.mxu0 0.0
      %3541 = vmatpush1.msra.mxu0 %v3512
      %3542 = vmatprep.subr.mxu0 0.0
      %3543 = vmatpush1.msra.mxu0 %v3513
      %3544 = vmatprep.subr.mxu0 0.0
      %3545 = vmatpush1.msra.mxu0 %v3514
      %3546 = vmatprep.subr.mxu0 0.0
      %3547 = vmatpush1.msra.mxu0 %v3515
      %3548 = vmatprep.subr.mxu0 0.0
      %3549 = vmatpush1.msra.mxu0 0.0
      %3550 = vmatprep.subr.mxu0 0.0
      %3551 = vmatpush1.msra.mxu0 0.0
      %3552 = vmatprep.subr.mxu0 0.0
      %3553 = vmatpush1.msra.mxu0 0.0
      %3554 = vmatprep.subr.mxu0 0.0
      %3555 = vmatpush1.msra.mxu0 0.0
      %3556 = vmatprep.subr.mxu0 0.0
      %3557 = vmatpush1.msra.mxu0 0.0
      %3558 = vmatprep.subr.mxu0 0.0
      %3559 = vmatpush1.msra.mxu0 0.0
      %3560 = vmatprep.subr.mxu0 0.0
      %3561 = vmatpush1.msra.mxu0 0.0
      %3562 = vmatprep.subr.mxu0 0.0
      %3563 = vmatpush1.msra.mxu0 0.0
      %3564 = vmatprep.subr.mxu0 0.0
      %3565 = vmatpush1.msra.mxu0 0.0
      %3566 = vmatprep.subr.mxu0 0.0
      %3567 = vmatpush1.msra.mxu0 0.0
      %3568 = vmatprep.subr.mxu0 0.0
      %3569 = vmatpush1.msra.mxu0 0.0
      %3570 = vmatprep.subr.mxu0 0.0
      %3571 = vmatpush1.msra.mxu0 0.0
      %3572 = vmatprep.subr.mxu0 0.0
      %3573 = vmatpush1.msra.mxu0 0.0
      %3574 = vmatprep.subr.mxu0 0.0
      %3575 = vmatpush1.msra.mxu0 0.0
      %3576 = vmatprep.subr.mxu0 0.0
      %3577 = vmatpush1.msra.mxu0 0.0
      %3578 = vmatprep.subr.mxu0 0.0
      %3579 = vmatpush1.msra.mxu0 0.0
      %3580 = vmatprep.mubr.f32.mxu0 0.0
      %3581 = vmatmul.mubr.f32.gmra.mrb[0].mxu0 %v3481
      %v3582 = vpop.f32.mrb[0].mxu0
      %v3583 = vadd.f32 0.0, %v3582
      %v3584 = vpop.f32.mrb[0].mxu0
      %3585 = vdwg.mxu0
      %3586 = vmatprep.subr.mxu0 0.0
      %3587 = vmatpush1.msra.mxu0 %v3484
      %3588 = vmatprep.subr.mxu0 0.0
      %3589 = vmatpush1.msra.mxu0 %v3485
      %3590 = vmatprep.subr.mxu0 0.0
      %3591 = vmatpush1.msra.mxu0 %v3486
      %3592 = vmatprep.subr.mxu0 0.0
      %3593 = vmatpush1.msra.mxu0 %v3487
      %3594 = vmatprep.subr.mxu0 0.0
      %3595 = vmatpush1.msra.mxu0 %v3488
      %3596 = vmatprep.subr.mxu0 0.0
      %3597 = vmatpush1.msra.mxu0 %v3489
      %3598 = vmatprep.subr.mxu0 0.0
      %3599 = vmatpush1.msra.mxu0 %v3490
      %3600 = vmatprep.subr.mxu0 0.0
      %3601 = vmatpush1.msra.mxu0 %v3491
      %3602 = vmatprep.subr.mxu0 0.0
      %3603 = vmatpush1.msra.mxu0 %v3492
      %3604 = vmatprep.subr.mxu0 0.0
      %3605 = vmatpush1.msra.mxu0 %v3493
      %3606 = vmatprep.subr.mxu0 0.0
      %3607 = vmatpush1.msra.mxu0 %v3494
      %3608 = vmatprep.subr.mxu0 0.0
      %3609 = vmatpush1.msra.mxu0 %v3495
      %3610 = vmatprep.subr.mxu0 0.0
      %3611 = vmatpush1.msra.mxu0 %v3496
      %3612 = vmatprep.subr.mxu0 0.0
      %3613 = vmatpush1.msra.mxu0 %v3497
      %3614 = vmatprep.subr.mxu0 0.0
      %3615 = vmatpush1.msra.mxu0 %v3498
      %3616 = vmatprep.subr.mxu0 0.0
      %3617 = vmatpush1.msra.mxu0 %v3499
      %3618 = vmatprep.subr.mxu0 0.0
      %3619 = vmatpush1.msra.mxu0 0.0
      %3620 = vmatprep.subr.mxu0 0.0
      %3621 = vmatpush1.msra.mxu0 0.0
      %3622 = vmatprep.subr.mxu0 0.0
      %3623 = vmatpush1.msra.mxu0 0.0
      %3624 = vmatprep.subr.mxu0 0.0
      %3625 = vmatpush1.msra.mxu0 0.0
      %3626 = vmatprep.subr.mxu0 0.0
      %3627 = vmatpush1.msra.mxu0 0.0
      %3628 = vmatprep.subr.mxu0 0.0
      %3629 = vmatpush1.msra.mxu0 0.0
      %3630 = vmatprep.subr.mxu0 0.0
      %3631 = vmatpush1.msra.mxu0 0.0
      %3632 = vmatprep.subr.mxu0 0.0
      %3633 = vmatpush1.msra.mxu0 0.0
      %3634 = vmatprep.subr.mxu0 0.0
      %3635 = vmatpush1.msra.mxu0 0.0
      %3636 = vmatprep.subr.mxu0 0.0
      %3637 = vmatpush1.msra.mxu0 0.0
      %3638 = vmatprep.subr.mxu0 0.0
      %3639 = vmatpush1.msra.mxu0 0.0
      %3640 = vmatprep.subr.mxu0 0.0
      %3641 = vmatpush1.msra.mxu0 0.0
      %3642 = vmatprep.subr.mxu0 0.0
      %3643 = vmatpush1.msra.mxu0 0.0
      %3644 = vmatprep.subr.mxu0 0.0
      %3645 = vmatpush1.msra.mxu0 0.0
      %3646 = vmatprep.subr.mxu0 0.0
      %3647 = vmatpush1.msra.mxu0 0.0
      %3648 = vmatprep.subr.mxu0 0.0
      %3649 = vmatpush1.msra.mxu0 0.0
      %3650 = vmatprep.mubr.f32.mxu0 0.0
      %3651 = vmatmul.mubr.f32.gmra.mrb[0].mxu0 %v3327
      %v3652 = vpop.f32.mrb[0].mxu0
      %v3653 = vadd.f32 %v3583, %v3652
      %v3654 = vpop.f32.mrb[0].mxu0
      %3655 = vdwg.mxu0
      %v3656 = vld [vmem:[#allocation28] sm:$0x1]
      %v3657 = vadd.f32 %v3653, %v3656
      %v3658 = vtanh.pop %v3657
      %v3659 = vld [vmem:[#allocation29] sm:$0xff]
      %v3660 = vld [vmem:[#allocation29 + $0x8] sm:$0xff]
      %v3661 = vld [vmem:[#allocation29 + $0x10] sm:$0xff]
      %v3662 = vld [vmem:[#allocation29 + $0x18] sm:$0xff]
      %v3663 = vld [vmem:[#allocation29 + $0x20] sm:$0xff]
      %v3664 = vld [vmem:[#allocation29 + $0x28] sm:$0xff]
      %v3665 = vld [vmem:[#allocation29 + $0x30] sm:$0xff]
      %v3666 = vld [vmem:[#allocation29 + $0x38] sm:$0xff]
      %v3667 = vld [vmem:[#allocation29 + $0x40] sm:$0xff]
      %v3668 = vld [vmem:[#allocation29 + $0x48] sm:$0xff]
      %v3669 = vld [vmem:[#allocation29 + $0x50] sm:$0xff]
      %v3670 = vld [vmem:[#allocation29 + $0x58] sm:$0xff]
      %v3671 = vld [vmem:[#allocation29 + $0x60] sm:$0xff]
      %v3672 = vld [vmem:[#allocation29 + $0x68] sm:$0xff]
      %v3673 = vld [vmem:[#allocation29 + $0x70] sm:$0xff]
      %v3674 = vld [vmem:[#allocation29 + $0x78] sm:$0xff]
      %v3675 = vld [vmem:[#allocation29 + $0x80] sm:$0xff]
      %v3676 = vld [vmem:[#allocation29 + $0x88] sm:$0xff]
      %v3677 = vld [vmem:[#allocation29 + $0x90] sm:$0xff]
      %v3678 = vld [vmem:[#allocation29 + $0x98] sm:$0xff]
      %v3679 = vld [vmem:[#allocation29 + $0xa0] sm:$0xff]
      %v3680 = vld [vmem:[#allocation29 + $0xa8] sm:$0xff]
      %v3681 = vld [vmem:[#allocation29 + $0xb0] sm:$0xff]
      %v3682 = vld [vmem:[#allocation29 + $0xb8] sm:$0xff]
      %v3683 = vld [vmem:[#allocation29 + $0xc0] sm:$0xff]
      %v3684 = vld [vmem:[#allocation29 + $0xc8] sm:$0xff]
      %v3685 = vld [vmem:[#allocation29 + $0xd0] sm:$0xff]
      %v3686 = vld [vmem:[#allocation29 + $0xd8] sm:$0xff]
      %v3687 = vld [vmem:[#allocation29 + $0xe0] sm:$0xff]
      %v3688 = vld [vmem:[#allocation29 + $0xe8] sm:$0xff]
      %v3689 = vld [vmem:[#allocation29 + $0xf0] sm:$0xff]
      %v3690 = vld [vmem:[#allocation29 + $0xf8] sm:$0xff]
      %v3691 = vld [vmem:[#allocation31] sm:$0x3]
      %v3693 = vlaneseq
      %v3694 = vshrl.u32 %v3693, 7
      %v3695 = vsub.s32 0, %v3694
      %v3696 = vrot.slane %v3691, %v3695
      %v3697 = vlaneseq
      %v3698 = vshrl.u32 %v3697, 7
      %v3699 = vsub.s32 1, %v3698
      %v3700 = vrot.slane %v3691, %v3699
      %3703 = vmatprep.subr.mxu0 %v3660
      %3704 = vmatpush1.msra.mxu0 %v3659
      %3705 = vmatprep.subr.mxu0 %v3662
      %3706 = vmatpush1.msra.mxu0 %v3661
      %3707 = vmatprep.subr.mxu0 %v3664
      %3708 = vmatpush1.msra.mxu0 %v3663
      %3709 = vmatprep.subr.mxu0 %v3666
      %3710 = vmatpush1.msra.mxu0 %v3665
      %3711 = vmatprep.subr.mxu0 %v3668
      %3712 = vmatpush1.msra.mxu0 %v3667
      %3713 = vmatprep.subr.mxu0 %v3670
      %3714 = vmatpush1.msra.mxu0 %v3669
      %3715 = vmatprep.subr.mxu0 %v3672
      %3716 = vmatpush1.msra.mxu0 %v3671
      %3717 = vmatprep.subr.mxu0 %v3674
      %3718 = vmatpush1.msra.mxu0 %v3673
      %3719 = vmatprep.subr.mxu0 %v3676
      %3720 = vmatpush1.msra.mxu0 %v3675
      %3721 = vmatprep.subr.mxu0 %v3678
      %3722 = vmatpush1.msra.mxu0 %v3677
      %3723 = vmatprep.subr.mxu0 %v3680
      %3724 = vmatpush1.msra.mxu0 %v3679
      %3725 = vmatprep.subr.mxu0 %v3682
      %3726 = vmatpush1.msra.mxu0 %v3681
      %3727 = vmatprep.subr.mxu0 %v3684
      %3728 = vmatpush1.msra.mxu0 %v3683
      %3729 = vmatprep.subr.mxu0 %v3686
      %3730 = vmatpush1.msra.mxu0 %v3685
      %3731 = vmatprep.subr.mxu0 %v3688
      %3732 = vmatpush1.msra.mxu0 %v3687
      %3733 = vmatprep.subr.mxu0 %v3690
      %3734 = vmatpush1.msra.mxu0 %v3689
      %3735 = vmatprep.subr.mxu0 0.0
      %3736 = vmatpush1.msra.mxu0 0.0
      %3737 = vmatprep.subr.mxu0 0.0
      %3738 = vmatpush1.msra.mxu0 0.0
      %3739 = vmatprep.subr.mxu0 0.0
      %3740 = vmatpush1.msra.mxu0 0.0
      %3741 = vmatprep.subr.mxu0 0.0
      %3742 = vmatpush1.msra.mxu0 0.0
      %3743 = vmatprep.subr.mxu0 0.0
      %3744 = vmatpush1.msra.mxu0 0.0
      %3745 = vmatprep.subr.mxu0 0.0
      %3746 = vmatpush1.msra.mxu0 0.0
      %3747 = vmatprep.subr.mxu0 0.0
      %3748 = vmatpush1.msra.mxu0 0.0
      %3749 = vmatprep.subr.mxu0 0.0
      %3750 = vmatpush1.msra.mxu0 0.0
      %3751 = vmatprep.subr.mxu0 0.0
      %3752 = vmatpush1.msra.mxu0 0.0
      %3753 = vmatprep.subr.mxu0 0.0
      %3754 = vmatpush1.msra.mxu0 0.0
      %3755 = vmatprep.subr.mxu0 0.0
      %3756 = vmatpush1.msra.mxu0 0.0
      %3757 = vmatprep.subr.mxu0 0.0
      %3758 = vmatpush1.msra.mxu0 0.0
      %3759 = vmatprep.subr.mxu0 0.0
      %3760 = vmatpush1.msra.mxu0 0.0
      %3761 = vmatprep.subr.mxu0 0.0
      %3762 = vmatpush1.msra.mxu0 0.0
      %3763 = vmatprep.subr.mxu0 0.0
      %3764 = vmatpush1.msra.mxu0 0.0
      %3765 = vmatprep.subr.mxu0 0.0
      %3766 = vmatpush1.msra.mxu0 0.0
      %3767 = vmatprep.mubr.f32.mxu0 0.0
      %3768 = vmatmul.mubr.f32.gmra.mrb[0].mxu0 %v3658
      %v3769 = vpop.f32.mrb[0].mxu0
      %v3770 = vadd.f32 %v3696, %v3769
      %v3771 = vpop.f32.mrb[0].mxu0
      %v3772 = vadd.f32 %v3700, %v3771
      %3773 = vdwg.mxu0
      %vm3774 = vcmask 1040384
      %v3775 = vsel %vm3774, %v3770, -inf
      %v3776 = vsel %vm3774, %v3772, -inf
      %v3777 = vmax.f32 %v3775, %v3776
      %3778 = vmax.xlane.f32.xlu0 %v3777
      %v3779 = vpop.xlane.xlu0 %3778
      %v3780 = vsub.f32 %v3770, %v3779
      %v3781 = vsub.f32 %v3772, %v3779
      %v3782 = vmul.f32 %v3780, 1.442695
      %v3783 = vpow.pop %v3782
      %v3784 = vmul.f32 %v3781, 1.442695
      %v3785 = vpow.pop %v3784
      %v3786 = vsel %vm3774, %v3783, 0.0
      %v3787 = vsel %vm3774, %v3785, 0.0
      %v3788 = vadd.f32 %v3786, %v3787
      %3789 = vadd.xlane.f32.xlu0 %v3788
      %v3790 = vpop.xlane.xlu0 %3789
      %v3791 = vrcp.pop %v3790
      %v3792 = vmul.f32 %v3783, %v3791
      %v3793 = vmul.f32 %v3785, %v3791
      %v3794 = vsel %vm3774, %v3792, -inf
      %v3795 = vsel %vm3774, %v3793, -inf
      %v3796 = vmax.f32 %v3794, %v3795
      %3797 = vmax.xlane.f32.xlu0 %v3796
      %v3798 = vpop.xlane.xlu0 %3797
      %v3799 = vlaneseq
      %v3800 = vand.u32 %v3799, 127
      %v3801 = vadd.s32 %v3800, 128
      %v3802 = vcvt.s32.f32 %v3800
      %v3803 = vcvt.s32.f32 %v3801
      %vm3804 = vcmp.eq.f32.partialorder %v3792, %v3798
      %vm3805 = vcmp.eq.f32.partialorder %v3793, %v3798
      %v3806 = vsel %vm3804, %v3802, 256.0
      %v3807 = vsel %vm3805, %v3803, 256.0
      %v3808 = vsel %vm3774, %v3806, inf
      %v3809 = vsel %vm3774, %v3807, inf
      %v3810 = vmin.f32 %v3808, %v3809
      %3811 = vmin.xlane.f32.xlu0 %v3810
      %v3812 = vpop.xlane.xlu0 %3811
      %v3813 = vrot.slane %v3812, 4
      %v3814 = vmin.f32 %v3812, %v3813
      %v3815 = vrot.slane %v3814, 2
      %v3816 = vmin.f32 %v3814, %v3815
      %v3817 = vrot.slane %v3816, 1
      %v3818 = vmin.f32 %v3816, %v3817
      %s3819 = vtos %v3818
      %s3820 = scvt.f32.s32.to.zero.pseudo %s3819
      %v3821 = vrot.slane %v3798, 4
      %v3822 = vmax.f32 %v3798, %v3821
      %v3823 = vrot.slane %v3822, 2
      %v3824 = vmax.f32 %v3822, %v3823
      %v3825 = vrot.slane %v3824, 1
      %v3826 = vmax.f32 %v3824, %v3825
      %s3827 = vtos %v3826
      %s3828 = scalar_lea.smem [#allocation32], %s2448
      %3829 = sst [smem:[%s3828]] %s3820
      %s3830 = scalar_lea.smem [#allocation33], %s2448
      %3831 = sst [smem:[%s3830]] %s3827
    $region164: #{greedy_decode.1} parent=1 // loop_footer
      %s2452 = sadd.s32 1, %s2448
    $region165: #{greedy_decode.1} parent=1 // loop_footer_branch
      %2447 = sbr.rel target = $region161
    $region166: #{greedy_decode.1} parent=1 // loop_exit
      _
    // Predicated region
    $region167: #{greedy_decode.1} parent=1 // pred_check
      _
    $region168: #{greedy_decode.1} parent=1 // pred_check_branch
      %3833 = sbr.rel (0) target = $region170
    $region169: #{greedy_decode.1} parent=1 // pred_region
      %s3835 = ssub.s32 16, 16
      %3836 = vsyncadd [#allocation9], %s3835
      %3839 = dma.smem_to_hbm [#allocation32], 16, %s20, [#allocation9]
    $region170: #{greedy_decode.1} parent=1 // pred_fallthru
      _
    // Predicated region
    $region171: #{greedy_decode.1} parent=1 // pred_check
      _
    $region172: #{greedy_decode.1} parent=1 // pred_check_branch
      %3841 = sbr.rel (0) target = $region174
    $region173: #{greedy_decode.1} parent=1 // pred_region
      %s3843 = ssub.s32 16, 16
      %3844 = vsyncadd [#allocation34], %s3843
      %3847 = dma.smem_to_hbm [#allocation33], 16, %s21, [#allocation34]
    $region174: #{greedy_decode.1} parent=1 // pred_fallthru
      _
    // Predicated region
    $region175: #{greedy_decode.1} parent=1 // pred_check
      _
    $region176: #{greedy_decode.1} parent=1 // pred_check_branch
      %3849 = sbr.rel (0) target = $region178
    $region177: #{greedy_decode.1} parent=1 // pred_region
      %3850 = dma.done [#allocation9], 16
    $region178: #{greedy_decode.1} parent=1 // pred_fallthru
      _
    // Predicated region
    $region179: #{greedy_decode.1} parent=1 // pred_check
      _
    $region180: #{greedy_decode.1} parent=1 // pred_check_branch
      %3852 = sbr.rel (0) target = $region182
    $region181: #{greedy_decode.1} parent=1 // pred_region
      %3853 = dma.done [#allocation34], 16
    $region182: #{greedy_decode.1} parent=1 // pred_fallthru
      _
    %3854 = sfence
    %3855 = vsyncpa [#allocation7], 1
    %3856 = vsyncpa [#allocation12], 1
    %3857 = vsyncpa [#allocation15], 1
    %3858 = vsyncpa [#allocation18], 1
    %3859 = vsyncpa [#allocation21], 1
    %3860 = vsyncpa [#allocation24], 1
    %3861 = vsyncpa [#allocation27], 1
    %3862 = vsyncpa [#allocation30], 1
    %3863 = vsyncpa [#allocation8], 1
    %3864 = vsyncpa [#allocation9], 1
    %3865 = vsyncpa [#allocation34], 1

</llo_original>
